<compile_context>
chip_gen: v5e
topology: v5e:2x2
jax: 0.10.0
libtpu: 0.0.40
codegen_flags: <defaults>
</compile_context>

<pallas_src>
import jax
import jax.numpy as jnp
from jax import lax
from jax.experimental import pallas as pl
from jax.experimental.pallas import tpu as pltpu

H = 128               # LSTM hidden size
LATENT = 512          # latent feature dim (output of linear1 in base Actor)
POS = 2               # pos dim
D_IN = LATENT + POS   # 514 = input features of linear2
D2 = 256              # linear2 output
OUT_DIM = 2           # action dim
OUT_PAD = 128         # lane-dense padded output width
BLK = 8               # recurrence row-block (one sublane tile)


def _sigmoid(v):
    # EUP tanh + VPU fma; avoids a VALU divide.
    return 0.5 * jnp.tanh(0.5 * v) + 0.5


def actor_latent_kernel(latent_ref, pos_ref,
                        w2l_ref, w2p_ref, b2_ref,
                        w3_ref, b3_ref,
                        wih_ref, whh_ref, blstm_ref,
                        wout_ref, bout_ref,
                        h0_ref, c0_ref,
                        action_ref, hn_ref, cn_ref,
                        pre_ref, hseq_ref):
    B = latent_ref.shape[0]

    # --- linear2: MXU on the 512-wide latent block (bf16 x bf16 -> f32 acc),
    #     pos contribution as two VPU scaled-adds (no K padding). ---
    lat = latent_ref[...]                                            # (B, 512) bf16
    pos = pos_ref[...]                                               # (B, 2)   f32
    h1 = jnp.dot(lat, w2l_ref[...], preferred_element_type=jnp.float32)
    h1 = h1 + pos[:, 0:1] * w2p_ref[0:1, :] + pos[:, 1:2] * w2p_ref[1:2, :]
    h1 = jnp.maximum(h1 + b2_ref[...], 0.0)                          # (B, 256)

    # --- linear3 + ReLU ---
    h2 = jnp.maximum(
        jnp.dot(h1.astype(jnp.bfloat16), w3_ref[...],
                preferred_element_type=jnp.float32) + b3_ref[...], 0.0)  # (B, 128)

    # --- input-side LSTM gate pre-activations for all time steps at once ---
    pre_ref[...] = (jnp.dot(h2.astype(jnp.bfloat16), wih_ref[...],
                            preferred_element_type=jnp.float32)
                    + blstm_ref[...])                                # (B, 512)

    # --- constants for the fused gate nonlinearity (hoisted out of the loop):
    #     sigmoid(x) = 0.5*tanh(0.5*x)+0.5 on i/f/o columns, tanh(x) on g. ---
    gcol = lax.broadcasted_iota(jnp.int32, (1, 4 * H), 1)
    is_g = jnp.logical_and(gcol >= 2 * H, gcol < 3 * H)
    gate_scale = jnp.where(is_g, 1.0, 0.5).astype(jnp.float32)       # (1, 512)
    gate_shift = jnp.where(is_g, 0.0, 0.5).astype(jnp.float32)       # (1, 512)

    def lstm_steps(pre_rows, h, c, n_steps):
        """n_steps (static) serial LSTM steps on an (n_steps, 512) value."""
        h_rows = []
        for t in range(n_steps):
            gates = pre_rows[t:t + 1, :] + jnp.dot(
                h.astype(jnp.bfloat16), whh_ref[...],
                preferred_element_type=jnp.float32)                  # (1, 512)
            # one EUP tanh over the whole row + one VPU fma
            acts = jnp.tanh(gates * gate_scale) * gate_scale + gate_shift
            i = acts[:, 0:H]
            f = acts[:, H:2 * H]
            g = acts[:, 2 * H:3 * H]
            o = acts[:, 3 * H:4 * H]
            c = f * c + i * g
            h = o * jnp.tanh(c)
            h_rows.append(h)
        return jnp.concatenate(h_rows, axis=0), h, c

    n_full = B // BLK
    rem = B % BLK

    # --- recurrence over full 8-row blocks: one aligned (8,512) load of pre,
    #     8 unrolled steps, one aligned (8,128) store of the h rows. ---
    def block_body(blk, carry):
        h, c = carry
        base = pl.multiple_of(blk * BLK, BLK)
        pre_blk = pre_ref[pl.ds(base, BLK), :]
        h_block, h, c = lstm_steps(pre_blk, h, c, BLK)
        hseq_ref[pl.ds(base, BLK), :] = h_block
        return (h, c)

    h_fin, c_fin = lax.fori_loop(0, n_full, block_body,
                                 (h0_ref[...], c0_ref[...]))

    # --- static remainder (< 8 rows) ---
    if rem > 0:
        base = n_full * BLK
        pre_rem = pre_ref[base:base + rem, :]
        h_block, h_fin, c_fin = lstm_steps(pre_rem, h_fin, c_fin, rem)
        hseq_ref[base:base + rem, :] = h_block

    hn_ref[...] = h_fin
    cn_ref[...] = c_fin

    # --- lane-dense output head: (B,128) padded logits; col 0 -> sigmoid,
    #     col 1 -> tanh (padded cols are zero-weight and sliced off outside). ---
    logits = (jnp.dot(hseq_ref[...], wout_ref[...],
                      preferred_element_type=jnp.float32) + bout_ref[...])
    ocol = lax.broadcasted_iota(jnp.int32, logits.shape, 1)
    action_ref[...] = jnp.where(ocol == 0, _sigmoid(logits), jnp.tanh(logits))


def actor_latent_forward(pos, latent, params, hn=None, cn=None):
    B = pos.shape[0]
    if hn is None:
        hn = jnp.zeros((1, 1, H), jnp.float32)
        cn = jnp.zeros((1, 1, H), jnp.float32)

    # Accept latent in bf16 (preferred from the producer); cast if needed so
    # the HBM->VMEM copy moves half the bytes.
    latent = latent.astype(jnp.bfloat16)
    pos = pos.astype(jnp.float32)

    vmem = pl.BlockSpec(memory_space=pltpu.MemorySpace.VMEM)
    out_shapes = (jax.ShapeDtypeStruct((B, OUT_PAD), jnp.float32),
                  jax.ShapeDtypeStruct((1, H), jnp.float32),
                  jax.ShapeDtypeStruct((1, H), jnp.float32))

    # Whole-array VMEM residency estimate (inputs + outputs + scratch + weights),
    # doubled for double-buffering headroom, clamped to a safe scoped range.
    per_row = LATENT * 2 + POS * 4 + 4 * H * 4 + H * 4 + OUT_PAD * 4
    weights = (LATENT * D2 * 2 + D2 * H * 2 + H * 4 * H * 2 + H * 4 * H * 2
               + H * OUT_PAD * 4 + (4 * H + D2 + H + OUT_PAD) * 4)
    est = B * per_row + weights + (1 << 20)
    vmem_limit = int(min(max(2 * est, 32 * 1024 * 1024), 100 * 1024 * 1024))

    action_pad, hn_o, cn_o = pl.pallas_call(
        actor_latent_kernel,
        out_shape=out_shapes,
        in_specs=[vmem] * 14,
        out_specs=(vmem, vmem, vmem),
        scratch_shapes=[pltpu.VMEM((B, 4 * H), jnp.float32),   # gate pre-acts
                        pltpu.VMEM((B, H), jnp.float32)],      # h sequence
        compiler_params=pltpu.CompilerParams(vmem_limit_bytes=vmem_limit),
    )(latent, pos,
      params['w2_lat'], params['w2_pos'], params['b2'],
      params['w3'], params['b3'],
      params['wih'], params['whh'], params['blstm'],
      params['wout'], params['bout'],
      hn.reshape(1, H), cn.reshape(1, H))

    return action_pad[:, :OUT_DIM], hn_o.reshape(1, 1, H), cn_o.reshape(1, 1, H)


def init_params(key):
    """Deterministic init, PyTorch-style uniform(-1/sqrt(fan_in), 1/sqrt(fan_in)).

    MXU-side weights (w2_lat, w3, wih, whh) are stored in bf16 (deployment
    choice); the reference uses the exact same (bf16-rounded) values.
    """
    ks = jax.random.split(key, 10)

    def unif(k, shape, fan_in):
        b = 1.0 / jnp.sqrt(jnp.float32(fan_in))
        return jax.random.uniform(k, shape, jnp.float32, -b, b)

    # linear2: (514 -> 256), stored transposed; split latent rows / pos rows.
    w2 = unif(ks[0], (D_IN, D2), D_IN)
    w2_lat = w2[:LATENT].astype(jnp.bfloat16)        # (512, 256) bf16, MXU path
    w2_pos = w2[LATENT:]                             # (2, 256)  f32, VPU path
    b2 = unif(ks[1], (1, D2), D_IN)
    # linear3: (256 -> 128)
    w3 = unif(ks[2], (D2, H), D2).astype(jnp.bfloat16)
    b3 = unif(ks[3], (1, H), D2)
    # LSTM(128, 128): gate columns [i | f | g | o]
    wih = unif(ks[4], (H, 4 * H), H).astype(jnp.bfloat16)
    whh = unif(ks[5], (H, 4 * H), H).astype(jnp.bfloat16)
    blstm = unif(ks[6], (1, 4 * H), H) + unif(ks[7], (1, 4 * H), H)  # b_ih + b_hh
    # out: (128 -> 2), zero-padded to 128 columns for a lane-dense store
    wout = jnp.pad(unif(ks[8], (H, OUT_DIM), H), ((0, 0), (0, OUT_PAD - OUT_DIM)))
    bout = jnp.pad(unif(ks[9], (1, OUT_DIM), H), ((0, 0), (0, OUT_PAD - OUT_DIM)))
    # Padded columns MUST be zero (the kernel's tanh over them must yield 0-free
    # junk only in columns the wrapper slices off; zero keeps them deterministic).
    assert bool(jnp.all(wout[:, OUT_DIM:] == 0.0))
    assert bool(jnp.all(bout[:, OUT_DIM:] == 0.0))
    return dict(w2_lat=w2_lat, w2_pos=w2_pos, b2=b2, w3=w3, b3=b3,
                wih=wih, whh=whh, blstm=blstm, wout=wout, bout=bout)


def ref_forward(pos, latent, p):
    """Pure-JAX reference (bf16-matched inputs, f32 accumulation)."""
    w2l = p['w2_lat'].astype(jnp.float32)
    w3 = p['w3'].astype(jnp.float32)
    wih = p['wih'].astype(jnp.float32)
    whh = p['whh'].astype(jnp.float32)

    lat = latent.astype(jnp.bfloat16).astype(jnp.float32)
    h1 = jax.nn.relu(lat @ w2l + pos @ p['w2_pos'] + p['b2'])
    h2 = jax.nn.relu(h1.astype(jnp.bfloat16).astype(jnp.float32) @ w3 + p['b3'])
    pre = h2.astype(jnp.bfloat16).astype(jnp.float32) @ wih + p['blstm']  # (B, 512)

    def step(carry, pre_t):
        h, c = carry
        hb = h.astype(jnp.bfloat16).astype(jnp.float32)
        gates = pre_t[None, :] + hb @ whh
        i = jax.nn.sigmoid(gates[:, 0:H])
        f = jax.nn.sigmoid(gates[:, H:2 * H])
        g = jnp.tanh(gates[:, 2 * H:3 * H])
        o = jax.nn.sigmoid(gates[:, 3 * H:4 * H])
        c = f * c + i * g
        h = o * jnp.tanh(c)
        return (h, c), h[0]

    (hf, cf), hs = lax.scan(step, (jnp.zeros((1, H)), jnp.zeros((1, H))), pre)
    logits = hs @ p['wout'][:, :OUT_DIM] + p['bout'][:, :OUT_DIM]
    action = jnp.stack([jax.nn.sigmoid(logits[:, 0]),
                        jnp.tanh(logits[:, 1])], axis=1)
    return action, hf.reshape(1, 1, H), cf.reshape(1, 1, H)


if __name__ == "__main__":
    key = jax.random.PRNGKey(0)
    kp, k1, k2 = jax.random.split(key, 3)
    params = init_params(kp)

    B = 12   # exercises one full 8-row block + a 4-row remainder
    pos = jax.random.normal(k1, (B, POS), jnp.float32)
    latent = jax.random.normal(k2, (B, LATENT), jnp.float32).astype(jnp.bfloat16)

    action, hn, cn = actor_latent_forward(pos, latent, params)
    jax.block_until_ready((action, hn, cn))

    a_ref, hn_ref_, cn_ref_ = ref_forward(pos, latent.astype(jnp.float32), params)
    assert action.shape == (B, OUT_DIM) and hn.shape == (1, 1, H) and cn.shape == (1, 1, H)
    assert jnp.allclose(action, a_ref, atol=1e-2, rtol=1e-2)
    assert jnp.allclose(hn, hn_ref_, atol=1e-2, rtol=1e-2)
    assert jnp.allclose(cn, cn_ref_, atol=1e-2, rtol=1e-2)

    print("KERNEL_OK")
</pallas_src>

<mosaic_0001>
module attributes {stable_mosaic.version = 11 : i64} {
  func.func @actor_latent_kernel(%arg0: memref<12x512xbf16, #tpu.memory_space<vmem>>, %arg1: memref<12x2xf32, #tpu.memory_space<vmem>>, %arg2: memref<512x256xbf16, #tpu.memory_space<vmem>>, %arg3: memref<2x256xf32, #tpu.memory_space<vmem>>, %arg4: memref<1x256xf32, #tpu.memory_space<vmem>>, %arg5: memref<256x128xbf16, #tpu.memory_space<vmem>>, %arg6: memref<1x128xf32, #tpu.memory_space<vmem>>, %arg7: memref<128x512xbf16, #tpu.memory_space<vmem>>, %arg8: memref<128x512xbf16, #tpu.memory_space<vmem>>, %arg9: memref<1x512xf32, #tpu.memory_space<vmem>>, %arg10: memref<128x128xf32, #tpu.memory_space<vmem>>, %arg11: memref<1x128xf32, #tpu.memory_space<vmem>>, %arg12: memref<1x128xf32, #tpu.memory_space<vmem>>, %arg13: memref<1x128xf32, #tpu.memory_space<vmem>>, %arg14: memref<12x128xf32, #tpu.memory_space<vmem>>, %arg15: memref<1x128xf32, #tpu.memory_space<vmem>>, %arg16: memref<1x128xf32, #tpu.memory_space<vmem>>, %arg17: memref<12x512xf32, #tpu.memory_space<vmem>>, %arg18: memref<12x128xf32, #tpu.memory_space<vmem>>) attributes {dimension_semantics = [], scalar_prefetch = 0 : i64, scratch_operands = 2 : i64, tpu.core_type = #tpu.core_type<tc>} {
    %c0 = arith.constant 0 : index
    %c0_0 = arith.constant 0 : index
    %0 = vector.load %arg0[%c0, %c0_0] : memref<12x512xbf16, #tpu.memory_space<vmem>>, vector<12x512xbf16>
    %c0_1 = arith.constant 0 : index
    %c0_2 = arith.constant 0 : index
    %1 = vector.load %arg1[%c0_1, %c0_2] : memref<12x2xf32, #tpu.memory_space<vmem>>, vector<12x2xf32>
    %c0_3 = arith.constant 0 : index
    %c0_4 = arith.constant 0 : index
    %2 = vector.load %arg2[%c0_3, %c0_4] : memref<512x256xbf16, #tpu.memory_space<vmem>>, vector<512x256xbf16>
    %cst = arith.constant dense<0.000000e+00> : vector<12x256xf32>
    %3 = tpu.matmul %0, %2, %cst {dimension_numbers = #tpu.dot_dimension_numbers<[1], [0], [0], [1], [0, 0, 1, 1], [], []>} : vector<12x512xbf16>, vector<512x256xbf16>, vector<12x256xf32> -> vector<12x256xf32>
    %4 = vector.extract_strided_slice %1 {offsets = [0, 0], sizes = [12, 1], strides = [1, 1]} : vector<12x2xf32> to vector<12x1xf32>
    %c0_5 = arith.constant 0 : index
    %c0_6 = arith.constant 0 : index
    %5 = vector.load %arg3[%c0_5, %c0_6] : memref<2x256xf32, #tpu.memory_space<vmem>>, vector<1x256xf32>
    %6 = vector.broadcast %4 : vector<12x1xf32> to vector<12x256xf32>
    %7 = vector.broadcast %5 : vector<1x256xf32> to vector<12x256xf32>
    %8 = arith.mulf %6, %7 : vector<12x256xf32>
    %9 = arith.addf %3, %8 : vector<12x256xf32>
    %10 = vector.extract_strided_slice %1 {offsets = [0, 1], sizes = [12, 1], strides = [1, 1]} : vector<12x2xf32> to vector<12x1xf32>
    %c1 = arith.constant 1 : index
    %c0_7 = arith.constant 0 : index
    %11 = vector.load %arg3[%c1, %c0_7] : memref<2x256xf32, #tpu.memory_space<vmem>>, vector<1x256xf32>
    %12 = vector.broadcast %10 : vector<12x1xf32> to vector<12x256xf32>
    %13 = vector.broadcast %11 : vector<1x256xf32> to vector<12x256xf32>
    %14 = arith.mulf %12, %13 : vector<12x256xf32>
    %15 = arith.addf %9, %14 : vector<12x256xf32>
    %c0_8 = arith.constant 0 : index
    %c0_9 = arith.constant 0 : index
    %16 = vector.load %arg4[%c0_8, %c0_9] : memref<1x256xf32, #tpu.memory_space<vmem>>, vector<1x256xf32>
    %17 = vector.broadcast %16 : vector<1x256xf32> to vector<12x256xf32>
    %18 = arith.addf %15, %17 : vector<12x256xf32>
    %cst_10 = arith.constant 0.000000e+00 : f32
    %19 = vector.broadcast %cst_10 : f32 to vector<12x256xf32>
    %20 = arith.maximumf %18, %19 : vector<12x256xf32>
    %21 = arith.truncf %20 : vector<12x256xf32> to vector<12x256xbf16>
    %c0_11 = arith.constant 0 : index
    %c0_12 = arith.constant 0 : index
    %22 = vector.load %arg5[%c0_11, %c0_12] : memref<256x128xbf16, #tpu.memory_space<vmem>>, vector<256x128xbf16>
    %cst_13 = arith.constant dense<0.000000e+00> : vector<12x128xf32>
    %23 = tpu.matmul %21, %22, %cst_13 {dimension_numbers = #tpu.dot_dimension_numbers<[1], [0], [0], [1], [0, 0, 1, 1], [], []>} : vector<12x256xbf16>, vector<256x128xbf16>, vector<12x128xf32> -> vector<12x128xf32>
    %c0_14 = arith.constant 0 : index
    %c0_15 = arith.constant 0 : index
    %24 = vector.load %arg6[%c0_14, %c0_15] : memref<1x128xf32, #tpu.memory_space<vmem>>, vector<1x128xf32>
    %25 = vector.broadcast %24 : vector<1x128xf32> to vector<12x128xf32>
    %26 = arith.addf %23, %25 : vector<12x128xf32>
    %cst_16 = arith.constant 0.000000e+00 : f32
    %27 = vector.broadcast %cst_16 : f32 to vector<12x128xf32>
    %28 = arith.maximumf %26, %27 : vector<12x128xf32>
    %29 = arith.truncf %28 : vector<12x128xf32> to vector<12x128xbf16>
    %c0_17 = arith.constant 0 : index
    %c0_18 = arith.constant 0 : index
    %30 = vector.load %arg7[%c0_17, %c0_18] : memref<128x512xbf16, #tpu.memory_space<vmem>>, vector<128x512xbf16>
    %cst_19 = arith.constant dense<0.000000e+00> : vector<12x512xf32>
    %31 = tpu.matmul %29, %30, %cst_19 {dimension_numbers = #tpu.dot_dimension_numbers<[1], [0], [0], [1], [0, 0, 1, 1], [], []>} : vector<12x128xbf16>, vector<128x512xbf16>, vector<12x512xf32> -> vector<12x512xf32>
    %c0_20 = arith.constant 0 : index
    %c0_21 = arith.constant 0 : index
    %32 = vector.load %arg9[%c0_20, %c0_21] : memref<1x512xf32, #tpu.memory_space<vmem>>, vector<1x512xf32>
    %33 = vector.broadcast %32 : vector<1x512xf32> to vector<12x512xf32>
    %34 = arith.addf %31, %33 : vector<12x512xf32>
    %c0_22 = arith.constant 0 : index
    %c0_23 = arith.constant 0 : index
    %35 = vector.load %arg17[%c0_22, %c0_23] : memref<12x512xf32, #tpu.memory_space<vmem>>, vector<12x512xf32>
    tpu.vector_store %arg17[%c0_22, %c0_23], %34 {strides = array<i32>} : memref<12x512xf32, #tpu.memory_space<vmem>>, vector<12x512xf32>,
    %36 = tpu.iota {dimensions = array<i32: 1>} : vector<1x512xi32>
    %c256_i32 = arith.constant 256 : i32
    %37 = vector.broadcast %c256_i32 : i32 to vector<1x512xi32>
    %38 = arith.cmpi sge, %36, %37 : vector<1x512xi32>
    %c384_i32 = arith.constant 384 : i32
    %39 = vector.broadcast %c384_i32 : i32 to vector<1x512xi32>
    %40 = arith.cmpi slt, %36, %39 : vector<1x512xi32>
    %41 = arith.andi %38, %40 : vector<1x512xi1>
    %cst_24 = arith.constant 1.000000e+00 : f32
    %cst_25 = arith.constant 5.000000e-01 : f32
    %42 = vector.broadcast %cst_24 : f32 to vector<1x512xf32>
    %43 = vector.broadcast %cst_25 : f32 to vector<1x512xf32>
    %44 = arith.select %41, %42, %43 : vector<1x512xi1>, vector<1x512xf32>
    %cst_26 = arith.constant 0.000000e+00 : f32
    %cst_27 = arith.constant 5.000000e-01 : f32
    %45 = vector.broadcast %cst_26 : f32 to vector<1x512xf32>
    %46 = vector.broadcast %cst_27 : f32 to vector<1x512xf32>
    %47 = arith.select %41, %45, %46 : vector<1x512xi1>, vector<1x512xf32>
    %c0_28 = arith.constant 0 : index
    %c0_29 = arith.constant 0 : index
    %48 = vector.load %arg12[%c0_28, %c0_29] : memref<1x128xf32, #tpu.memory_space<vmem>>, vector<1x128xf32>
    %c0_30 = arith.constant 0 : index
    %c0_31 = arith.constant 0 : index
    %49 = vector.load %arg13[%c0_30, %c0_31] : memref<1x128xf32, #tpu.memory_space<vmem>>, vector<1x128xf32>
    %c0_i32 = arith.constant 0 : i32
    %c8_i32 = arith.constant 8 : i32
    %50 = arith.muli %c0_i32, %c8_i32 : i32
    %51 = tpu.assume_multiple %50, 8 : i32
    %52 = arith.index_cast %51 : i32 to index
    %c0_32 = arith.constant 0 : index
    %53 = vector.load %arg17[%52, %c0_32] : memref<12x512xf32, #tpu.memory_space<vmem>>, vector<8x512xf32>
    %54 = vector.extract_strided_slice %53 {offsets = [0, 0], sizes = [1, 512], strides = [1, 1]} : vector<8x512xf32> to vector<1x512xf32>
    %55 = arith.truncf %48 : vector<1x128xf32> to vector<1x128xbf16>
    %c0_33 = arith.constant 0 : index
    %c0_34 = arith.constant 0 : index
    %56 = vector.load %arg8[%c0_33, %c0_34] : memref<128x512xbf16, #tpu.memory_space<vmem>>, vector<128x512xbf16>
    %cst_35 = arith.constant dense<0.000000e+00> : vector<1x512xf32>
    %57 = tpu.matmul %55, %56, %cst_35 {dimension_numbers = #tpu.dot_dimension_numbers<[1], [0], [0], [1], [0, 0, 1, 1], [], []>} : vector<1x128xbf16>, vector<128x512xbf16>, vector<1x512xf32> -> vector<1x512xf32>
    %58 = arith.addf %54, %57 : vector<1x512xf32>
    %59 = arith.mulf %58, %44 : vector<1x512xf32>
    %60 = math.tanh %59 : vector<1x512xf32>
    %61 = arith.mulf %60, %44 : vector<1x512xf32>
    %62 = arith.addf %61, %47 : vector<1x512xf32>
    %63 = vector.extract_strided_slice %62 {offsets = [0, 0], sizes = [1, 128], strides = [1, 1]} : vector<1x512xf32> to vector<1x128xf32>
    %64 = vector.extract_strided_slice %62 {offsets = [0, 128], sizes = [1, 128], strides = [1, 1]} : vector<1x512xf32> to vector<1x128xf32>
    %65 = vector.extract_strided_slice %62 {offsets = [0, 256], sizes = [1, 128], strides = [1, 1]} : vector<1x512xf32> to vector<1x128xf32>
    %66 = vector.extract_strided_slice %62 {offsets = [0, 384], sizes = [1, 128], strides = [1, 1]} : vector<1x512xf32> to vector<1x128xf32>
    %67 = arith.mulf %64, %49 : vector<1x128xf32>
    %68 = arith.mulf %63, %65 : vector<1x128xf32>
    %69 = arith.addf %67, %68 : vector<1x128xf32>
    %70 = math.tanh %69 : vector<1x128xf32>
    %71 = arith.mulf %66, %70 : vector<1x128xf32>
    %72 = vector.extract_strided_slice %53 {offsets = [1, 0], sizes = [1, 512], strides = [1, 1]} : vector<8x512xf32> to vector<1x512xf32>
    %73 = arith.truncf %71 : vector<1x128xf32> to vector<1x128xbf16>
    %c0_36 = arith.constant 0 : index
    %c0_37 = arith.constant 0 : index
    %74 = vector.load %arg8[%c0_36, %c0_37] : memref<128x512xbf16, #tpu.memory_space<vmem>>, vector<128x512xbf16>
    %cst_38 = arith.constant dense<0.000000e+00> : vector<1x512xf32>
    %75 = tpu.matmul %73, %74, %cst_38 {dimension_numbers = #tpu.dot_dimension_numbers<[1], [0], [0], [1], [0, 0, 1, 1], [], []>} : vector<1x128xbf16>, vector<128x512xbf16>, vector<1x512xf32> -> vector<1x512xf32>
    %76 = arith.addf %72, %75 : vector<1x512xf32>
    %77 = arith.mulf %76, %44 : vector<1x512xf32>
    %78 = math.tanh %77 : vector<1x512xf32>
    %79 = arith.mulf %78, %44 : vector<1x512xf32>
    %80 = arith.addf %79, %47 : vector<1x512xf32>
    %81 = vector.extract_strided_slice %80 {offsets = [0, 0], sizes = [1, 128], strides = [1, 1]} : vector<1x512xf32> to vector<1x128xf32>
    %82 = vector.extract_strided_slice %80 {offsets = [0, 128], sizes = [1, 128], strides = [1, 1]} : vector<1x512xf32> to vector<1x128xf32>
    %83 = vector.extract_strided_slice %80 {offsets = [0, 256], sizes = [1, 128], strides = [1, 1]} : vector<1x512xf32> to vector<1x128xf32>
    %84 = vector.extract_strided_slice %80 {offsets = [0, 384], sizes = [1, 128], strides = [1, 1]} : vector<1x512xf32> to vector<1x128xf32>
    %85 = arith.mulf %82, %69 : vector<1x128xf32>
    %86 = arith.mulf %81, %83 : vector<1x128xf32>
    %87 = arith.addf %85, %86 : vector<1x128xf32>
    %88 = math.tanh %87 : vector<1x128xf32>
    %89 = arith.mulf %84, %88 : vector<1x128xf32>
    %90 = vector.extract_strided_slice %53 {offsets = [2, 0], sizes = [1, 512], strides = [1, 1]} : vector<8x512xf32> to vector<1x512xf32>
    %91 = arith.truncf %89 : vector<1x128xf32> to vector<1x128xbf16>
    %c0_39 = arith.constant 0 : index
    %c0_40 = arith.constant 0 : index
    %92 = vector.load %arg8[%c0_39, %c0_40] : memref<128x512xbf16, #tpu.memory_space<vmem>>, vector<128x512xbf16>
    %cst_41 = arith.constant dense<0.000000e+00> : vector<1x512xf32>
    %93 = tpu.matmul %91, %92, %cst_41 {dimension_numbers = #tpu.dot_dimension_numbers<[1], [0], [0], [1], [0, 0, 1, 1], [], []>} : vector<1x128xbf16>, vector<128x512xbf16>, vector<1x512xf32> -> vector<1x512xf32>
    %94 = arith.addf %90, %93 : vector<1x512xf32>
    %95 = arith.mulf %94, %44 : vector<1x512xf32>
    %96 = math.tanh %95 : vector<1x512xf32>
    %97 = arith.mulf %96, %44 : vector<1x512xf32>
    %98 = arith.addf %97, %47 : vector<1x512xf32>
    %99 = vector.extract_strided_slice %98 {offsets = [0, 0], sizes = [1, 128], strides = [1, 1]} : vector<1x512xf32> to vector<1x128xf32>
    %100 = vector.extract_strided_slice %98 {offsets = [0, 128], sizes = [1, 128], strides = [1, 1]} : vector<1x512xf32> to vector<1x128xf32>
    %101 = vector.extract_strided_slice %98 {offsets = [0, 256], sizes = [1, 128], strides = [1, 1]} : vector<1x512xf32> to vector<1x128xf32>
    %102 = vector.extract_strided_slice %98 {offsets = [0, 384], sizes = [1, 128], strides = [1, 1]} : vector<1x512xf32> to vector<1x128xf32>
    %103 = arith.mulf %100, %87 : vector<1x128xf32>
    %104 = arith.mulf %99, %101 : vector<1x128xf32>
    %105 = arith.addf %103, %104 : vector<1x128xf32>
    %106 = math.tanh %105 : vector<1x128xf32>
    %107 = arith.mulf %102, %106 : vector<1x128xf32>
    %108 = vector.extract_strided_slice %53 {offsets = [3, 0], sizes = [1, 512], strides = [1, 1]} : vector<8x512xf32> to vector<1x512xf32>
    %109 = arith.truncf %107 : vector<1x128xf32> to vector<1x128xbf16>
    %c0_42 = arith.constant 0 : index
    %c0_43 = arith.constant 0 : index
    %110 = vector.load %arg8[%c0_42, %c0_43] : memref<128x512xbf16, #tpu.memory_space<vmem>>, vector<128x512xbf16>
    %cst_44 = arith.constant dense<0.000000e+00> : vector<1x512xf32>
    %111 = tpu.matmul %109, %110, %cst_44 {dimension_numbers = #tpu.dot_dimension_numbers<[1], [0], [0], [1], [0, 0, 1, 1], [], []>} : vector<1x128xbf16>, vector<128x512xbf16>, vector<1x512xf32> -> vector<1x512xf32>
    %112 = arith.addf %108, %111 : vector<1x512xf32>
    %113 = arith.mulf %112, %44 : vector<1x512xf32>
    %114 = math.tanh %113 : vector<1x512xf32>
    %115 = arith.mulf %114, %44 : vector<1x512xf32>
    %116 = arith.addf %115, %47 : vector<1x512xf32>
    %117 = vector.extract_strided_slice %116 {offsets = [0, 0], sizes = [1, 128], strides = [1, 1]} : vector<1x512xf32> to vector<1x128xf32>
    %118 = vector.extract_strided_slice %116 {offsets = [0, 128], sizes = [1, 128], strides = [1, 1]} : vector<1x512xf32> to vector<1x128xf32>
    %119 = vector.extract_strided_slice %116 {offsets = [0, 256], sizes = [1, 128], strides = [1, 1]} : vector<1x512xf32> to vector<1x128xf32>
    %120 = vector.extract_strided_slice %116 {offsets = [0, 384], sizes = [1, 128], strides = [1, 1]} : vector<1x512xf32> to vector<1x128xf32>
    %121 = arith.mulf %118, %105 : vector<1x128xf32>
    %122 = arith.mulf %117, %119 : vector<1x128xf32>
    %123 = arith.addf %121, %122 : vector<1x128xf32>
    %124 = math.tanh %123 : vector<1x128xf32>
    %125 = arith.mulf %120, %124 : vector<1x128xf32>
    %126 = vector.extract_strided_slice %53 {offsets = [4, 0], sizes = [1, 512], strides = [1, 1]} : vector<8x512xf32> to vector<1x512xf32>
    %127 = arith.truncf %125 : vector<1x128xf32> to vector<1x128xbf16>
    %c0_45 = arith.constant 0 : index
    %c0_46 = arith.constant 0 : index
    %128 = vector.load %arg8[%c0_45, %c0_46] : memref<128x512xbf16, #tpu.memory_space<vmem>>, vector<128x512xbf16>
    %cst_47 = arith.constant dense<0.000000e+00> : vector<1x512xf32>
    %129 = tpu.matmul %127, %128, %cst_47 {dimension_numbers = #tpu.dot_dimension_numbers<[1], [0], [0], [1], [0, 0, 1, 1], [], []>} : vector<1x128xbf16>, vector<128x512xbf16>, vector<1x512xf32> -> vector<1x512xf32>
    %130 = arith.addf %126, %129 : vector<1x512xf32>
    %131 = arith.mulf %130, %44 : vector<1x512xf32>
    %132 = math.tanh %131 : vector<1x512xf32>
    %133 = arith.mulf %132, %44 : vector<1x512xf32>
    %134 = arith.addf %133, %47 : vector<1x512xf32>
    %135 = vector.extract_strided_slice %134 {offsets = [0, 0], sizes = [1, 128], strides = [1, 1]} : vector<1x512xf32> to vector<1x128xf32>
    %136 = vector.extract_strided_slice %134 {offsets = [0, 128], sizes = [1, 128], strides = [1, 1]} : vector<1x512xf32> to vector<1x128xf32>
    %137 = vector.extract_strided_slice %134 {offsets = [0, 256], sizes = [1, 128], strides = [1, 1]} : vector<1x512xf32> to vector<1x128xf32>
    %138 = vector.extract_strided_slice %134 {offsets = [0, 384], sizes = [1, 128], strides = [1, 1]} : vector<1x512xf32> to vector<1x128xf32>
    %139 = arith.mulf %136, %123 : vector<1x128xf32>
    %140 = arith.mulf %135, %137 : vector<1x128xf32>
    %141 = arith.addf %139, %140 : vector<1x128xf32>
    %142 = math.tanh %141 : vector<1x128xf32>
    %143 = arith.mulf %138, %142 : vector<1x128xf32>
    %144 = vector.extract_strided_slice %53 {offsets = [5, 0], sizes = [1, 512], strides = [1, 1]} : vector<8x512xf32> to vector<1x512xf32>
    %145 = arith.truncf %143 : vector<1x128xf32> to vector<1x128xbf16>
    %c0_48 = arith.constant 0 : index
    %c0_49 = arith.constant 0 : index
    %146 = vector.load %arg8[%c0_48, %c0_49] : memref<128x512xbf16, #tpu.memory_space<vmem>>, vector<128x512xbf16>
    %cst_50 = arith.constant dense<0.000000e+00> : vector<1x512xf32>
    %147 = tpu.matmul %145, %146, %cst_50 {dimension_numbers = #tpu.dot_dimension_numbers<[1], [0], [0], [1], [0, 0, 1, 1], [], []>} : vector<1x128xbf16>, vector<128x512xbf16>, vector<1x512xf32> -> vector<1x512xf32>
    %148 = arith.addf %144, %147 : vector<1x512xf32>
    %149 = arith.mulf %148, %44 : vector<1x512xf32>
    %150 = math.tanh %149 : vector<1x512xf32>
    %151 = arith.mulf %150, %44 : vector<1x512xf32>
    %152 = arith.addf %151, %47 : vector<1x512xf32>
    %153 = vector.extract_strided_slice %152 {offsets = [0, 0], sizes = [1, 128], strides = [1, 1]} : vector<1x512xf32> to vector<1x128xf32>
    %154 = vector.extract_strided_slice %152 {offsets = [0, 128], sizes = [1, 128], strides = [1, 1]} : vector<1x512xf32> to vector<1x128xf32>
    %155 = vector.extract_strided_slice %152 {offsets = [0, 256], sizes = [1, 128], strides = [1, 1]} : vector<1x512xf32> to vector<1x128xf32>
    %156 = vector.extract_strided_slice %152 {offsets = [0, 384], sizes = [1, 128], strides = [1, 1]} : vector<1x512xf32> to vector<1x128xf32>
    %157 = arith.mulf %154, %141 : vector<1x128xf32>
    %158 = arith.mulf %153, %155 : vector<1x128xf32>
    %159 = arith.addf %157, %158 : vector<1x128xf32>
    %160 = math.tanh %159 : vector<1x128xf32>
    %161 = arith.mulf %156, %160 : vector<1x128xf32>
    %162 = vector.extract_strided_slice %53 {offsets = [6, 0], sizes = [1, 512], strides = [1, 1]} : vector<8x512xf32> to vector<1x512xf32>
    %163 = arith.truncf %161 : vector<1x128xf32> to vector<1x128xbf16>
    %c0_51 = arith.constant 0 : index
    %c0_52 = arith.constant 0 : index
    %164 = vector.load %arg8[%c0_51, %c0_52] : memref<128x512xbf16, #tpu.memory_space<vmem>>, vector<128x512xbf16>
    %cst_53 = arith.constant dense<0.000000e+00> : vector<1x512xf32>
    %165 = tpu.matmul %163, %164, %cst_53 {dimension_numbers = #tpu.dot_dimension_numbers<[1], [0], [0], [1], [0, 0, 1, 1], [], []>} : vector<1x128xbf16>, vector<128x512xbf16>, vector<1x512xf32> -> vector<1x512xf32>
    %166 = arith.addf %162, %165 : vector<1x512xf32>
    %167 = arith.mulf %166, %44 : vector<1x512xf32>
    %168 = math.tanh %167 : vector<1x512xf32>
    %169 = arith.mulf %168, %44 : vector<1x512xf32>
    %170 = arith.addf %169, %47 : vector<1x512xf32>
    %171 = vector.extract_strided_slice %170 {offsets = [0, 0], sizes = [1, 128], strides = [1, 1]} : vector<1x512xf32> to vector<1x128xf32>
    %172 = vector.extract_strided_slice %170 {offsets = [0, 128], sizes = [1, 128], strides = [1, 1]} : vector<1x512xf32> to vector<1x128xf32>
    %173 = vector.extract_strided_slice %170 {offsets = [0, 256], sizes = [1, 128], strides = [1, 1]} : vector<1x512xf32> to vector<1x128xf32>
    %174 = vector.extract_strided_slice %170 {offsets = [0, 384], sizes = [1, 128], strides = [1, 1]} : vector<1x512xf32> to vector<1x128xf32>
    %175 = arith.mulf %172, %159 : vector<1x128xf32>
    %176 = arith.mulf %171, %173 : vector<1x128xf32>
    %177 = arith.addf %175, %176 : vector<1x128xf32>
    %178 = math.tanh %177 : vector<1x128xf32>
    %179 = arith.mulf %174, %178 : vector<1x128xf32>
    %180 = vector.extract_strided_slice %53 {offsets = [7, 0], sizes = [1, 512], strides = [1, 1]} : vector<8x512xf32> to vector<1x512xf32>
    %181 = arith.truncf %179 : vector<1x128xf32> to vector<1x128xbf16>
    %c0_54 = arith.constant 0 : index
    %c0_55 = arith.constant 0 : index
    %182 = vector.load %arg8[%c0_54, %c0_55] : memref<128x512xbf16, #tpu.memory_space<vmem>>, vector<128x512xbf16>
    %cst_56 = arith.constant dense<0.000000e+00> : vector<1x512xf32>
    %183 = tpu.matmul %181, %182, %cst_56 {dimension_numbers = #tpu.dot_dimension_numbers<[1], [0], [0], [1], [0, 0, 1, 1], [], []>} : vector<1x128xbf16>, vector<128x512xbf16>, vector<1x512xf32> -> vector<1x512xf32>
    %184 = arith.addf %180, %183 : vector<1x512xf32>
    %185 = arith.mulf %184, %44 : vector<1x512xf32>
    %186 = math.tanh %185 : vector<1x512xf32>
    %187 = arith.mulf %186, %44 : vector<1x512xf32>
    %188 = arith.addf %187, %47 : vector<1x512xf32>
    %189 = vector.extract_strided_slice %188 {offsets = [0, 0], sizes = [1, 128], strides = [1, 1]} : vector<1x512xf32> to vector<1x128xf32>
    %190 = vector.extract_strided_slice %188 {offsets = [0, 128], sizes = [1, 128], strides = [1, 1]} : vector<1x512xf32> to vector<1x128xf32>
    %191 = vector.extract_strided_slice %188 {offsets = [0, 256], sizes = [1, 128], strides = [1, 1]} : vector<1x512xf32> to vector<1x128xf32>
    %192 = vector.extract_strided_slice %188 {offsets = [0, 384], sizes = [1, 128], strides = [1, 1]} : vector<1x512xf32> to vector<1x128xf32>
    %193 = arith.mulf %190, %177 : vector<1x128xf32>
    %194 = arith.mulf %189, %191 : vector<1x128xf32>
    %195 = arith.addf %193, %194 : vector<1x128xf32>
    %196 = math.tanh %195 : vector<1x128xf32>
    %197 = arith.mulf %192, %196 : vector<1x128xf32>
    %198 = tpu.concatenate %71, %89, %107, %125, %143, %161, %179, %197 in 0 : vector<1x128xf32>, vector<1x128xf32>, vector<1x128xf32>, vector<1x128xf32>, vector<1x128xf32>, vector<1x128xf32>, vector<1x128xf32>, vector<1x128xf32> -> vector<8x128xf32>
    %199 = arith.index_cast %51 : i32 to index
    %c0_57 = arith.constant 0 : index
    %200 = vector.load %arg18[%199, %c0_57] : memref<12x128xf32, #tpu.memory_space<vmem>>, vector<8x128xf32>
    tpu.vector_store %arg18[%199, %c0_57], %198 {strides = array<i32>} : memref<12x128xf32, #tpu.memory_space<vmem>>, vector<8x128xf32>,
    %c1_i32 = arith.constant 1 : i32
    %c8 = arith.constant 8 : index
    %c0_58 = arith.constant 0 : index
    %201 = vector.load %arg17[%c8, %c0_58] : memref<12x512xf32, #tpu.memory_space<vmem>>, vector<4x512xf32>
    %202 = vector.extract_strided_slice %201 {offsets = [0, 0], sizes = [1, 512], strides = [1, 1]} : vector<4x512xf32> to vector<1x512xf32>
    %203 = arith.truncf %197 : vector<1x128xf32> to vector<1x128xbf16>
    %c0_59 = arith.constant 0 : index
    %c0_60 = arith.constant 0 : index
    %204 = vector.load %arg8[%c0_59, %c0_60] : memref<128x512xbf16, #tpu.memory_space<vmem>>, vector<128x512xbf16>
    %cst_61 = arith.constant dense<0.000000e+00> : vector<1x512xf32>
    %205 = tpu.matmul %203, %204, %cst_61 {dimension_numbers = #tpu.dot_dimension_numbers<[1], [0], [0], [1], [0, 0, 1, 1], [], []>} : vector<1x128xbf16>, vector<128x512xbf16>, vector<1x512xf32> -> vector<1x512xf32>
    %206 = arith.addf %202, %205 : vector<1x512xf32>
    %207 = arith.mulf %206, %44 : vector<1x512xf32>
    %208 = math.tanh %207 : vector<1x512xf32>
    %209 = arith.mulf %208, %44 : vector<1x512xf32>
    %210 = arith.addf %209, %47 : vector<1x512xf32>
    %211 = vector.extract_strided_slice %210 {offsets = [0, 0], sizes = [1, 128], strides = [1, 1]} : vector<1x512xf32> to vector<1x128xf32>
    %212 = vector.extract_strided_slice %210 {offsets = [0, 128], sizes = [1, 128], strides = [1, 1]} : vector<1x512xf32> to vector<1x128xf32>
    %213 = vector.extract_strided_slice %210 {offsets = [0, 256], sizes = [1, 128], strides = [1, 1]} : vector<1x512xf32> to vector<1x128xf32>
    %214 = vector.extract_strided_slice %210 {offsets = [0, 384], sizes = [1, 128], strides = [1, 1]} : vector<1x512xf32> to vector<1x128xf32>
    %215 = arith.mulf %212, %195 : vector<1x128xf32>
    %216 = arith.mulf %211, %213 : vector<1x128xf32>
    %217 = arith.addf %215, %216 : vector<1x128xf32>
    %218 = math.tanh %217 : vector<1x128xf32>
    %219 = arith.mulf %214, %218 : vector<1x128xf32>
    %220 = vector.extract_strided_slice %201 {offsets = [1, 0], sizes = [1, 512], strides = [1, 1]} : vector<4x512xf32> to vector<1x512xf32>
    %221 = arith.truncf %219 : vector<1x128xf32> to vector<1x128xbf16>
    %c0_62 = arith.constant 0 : index
    %c0_63 = arith.constant 0 : index
    %222 = vector.load %arg8[%c0_62, %c0_63] : memref<128x512xbf16, #tpu.memory_space<vmem>>, vector<128x512xbf16>
    %cst_64 = arith.constant dense<0.000000e+00> : vector<1x512xf32>
    %223 = tpu.matmul %221, %222, %cst_64 {dimension_numbers = #tpu.dot_dimension_numbers<[1], [0], [0], [1], [0, 0, 1, 1], [], []>} : vector<1x128xbf16>, vector<128x512xbf16>, vector<1x512xf32> -> vector<1x512xf32>
    %224 = arith.addf %220, %223 : vector<1x512xf32>
    %225 = arith.mulf %224, %44 : vector<1x512xf32>
    %226 = math.tanh %225 : vector<1x512xf32>
    %227 = arith.mulf %226, %44 : vector<1x512xf32>
    %228 = arith.addf %227, %47 : vector<1x512xf32>
    %229 = vector.extract_strided_slice %228 {offsets = [0, 0], sizes = [1, 128], strides = [1, 1]} : vector<1x512xf32> to vector<1x128xf32>
    %230 = vector.extract_strided_slice %228 {offsets = [0, 128], sizes = [1, 128], strides = [1, 1]} : vector<1x512xf32> to vector<1x128xf32>
    %231 = vector.extract_strided_slice %228 {offsets = [0, 256], sizes = [1, 128], strides = [1, 1]} : vector<1x512xf32> to vector<1x128xf32>
    %232 = vector.extract_strided_slice %228 {offsets = [0, 384], sizes = [1, 128], strides = [1, 1]} : vector<1x512xf32> to vector<1x128xf32>
    %233 = arith.mulf %230, %217 : vector<1x128xf32>
    %234 = arith.mulf %229, %231 : vector<1x128xf32>
    %235 = arith.addf %233, %234 : vector<1x128xf32>
    %236 = math.tanh %235 : vector<1x128xf32>
    %237 = arith.mulf %232, %236 : vector<1x128xf32>
    %238 = vector.extract_strided_slice %201 {offsets = [2, 0], sizes = [1, 512], strides = [1, 1]} : vector<4x512xf32> to vector<1x512xf32>
    %239 = arith.truncf %237 : vector<1x128xf32> to vector<1x128xbf16>
    %c0_65 = arith.constant 0 : index
    %c0_66 = arith.constant 0 : index
    %240 = vector.load %arg8[%c0_65, %c0_66] : memref<128x512xbf16, #tpu.memory_space<vmem>>, vector<128x512xbf16>
    %cst_67 = arith.constant dense<0.000000e+00> : vector<1x512xf32>
    %241 = tpu.matmul %239, %240, %cst_67 {dimension_numbers = #tpu.dot_dimension_numbers<[1], [0], [0], [1], [0, 0, 1, 1], [], []>} : vector<1x128xbf16>, vector<128x512xbf16>, vector<1x512xf32> -> vector<1x512xf32>
    %242 = arith.addf %238, %241 : vector<1x512xf32>
    %243 = arith.mulf %242, %44 : vector<1x512xf32>
    %244 = math.tanh %243 : vector<1x512xf32>
    %245 = arith.mulf %244, %44 : vector<1x512xf32>
    %246 = arith.addf %245, %47 : vector<1x512xf32>
    %247 = vector.extract_strided_slice %246 {offsets = [0, 0], sizes = [1, 128], strides = [1, 1]} : vector<1x512xf32> to vector<1x128xf32>
    %248 = vector.extract_strided_slice %246 {offsets = [0, 128], sizes = [1, 128], strides = [1, 1]} : vector<1x512xf32> to vector<1x128xf32>
    %249 = vector.extract_strided_slice %246 {offsets = [0, 256], sizes = [1, 128], strides = [1, 1]} : vector<1x512xf32> to vector<1x128xf32>
    %250 = vector.extract_strided_slice %246 {offsets = [0, 384], sizes = [1, 128], strides = [1, 1]} : vector<1x512xf32> to vector<1x128xf32>
    %251 = arith.mulf %248, %235 : vector<1x128xf32>
    %252 = arith.mulf %247, %249 : vector<1x128xf32>
    %253 = arith.addf %251, %252 : vector<1x128xf32>
    %254 = math.tanh %253 : vector<1x128xf32>
    %255 = arith.mulf %250, %254 : vector<1x128xf32>
    %256 = vector.extract_strided_slice %201 {offsets = [3, 0], sizes = [1, 512], strides = [1, 1]} : vector<4x512xf32> to vector<1x512xf32>
    %257 = arith.truncf %255 : vector<1x128xf32> to vector<1x128xbf16>
    %c0_68 = arith.constant 0 : index
    %c0_69 = arith.constant 0 : index
    %258 = vector.load %arg8[%c0_68, %c0_69] : memref<128x512xbf16, #tpu.memory_space<vmem>>, vector<128x512xbf16>
    %cst_70 = arith.constant dense<0.000000e+00> : vector<1x512xf32>
    %259 = tpu.matmul %257, %258, %cst_70 {dimension_numbers = #tpu.dot_dimension_numbers<[1], [0], [0], [1], [0, 0, 1, 1], [], []>} : vector<1x128xbf16>, vector<128x512xbf16>, vector<1x512xf32> -> vector<1x512xf32>
    %260 = arith.addf %256, %259 : vector<1x512xf32>
    %261 = arith.mulf %260, %44 : vector<1x512xf32>
    %262 = math.tanh %261 : vector<1x512xf32>
    %263 = arith.mulf %262, %44 : vector<1x512xf32>
    %264 = arith.addf %263, %47 : vector<1x512xf32>
    %265 = vector.extract_strided_slice %264 {offsets = [0, 0], sizes = [1, 128], strides = [1, 1]} : vector<1x512xf32> to vector<1x128xf32>
    %266 = vector.extract_strided_slice %264 {offsets = [0, 128], sizes = [1, 128], strides = [1, 1]} : vector<1x512xf32> to vector<1x128xf32>
    %267 = vector.extract_strided_slice %264 {offsets = [0, 256], sizes = [1, 128], strides = [1, 1]} : vector<1x512xf32> to vector<1x128xf32>
    %268 = vector.extract_strided_slice %264 {offsets = [0, 384], sizes = [1, 128], strides = [1, 1]} : vector<1x512xf32> to vector<1x128xf32>
    %269 = arith.mulf %266, %253 : vector<1x128xf32>
    %270 = arith.mulf %265, %267 : vector<1x128xf32>
    %271 = arith.addf %269, %270 : vector<1x128xf32>
    %272 = math.tanh %271 : vector<1x128xf32>
    %273 = arith.mulf %268, %272 : vector<1x128xf32>
    %274 = tpu.concatenate %219, %237, %255, %273 in 0 : vector<1x128xf32>, vector<1x128xf32>, vector<1x128xf32>, vector<1x128xf32> -> vector<4x128xf32>
    %c8_71 = arith.constant 8 : index
    %c0_72 = arith.constant 0 : index
    %275 = vector.load %arg18[%c8_71, %c0_72] : memref<12x128xf32, #tpu.memory_space<vmem>>, vector<4x128xf32>
    tpu.vector_store %arg18[%c8_71, %c0_72], %274 {strides = array<i32>} : memref<12x128xf32, #tpu.memory_space<vmem>>, vector<4x128xf32>,
    %c0_73 = arith.constant 0 : index
    %c0_74 = arith.constant 0 : index
    %276 = vector.load %arg15[%c0_73, %c0_74] : memref<1x128xf32, #tpu.memory_space<vmem>>, vector<1x128xf32>
    tpu.vector_store %arg15[%c0_73, %c0_74], %273 {strides = array<i32>} : memref<1x128xf32, #tpu.memory_space<vmem>>, vector<1x128xf32>,
    %c0_75 = arith.constant 0 : index
    %c0_76 = arith.constant 0 : index
    %277 = vector.load %arg16[%c0_75, %c0_76] : memref<1x128xf32, #tpu.memory_space<vmem>>, vector<1x128xf32>
    tpu.vector_store %arg16[%c0_75, %c0_76], %271 {strides = array<i32>} : memref<1x128xf32, #tpu.memory_space<vmem>>, vector<1x128xf32>,
    %c0_77 = arith.constant 0 : index
    %c0_78 = arith.constant 0 : index
    %278 = vector.load %arg18[%c0_77, %c0_78] : memref<12x128xf32, #tpu.memory_space<vmem>>, vector<12x128xf32>
    %c0_79 = arith.constant 0 : index
    %c0_80 = arith.constant 0 : index
    %279 = vector.load %arg10[%c0_79, %c0_80] : memref<128x128xf32, #tpu.memory_space<vmem>>, vector<128x128xf32>
    %cst_81 = arith.constant dense<0.000000e+00> : vector<12x128xf32>
    %280 = tpu.matmul %278, %279, %cst_81 {dimension_numbers = #tpu.dot_dimension_numbers<[1], [0], [0], [1], [0, 0, 1, 1], [], []>} : vector<12x128xf32>, vector<128x128xf32>, vector<12x128xf32> -> vector<12x128xf32>
    %c0_82 = arith.constant 0 : index
    %c0_83 = arith.constant 0 : index
    %281 = vector.load %arg11[%c0_82, %c0_83] : memref<1x128xf32, #tpu.memory_space<vmem>>, vector<1x128xf32>
    %282 = vector.broadcast %281 : vector<1x128xf32> to vector<12x128xf32>
    %283 = arith.addf %280, %282 : vector<12x128xf32>
    %284 = tpu.iota {dimensions = array<i32: 1>} : vector<12x128xi32>
    %c0_i32_84 = arith.constant 0 : i32
    %285 = vector.broadcast %c0_i32_84 : i32 to vector<12x128xi32>
    %286 = arith.cmpi eq, %284, %285 : vector<12x128xi32>
    %cst_85 = arith.constant 5.000000e-01 : f32
    %287 = vector.broadcast %cst_85 : f32 to vector<12x128xf32>
    %288 = arith.mulf %287, %283 : vector<12x128xf32>
    %289 = math.tanh %288 : vector<12x128xf32>
    %cst_86 = arith.constant 5.000000e-01 : f32
    %290 = vector.broadcast %cst_86 : f32 to vector<12x128xf32>
    %291 = arith.mulf %290, %289 : vector<12x128xf32>
    %cst_87 = arith.constant 5.000000e-01 : f32
    %292 = vector.broadcast %cst_87 : f32 to vector<12x128xf32>
    %293 = arith.addf %291, %292 : vector<12x128xf32>
    %294 = math.tanh %283 : vector<12x128xf32>
    %295 = arith.select %286, %293, %294 : vector<12x128xi1>, vector<12x128xf32>
    %c0_88 = arith.constant 0 : index
    %c0_89 = arith.constant 0 : index
    %296 = vector.load %arg14[%c0_88, %c0_89] : memref<12x128xf32, #tpu.memory_space<vmem>>, vector<12x128xf32>
    tpu.vector_store %arg14[%c0_88, %c0_89], %295 {strides = array<i32>} : memref<12x128xf32, #tpu.memory_space<vmem>>, vector<12x128xf32>,
    return
  }
}

</mosaic_0001>

<llo_original>
// kernel: tpu_custom_call.1
$region0: #{tpu_custom_call.1}
  #allocation0 [shape = 'u32[]', space=smem, size = 0x4, offset = 0x4, fixed_abs, tag = 'smem constant byte address 0x4 - core index']
  #allocation1 [shape = 'u32[72,128]{1,0:T(1,128)}', space=vmem, size = 0x9000, scoped, tag = 'internal scratch']
  #allocation2 [shape = 'f32[12,512]{1,0:T(8,128)}', space=vmem, size = 0x8000, scoped, tag = 'scratch operand']
  #allocation3 [shape = 'f32[12,128]{1,0:T(8,128)}', space=vmem, size = 0x2000, scoped, tag = 'scratch operand']
  %s0 = inlined_call_operand.hbm [shape: bf16[12,512], index: 0, kind: input, shape index: {}]
  %s1 = inlined_call_operand.vmem [shape: f32[12,2], index: 1, kind: input, shape index: {}]
  %s2 = inlined_call_operand.hbm [shape: bf16[512,256], index: 2, kind: input, shape index: {}]
  %s3 = inlined_call_operand.vmem [shape: f32[2,256], index: 3, kind: input, shape index: {}]
  %s4 = inlined_call_operand.vmem [shape: f32[1,256], index: 4, kind: input, shape index: {}]
  %s5 = inlined_call_operand.hbm [shape: bf16[256,128], index: 5, kind: input, shape index: {}]
  %s6 = inlined_call_operand.vmem [shape: f32[1,128], index: 6, kind: input, shape index: {}]
  %s7 = inlined_call_operand.hbm [shape: bf16[128,512], index: 7, kind: input, shape index: {}]
  %s8 = inlined_call_operand.hbm [shape: bf16[128,512], index: 8, kind: input, shape index: {}]
  %s9 = inlined_call_operand.vmem [shape: f32[1,512], index: 9, kind: input, shape index: {}]
  %s10 = inlined_call_operand.hbm [shape: f32[128,128], index: 10, kind: input, shape index: {}]
  %s11 = inlined_call_operand.vmem [shape: f32[1,128], index: 11, kind: input, shape index: {}]
  %s12 = inlined_call_operand.vmem [shape: f32[1,128], index: 12, kind: input, shape index: {}]
  %s13 = inlined_call_operand.vmem [shape: f32[1,128], index: 13, kind: input, shape index: {}]
  %s14 = inlined_call_operand.hbm [shape: f32[12,128], index: 14, kind: output, shape index: {0}]
  %s15 = inlined_call_operand.hbm [shape: f32[1,128], index: 15, kind: output, shape index: {1}]
  %s16 = inlined_call_operand.hbm [shape: f32[1,128], index: 16, kind: output, shape index: {2}]
  %17 = xla_tuple %s14, %s15, %s16
  %s18 = sld [smem:[#allocation0]]
  $region106: #{tpu_custom_call.1} parent=0
    _
  %s20 = ssub.s32 1, %s18
  %s21 = scalar_select 0, %s20, %s18
  $region1: #{tpu_custom_call.1} parent=0
    #allocation4 [shape = 'u8[16384]{0}', space=vmem, size = 0x4000, scoped, tag = 'input window, operand 0, single buffered']
    #allocation5 [shape = 's32[1]{0}', space=sflag, size = 0x4, scoped, tag = 'scoped memory for tpu_custom_call.1']
    #allocation6 [shape = 's32[1]{0}', space=sflag, size = 0x4, scoped, tag = 'scoped memory for tpu_custom_call.1']
    #allocation7 [shape = 'u8[262144]{0}', space=vmem, size = 0x40000, scoped, tag = 'input window, operand 2, single buffered']
    #allocation8 [shape = 's32[1]{0}', space=sflag, size = 0x4, scoped, tag = 'scoped memory for tpu_custom_call.1']
    #allocation9 [shape = 'u8[65536]{0}', space=vmem, size = 0x10000, scoped, tag = 'input window, operand 5, single buffered']
    #allocation10 [shape = 'u8[131072]{0}', space=vmem, size = 0x20000, scoped, tag = 'input window, operand 7, single buffered']
    #allocation11 [shape = 's32[1]{0}', space=sflag, size = 0x4, scoped, tag = 'scoped memory for tpu_custom_call.1']
    #allocation12 [shape = 'u8[131072]{0}', space=vmem, size = 0x20000, scoped, tag = 'input window, operand 8, single buffered']
    #allocation13 [shape = 'u8[65536]{0}', space=vmem, size = 0x10000, scoped, tag = 'input window, operand 10, single buffered']
    #allocation14 [shape = 's32[1]{0}', space=sflag, size = 0x4, scoped, tag = 'scoped memory for tpu_custom_call.1']
    #allocation15 [shape = 'u8[8192]{0}', space=vmem, size = 0x2000, scoped, tag = 'output window, operand 0, single buffered']
    #allocation16 [shape = 'u8[512]{0}', space=vmem, size = 0x400, scoped, tag = 'output window, operand 1, single buffered']
    #allocation17 [shape = 's32[1]{0}', space=sflag, size = 0x4, scoped, tag = 'scoped memory for tpu_custom_call.1']
    #allocation18 [shape = 'u8[512]{0}', space=vmem, size = 0x400, scoped, tag = 'output window, operand 2, single buffered']
    %22 = vsyncpa [#allocation5], 0
    %23 = vsyncpa [#allocation8], 0
    %24 = vsyncpa [#allocation11], 0
    %25 = vsyncpa [#allocation14], 0
    %26 = vsyncpa [#allocation6], 0
    %27 = vsyncpa [#allocation17], 0
    // Predicated region
    $region2: #{tpu_custom_call.1} parent=1 // pred_check
      _
    $region3: #{tpu_custom_call.1} parent=1 // pred_check_branch
      %29 = sbr.rel (0) target = $region5
    $region4: #{tpu_custom_call.1} parent=1 // pred_region
      %31 = vsyncadd [#allocation5], 0
      %s32 = sshll.u32 %s0, 4
      %s33 = int_to_ptr.hbm [resolvable:$true] %s32
      %s34 = sshll.u32 [#allocation4], 4
      %s35 = int_to_ptr.vmem [resolvable:$true] %s34
      %40 = dma.hbm_to_vmem [thread:$0]  %s33, 512, %s35, [#allocation5], 256, 256, 16
    $region5: #{tpu_custom_call.1} parent=1 // pred_fallthru
      _
    // Predicated region
    $region6: #{tpu_custom_call.1} parent=1 // pred_check
      _
    $region7: #{tpu_custom_call.1} parent=1 // pred_check_branch
      %42 = sbr.rel (0) target = $region9
    $region8: #{tpu_custom_call.1} parent=1 // pred_region
      _
    $region9: #{tpu_custom_call.1} parent=1 // pred_fallthru
      _
    // Predicated region
    $region10: #{tpu_custom_call.1} parent=1 // pred_check
      _
    $region11: #{tpu_custom_call.1} parent=1 // pred_check_branch
      %44 = sbr.rel (0) target = $region13
    $region12: #{tpu_custom_call.1} parent=1 // pred_region
      %46 = vsyncadd [#allocation8], 0
      %s47 = sshll.u32 %s2, 4
      %s48 = int_to_ptr.hbm [resolvable:$true] %s47
      %s49 = sshll.u32 [#allocation7], 4
      %s50 = int_to_ptr.vmem [resolvable:$true] %s49
      %55 = dma.hbm_to_vmem [thread:$0]  %s48, 8192, %s50, [#allocation8], 128, 128, 8
    $region13: #{tpu_custom_call.1} parent=1 // pred_fallthru
      _
    // Predicated region
    $region14: #{tpu_custom_call.1} parent=1 // pred_check
      _
    $region15: #{tpu_custom_call.1} parent=1 // pred_check_branch
      %57 = sbr.rel (0) target = $region17
    $region16: #{tpu_custom_call.1} parent=1 // pred_region
      _
    $region17: #{tpu_custom_call.1} parent=1 // pred_fallthru
      _
    // Predicated region
    $region18: #{tpu_custom_call.1} parent=1 // pred_check
      _
    $region19: #{tpu_custom_call.1} parent=1 // pred_check_branch
      %59 = sbr.rel (0) target = $region21
    $region20: #{tpu_custom_call.1} parent=1 // pred_region
      _
    $region21: #{tpu_custom_call.1} parent=1 // pred_fallthru
      _
    // Predicated region
    $region22: #{tpu_custom_call.1} parent=1 // pred_check
      _
    $region23: #{tpu_custom_call.1} parent=1 // pred_check_branch
      %61 = sbr.rel (0) target = $region25
    $region24: #{tpu_custom_call.1} parent=1 // pred_region
      %63 = vsyncadd [#allocation8], 0
      %s64 = sshll.u32 %s5, 4
      %s65 = int_to_ptr.hbm [resolvable:$true] %s64
      %s66 = sshll.u32 [#allocation9], 4
      %s67 = int_to_ptr.vmem [resolvable:$true] %s66
      %72 = dma.hbm_to_vmem [thread:$0]  %s65, 2048, %s67, [#allocation8], 64, 64, 4
    $region25: #{tpu_custom_call.1} parent=1 // pred_fallthru
      _
    // Predicated region
    $region26: #{tpu_custom_call.1} parent=1 // pred_check
      _
    $region27: #{tpu_custom_call.1} parent=1 // pred_check_branch
      %74 = sbr.rel (0) target = $region29
    $region28: #{tpu_custom_call.1} parent=1 // pred_region
      _
    $region29: #{tpu_custom_call.1} parent=1 // pred_fallthru
      _
    // Predicated region
    $region30: #{tpu_custom_call.1} parent=1 // pred_check
      _
    $region31: #{tpu_custom_call.1} parent=1 // pred_check_branch
      %76 = sbr.rel (0) target = $region33
    $region32: #{tpu_custom_call.1} parent=1 // pred_region
      %78 = vsyncadd [#allocation11], 0
      %s79 = sshll.u32 %s7, 4
      %s80 = int_to_ptr.hbm [resolvable:$true] %s79
      %s81 = sshll.u32 [#allocation10], 4
      %s82 = int_to_ptr.vmem [resolvable:$true] %s81
      %87 = dma.hbm_to_vmem [thread:$0]  %s80, 4096, %s82, [#allocation11], 256, 256, 16
    $region33: #{tpu_custom_call.1} parent=1 // pred_fallthru
      _
    // Predicated region
    $region34: #{tpu_custom_call.1} parent=1 // pred_check
      _
    $region35: #{tpu_custom_call.1} parent=1 // pred_check_branch
      %89 = sbr.rel (0) target = $region37
    $region36: #{tpu_custom_call.1} parent=1 // pred_region
      %91 = vsyncadd [#allocation11], 0
      %s92 = sshll.u32 %s8, 4
      %s93 = int_to_ptr.hbm [resolvable:$true] %s92
      %s94 = sshll.u32 [#allocation12], 4
      %s95 = int_to_ptr.vmem [resolvable:$true] %s94
      %100 = dma.hbm_to_vmem [thread:$0]  %s93, 4096, %s95, [#allocation11], 256, 256, 16
    $region37: #{tpu_custom_call.1} parent=1 // pred_fallthru
      _
    // Predicated region
    $region38: #{tpu_custom_call.1} parent=1 // pred_check
      _
    $region39: #{tpu_custom_call.1} parent=1 // pred_check_branch
      %102 = sbr.rel (0) target = $region41
    $region40: #{tpu_custom_call.1} parent=1 // pred_region
      _
    $region41: #{tpu_custom_call.1} parent=1 // pred_fallthru
      _
    // Predicated region
    $region42: #{tpu_custom_call.1} parent=1 // pred_check
      _
    $region43: #{tpu_custom_call.1} parent=1 // pred_check_branch
      %104 = sbr.rel (0) target = $region45
    $region44: #{tpu_custom_call.1} parent=1 // pred_region
      %106 = vsyncadd [#allocation14], 0
      %s107 = sshll.u32 %s10, 4
      %s108 = int_to_ptr.hbm [resolvable:$true] %s107
      %s109 = sshll.u32 [#allocation13], 4
      %s110 = int_to_ptr.vmem [resolvable:$true] %s109
      %115 = dma.hbm_to_vmem [thread:$0]  %s108, 2048, %s110, [#allocation14], 128, 128, 8
    $region45: #{tpu_custom_call.1} parent=1 // pred_fallthru
      _
    // Predicated region
    $region46: #{tpu_custom_call.1} parent=1 // pred_check
      _
    $region47: #{tpu_custom_call.1} parent=1 // pred_check_branch
      %117 = sbr.rel (0) target = $region49
    $region48: #{tpu_custom_call.1} parent=1 // pred_region
      _
    $region49: #{tpu_custom_call.1} parent=1 // pred_fallthru
      _
    // Predicated region
    $region50: #{tpu_custom_call.1} parent=1 // pred_check
      _
    $region51: #{tpu_custom_call.1} parent=1 // pred_check_branch
      %119 = sbr.rel (0) target = $region53
    $region52: #{tpu_custom_call.1} parent=1 // pred_region
      _
    $region53: #{tpu_custom_call.1} parent=1 // pred_fallthru
      _
    // Predicated region
    $region54: #{tpu_custom_call.1} parent=1 // pred_check
      _
    $region55: #{tpu_custom_call.1} parent=1 // pred_check_branch
      %121 = sbr.rel (0) target = $region57
    $region56: #{tpu_custom_call.1} parent=1 // pred_region
      _
    $region57: #{tpu_custom_call.1} parent=1 // pred_fallthru
      _
    // Predicated region
    $region58: #{tpu_custom_call.1} parent=1 // pred_check
      _
    $region59: #{tpu_custom_call.1} parent=1 // pred_check_branch
      %123 = sbr.rel (0) target = $region61
    $region60: #{tpu_custom_call.1} parent=1 // pred_region
      %125 = dma.done [#allocation5], 512
    $region61: #{tpu_custom_call.1} parent=1 // pred_fallthru
      _
    // Predicated region
    $region62: #{tpu_custom_call.1} parent=1 // pred_check
      _
    $region63: #{tpu_custom_call.1} parent=1 // pred_check_branch
      %127 = sbr.rel (0) target = $region65
    $region64: #{tpu_custom_call.1} parent=1 // pred_region
      %129 = dma.done [#allocation8], 8192
    $region65: #{tpu_custom_call.1} parent=1 // pred_fallthru
      _
    // Predicated region
    $region66: #{tpu_custom_call.1} parent=1 // pred_check
      _
    $region67: #{tpu_custom_call.1} parent=1 // pred_check_branch
      %131 = sbr.rel (0) target = $region69
    $region68: #{tpu_custom_call.1} parent=1 // pred_region
      %133 = dma.done [#allocation8], 2048
    $region69: #{tpu_custom_call.1} parent=1 // pred_fallthru
      _
    // Predicated region
    $region70: #{tpu_custom_call.1} parent=1 // pred_check
      _
    $region71: #{tpu_custom_call.1} parent=1 // pred_check_branch
      %135 = sbr.rel (0) target = $region73
    $region72: #{tpu_custom_call.1} parent=1 // pred_region
      %137 = dma.done [#allocation11], 4096
    $region73: #{tpu_custom_call.1} parent=1 // pred_fallthru
      _
    // Predicated region
    $region74: #{tpu_custom_call.1} parent=1 // pred_check
      _
    $region75: #{tpu_custom_call.1} parent=1 // pred_check_branch
      %139 = sbr.rel (0) target = $region77
    $region76: #{tpu_custom_call.1} parent=1 // pred_region
      %141 = dma.done [#allocation11], 4096
    $region77: #{tpu_custom_call.1} parent=1 // pred_fallthru
      _
    // Predicated region
    $region78: #{tpu_custom_call.1} parent=1 // pred_check
      _
    $region79: #{tpu_custom_call.1} parent=1 // pred_check_branch
      %143 = sbr.rel (0) target = $region81
    $region80: #{tpu_custom_call.1} parent=1 // pred_region
      %145 = dma.done [#allocation14], 2048
    $region81: #{tpu_custom_call.1} parent=1 // pred_fallthru
      _
    %v146 = vld [vmem:[#allocation4] sm:$0xff]
    %v147 = vld [vmem:[#allocation4 + $0x8] sm:$0xff]
    %v148 = vld [vmem:[#allocation4 + $0x10] sm:$0x33]
    %v149 = vld [vmem:[#allocation4 + $0x18] sm:$0x33]
    %v150 = vld [vmem:[%s1] sm:$0xff]
    %v151 = vld [vmem:[%s1 + $0x8] sm:$0xf]
    %v152 = vld [vmem:[#allocation7] sm:$0xff]
    %v153 = vld [vmem:[#allocation7 + $0x8] sm:$0xff]
    %v154 = vld [vmem:[#allocation7 + $0x10] sm:$0xff]
    %v155 = vld [vmem:[#allocation7 + $0x18] sm:$0xff]
    %v156 = vld [vmem:[#allocation7 + $0x20] sm:$0xff]
    %v157 = vld [vmem:[#allocation7 + $0x28] sm:$0xff]
    %v158 = vld [vmem:[#allocation7 + $0x30] sm:$0xff]
    %v159 = vld [vmem:[#allocation7 + $0x38] sm:$0xff]
    %v160 = vld [vmem:[#allocation7 + $0x40] sm:$0xff]
    %v161 = vld [vmem:[#allocation7 + $0x48] sm:$0xff]
    %v162 = vld [vmem:[#allocation7 + $0x50] sm:$0xff]
    %v163 = vld [vmem:[#allocation7 + $0x58] sm:$0xff]
    %v164 = vld [vmem:[#allocation7 + $0x60] sm:$0xff]
    %v165 = vld [vmem:[#allocation7 + $0x68] sm:$0xff]
    %v166 = vld [vmem:[#allocation7 + $0x70] sm:$0xff]
    %v167 = vld [vmem:[#allocation7 + $0x78] sm:$0xff]
    %v168 = vld [vmem:[#allocation7 + $0x80] sm:$0xff]
    %v169 = vld [vmem:[#allocation7 + $0x88] sm:$0xff]
    %v170 = vld [vmem:[#allocation7 + $0x90] sm:$0xff]
    %v171 = vld [vmem:[#allocation7 + $0x98] sm:$0xff]
    %v172 = vld [vmem:[#allocation7 + $0xa0] sm:$0xff]
    %v173 = vld [vmem:[#allocation7 + $0xa8] sm:$0xff]
    %v174 = vld [vmem:[#allocation7 + $0xb0] sm:$0xff]
    %v175 = vld [vmem:[#allocation7 + $0xb8] sm:$0xff]
    %v176 = vld [vmem:[#allocation7 + $0xc0] sm:$0xff]
    %v177 = vld [vmem:[#allocation7 + $0xc8] sm:$0xff]
    %v178 = vld [vmem:[#allocation7 + $0xd0] sm:$0xff]
    %v179 = vld [vmem:[#allocation7 + $0xd8] sm:$0xff]
    %v180 = vld [vmem:[#allocation7 + $0xe0] sm:$0xff]
    %v181 = vld [vmem:[#allocation7 + $0xe8] sm:$0xff]
    %v182 = vld [vmem:[#allocation7 + $0xf0] sm:$0xff]
    %v183 = vld [vmem:[#allocation7 + $0xf8] sm:$0xff]
    %v184 = vld [vmem:[#allocation7 + $0x100] sm:$0xff]
    %v185 = vld [vmem:[#allocation7 + $0x108] sm:$0xff]
    %v186 = vld [vmem:[#allocation7 + $0x110] sm:$0xff]
    %v187 = vld [vmem:[#allocation7 + $0x118] sm:$0xff]
    %v188 = vld [vmem:[#allocation7 + $0x120] sm:$0xff]
    %v189 = vld [vmem:[#allocation7 + $0x128] sm:$0xff]
    %v190 = vld [vmem:[#allocation7 + $0x130] sm:$0xff]
    %v191 = vld [vmem:[#allocation7 + $0x138] sm:$0xff]
    %v192 = vld [vmem:[#allocation7 + $0x140] sm:$0xff]
    %v193 = vld [vmem:[#allocation7 + $0x148] sm:$0xff]
    %v194 = vld [vmem:[#allocation7 + $0x150] sm:$0xff]
    %v195 = vld [vmem:[#allocation7 + $0x158] sm:$0xff]
    %v196 = vld [vmem:[#allocation7 + $0x160] sm:$0xff]
    %v197 = vld [vmem:[#allocation7 + $0x168] sm:$0xff]
    %v198 = vld [vmem:[#allocation7 + $0x170] sm:$0xff]
    %v199 = vld [vmem:[#allocation7 + $0x178] sm:$0xff]
    %v200 = vld [vmem:[#allocation7 + $0x180] sm:$0xff]
    %v201 = vld [vmem:[#allocation7 + $0x188] sm:$0xff]
    %v202 = vld [vmem:[#allocation7 + $0x190] sm:$0xff]
    %v203 = vld [vmem:[#allocation7 + $0x198] sm:$0xff]
    %v204 = vld [vmem:[#allocation7 + $0x1a0] sm:$0xff]
    %v205 = vld [vmem:[#allocation7 + $0x1a8] sm:$0xff]
    %v206 = vld [vmem:[#allocation7 + $0x1b0] sm:$0xff]
    %v207 = vld [vmem:[#allocation7 + $0x1b8] sm:$0xff]
    %v208 = vld [vmem:[#allocation7 + $0x1c0] sm:$0xff]
    %v209 = vld [vmem:[#allocation7 + $0x1c8] sm:$0xff]
    %v210 = vld [vmem:[#allocation7 + $0x1d0] sm:$0xff]
    %v211 = vld [vmem:[#allocation7 + $0x1d8] sm:$0xff]
    %v212 = vld [vmem:[#allocation7 + $0x1e0] sm:$0xff]
    %v213 = vld [vmem:[#allocation7 + $0x1e8] sm:$0xff]
    %v214 = vld [vmem:[#allocation7 + $0x1f0] sm:$0xff]
    %v215 = vld [vmem:[#allocation7 + $0x1f8] sm:$0xff]
    %v216 = vld [vmem:[%s3] ss:$2 sm:$0x3]
    %218 = vset.pattern.permute.xlu0 0
    %219 = vperm.xlu0 %218, %v150
    %v220 = vpop.permute.xlu0 %219
    %223 = vset.pattern.permute.xlu0 0
    %224 = vperm.xlu0 %223, %v151
    %v225 = vpop.permute.xlu0 %224
    %v228 = vperm.slane %v216, 0
    %v229 = vperm.slane %v216, 1
    %v232 = vmul.f32 %v220, %v228
    %v233 = vmul.f32 %v220, %v229
    %v234 = vmul.f32 %v225, %v228
    %v235 = vmul.f32 %v225, %v229
    %v240 = vunpack.c.l.b16 %v146
    %v241 = vunpack.c.h.b16 %v146
    %v242 = vunpack.c.l.b16 %v147
    %v243 = vunpack.c.h.b16 %v147
    %v244 = vunpack.c.l.b16 %v148
    %v245 = vunpack.c.h.b16 %v148
    %v246 = vunpack.c.l.b16 %v149
    %v247 = vunpack.c.h.b16 %v149
    %v248 = vpack.c.b16 %v244, %v240
    %v249 = vpack.c.b16 %v245, %v241
    %v250 = vpack.c.b16 %v246, %v242
    %v251 = vpack.c.b16 %v247, %v243
    %v320 = vunpack.c.l.b16 %v152
    %v321 = vunpack.c.h.b16 %v152
    %v322 = vunpack.c.l.b16 %v153
    %v323 = vunpack.c.h.b16 %v153
    %v324 = vunpack.c.l.b16 %v154
    %v325 = vunpack.c.h.b16 %v154
    %v326 = vunpack.c.l.b16 %v155
    %v327 = vunpack.c.h.b16 %v155
    %v328 = vunpack.c.l.b16 %v156
    %v329 = vunpack.c.h.b16 %v156
    %v330 = vunpack.c.l.b16 %v157
    %v331 = vunpack.c.h.b16 %v157
    %v332 = vunpack.c.l.b16 %v158
    %v333 = vunpack.c.h.b16 %v158
    %v334 = vunpack.c.l.b16 %v159
    %v335 = vunpack.c.h.b16 %v159
    %v336 = vunpack.c.l.b16 %v160
    %v337 = vunpack.c.h.b16 %v160
    %v338 = vunpack.c.l.b16 %v161
    %v339 = vunpack.c.h.b16 %v161
    %v340 = vunpack.c.l.b16 %v162
    %v341 = vunpack.c.h.b16 %v162
    %v342 = vunpack.c.l.b16 %v163
    %v343 = vunpack.c.h.b16 %v163
    %v344 = vunpack.c.l.b16 %v164
    %v345 = vunpack.c.h.b16 %v164
    %v346 = vunpack.c.l.b16 %v165
    %v347 = vunpack.c.h.b16 %v165
    %v348 = vunpack.c.l.b16 %v166
    %v349 = vunpack.c.h.b16 %v166
    %v350 = vunpack.c.l.b16 %v167
    %v351 = vunpack.c.h.b16 %v167
    %v352 = vunpack.c.l.b16 %v168
    %v353 = vunpack.c.h.b16 %v168
    %v354 = vunpack.c.l.b16 %v169
    %v355 = vunpack.c.h.b16 %v169
    %v356 = vunpack.c.l.b16 %v170
    %v357 = vunpack.c.h.b16 %v170
    %v358 = vunpack.c.l.b16 %v171
    %v359 = vunpack.c.h.b16 %v171
    %v360 = vunpack.c.l.b16 %v172
    %v361 = vunpack.c.h.b16 %v172
    %v362 = vunpack.c.l.b16 %v173
    %v363 = vunpack.c.h.b16 %v173
    %v364 = vunpack.c.l.b16 %v174
    %v365 = vunpack.c.h.b16 %v174
    %v366 = vunpack.c.l.b16 %v175
    %v367 = vunpack.c.h.b16 %v175
    %v368 = vunpack.c.l.b16 %v176
    %v369 = vunpack.c.h.b16 %v176
    %v370 = vunpack.c.l.b16 %v177
    %v371 = vunpack.c.h.b16 %v177
    %v372 = vunpack.c.l.b16 %v178
    %v373 = vunpack.c.h.b16 %v178
    %v374 = vunpack.c.l.b16 %v179
    %v375 = vunpack.c.h.b16 %v179
    %v376 = vunpack.c.l.b16 %v180
    %v377 = vunpack.c.h.b16 %v180
    %v378 = vunpack.c.l.b16 %v181
    %v379 = vunpack.c.h.b16 %v181
    %v380 = vunpack.c.l.b16 %v182
    %v381 = vunpack.c.h.b16 %v182
    %v382 = vunpack.c.l.b16 %v183
    %v383 = vunpack.c.h.b16 %v183
    %v384 = vunpack.c.l.b16 %v184
    %v385 = vunpack.c.h.b16 %v184
    %v386 = vunpack.c.l.b16 %v185
    %v387 = vunpack.c.h.b16 %v185
    %v388 = vunpack.c.l.b16 %v186
    %v389 = vunpack.c.h.b16 %v186
    %v390 = vunpack.c.l.b16 %v187
    %v391 = vunpack.c.h.b16 %v187
    %v392 = vunpack.c.l.b16 %v188
    %v393 = vunpack.c.h.b16 %v188
    %v394 = vunpack.c.l.b16 %v189
    %v395 = vunpack.c.h.b16 %v189
    %v396 = vunpack.c.l.b16 %v190
    %v397 = vunpack.c.h.b16 %v190
    %v398 = vunpack.c.l.b16 %v191
    %v399 = vunpack.c.h.b16 %v191
    %v400 = vunpack.c.l.b16 %v192
    %v401 = vunpack.c.h.b16 %v192
    %v402 = vunpack.c.l.b16 %v193
    %v403 = vunpack.c.h.b16 %v193
    %v404 = vunpack.c.l.b16 %v194
    %v405 = vunpack.c.h.b16 %v194
    %v406 = vunpack.c.l.b16 %v195
    %v407 = vunpack.c.h.b16 %v195
    %v408 = vunpack.c.l.b16 %v196
    %v409 = vunpack.c.h.b16 %v196
    %v410 = vunpack.c.l.b16 %v197
    %v411 = vunpack.c.h.b16 %v197
    %v412 = vunpack.c.l.b16 %v198
    %v413 = vunpack.c.h.b16 %v198
    %v414 = vunpack.c.l.b16 %v199
    %v415 = vunpack.c.h.b16 %v199
    %v416 = vunpack.c.l.b16 %v200
    %v417 = vunpack.c.h.b16 %v200
    %v418 = vunpack.c.l.b16 %v201
    %v419 = vunpack.c.h.b16 %v201
    %v420 = vunpack.c.l.b16 %v202
    %v421 = vunpack.c.h.b16 %v202
    %v422 = vunpack.c.l.b16 %v203
    %v423 = vunpack.c.h.b16 %v203
    %v424 = vunpack.c.l.b16 %v204
    %v425 = vunpack.c.h.b16 %v204
    %v426 = vunpack.c.l.b16 %v205
    %v427 = vunpack.c.h.b16 %v205
    %v428 = vunpack.c.l.b16 %v206
    %v429 = vunpack.c.h.b16 %v206
    %v430 = vunpack.c.l.b16 %v207
    %v431 = vunpack.c.h.b16 %v207
    %v432 = vunpack.c.l.b16 %v208
    %v433 = vunpack.c.h.b16 %v208
    %v434 = vunpack.c.l.b16 %v209
    %v435 = vunpack.c.h.b16 %v209
    %v436 = vunpack.c.l.b16 %v210
    %v437 = vunpack.c.h.b16 %v210
    %v438 = vunpack.c.l.b16 %v211
    %v439 = vunpack.c.h.b16 %v211
    %v440 = vunpack.c.l.b16 %v212
    %v441 = vunpack.c.h.b16 %v212
    %v442 = vunpack.c.l.b16 %v213
    %v443 = vunpack.c.h.b16 %v213
    %v444 = vunpack.c.l.b16 %v214
    %v445 = vunpack.c.h.b16 %v214
    %v446 = vunpack.c.l.b16 %v215
    %v447 = vunpack.c.h.b16 %v215
    %v448 = vpack.c.b16 %v322, %v320
    %v449 = vpack.c.b16 %v323, %v321
    %v450 = vpack.c.b16 %v326, %v324
    %v451 = vpack.c.b16 %v327, %v325
    %v452 = vpack.c.b16 %v330, %v328
    %v453 = vpack.c.b16 %v331, %v329
    %v454 = vpack.c.b16 %v334, %v332
    %v455 = vpack.c.b16 %v335, %v333
    %v456 = vpack.c.b16 %v338, %v336
    %v457 = vpack.c.b16 %v339, %v337
    %v458 = vpack.c.b16 %v342, %v340
    %v459 = vpack.c.b16 %v343, %v341
    %v460 = vpack.c.b16 %v346, %v344
    %v461 = vpack.c.b16 %v347, %v345
    %v462 = vpack.c.b16 %v350, %v348
    %v463 = vpack.c.b16 %v351, %v349
    %v464 = vpack.c.b16 %v354, %v352
    %v465 = vpack.c.b16 %v355, %v353
    %v466 = vpack.c.b16 %v358, %v356
    %v467 = vpack.c.b16 %v359, %v357
    %v468 = vpack.c.b16 %v362, %v360
    %v469 = vpack.c.b16 %v363, %v361
    %v470 = vpack.c.b16 %v366, %v364
    %v471 = vpack.c.b16 %v367, %v365
    %v472 = vpack.c.b16 %v370, %v368
    %v473 = vpack.c.b16 %v371, %v369
    %v474 = vpack.c.b16 %v374, %v372
    %v475 = vpack.c.b16 %v375, %v373
    %v476 = vpack.c.b16 %v378, %v376
    %v477 = vpack.c.b16 %v379, %v377
    %v478 = vpack.c.b16 %v382, %v380
    %v479 = vpack.c.b16 %v383, %v381
    %v480 = vpack.c.b16 %v386, %v384
    %v481 = vpack.c.b16 %v387, %v385
    %v482 = vpack.c.b16 %v390, %v388
    %v483 = vpack.c.b16 %v391, %v389
    %v484 = vpack.c.b16 %v394, %v392
    %v485 = vpack.c.b16 %v395, %v393
    %v486 = vpack.c.b16 %v398, %v396
    %v487 = vpack.c.b16 %v399, %v397
    %v488 = vpack.c.b16 %v402, %v400
    %v489 = vpack.c.b16 %v403, %v401
    %v490 = vpack.c.b16 %v406, %v404
    %v491 = vpack.c.b16 %v407, %v405
    %v492 = vpack.c.b16 %v410, %v408
    %v493 = vpack.c.b16 %v411, %v409
    %v494 = vpack.c.b16 %v414, %v412
    %v495 = vpack.c.b16 %v415, %v413
    %v496 = vpack.c.b16 %v418, %v416
    %v497 = vpack.c.b16 %v419, %v417
    %v498 = vpack.c.b16 %v422, %v420
    %v499 = vpack.c.b16 %v423, %v421
    %v500 = vpack.c.b16 %v426, %v424
    %v501 = vpack.c.b16 %v427, %v425
    %v502 = vpack.c.b16 %v430, %v428
    %v503 = vpack.c.b16 %v431, %v429
    %v504 = vpack.c.b16 %v434, %v432
    %v505 = vpack.c.b16 %v435, %v433
    %v506 = vpack.c.b16 %v438, %v436
    %v507 = vpack.c.b16 %v439, %v437
    %v508 = vpack.c.b16 %v442, %v440
    %v509 = vpack.c.b16 %v443, %v441
    %v510 = vpack.c.b16 %v446, %v444
    %v511 = vpack.c.b16 %v447, %v445
    %576 = vmatpush.bf16.msra.mxu0 %v462
    %577 = vmatpush.bf16.msra.mxu0 %v460
    %578 = vmatpush.bf16.msra.mxu0 %v458
    %579 = vmatpush.bf16.msra.mxu0 %v456
    %580 = vmatpush.bf16.msra.mxu0 %v454
    %581 = vmatpush.bf16.msra.mxu0 %v452
    %582 = vmatpush.bf16.msra.mxu0 %v450
    %583 = vmatpush.bf16.msra.mxu0 %v448
    %584 = vmatmul.bf16.gmra.mxu0 %v248
    %v585 = vpop.f32.mrf.mxu0
    %v586 = vadd.f32 %v232, %v585
    %v587 = vpop.f32.mrf.mxu0
    %v588 = vadd.f32 %v234, %v587
    %589 = vdwg.mxu0
    %590 = vmatpush.bf16.msra.mxu0 %v478
    %591 = vmatpush.bf16.msra.mxu0 %v476
    %592 = vmatpush.bf16.msra.mxu0 %v474
    %593 = vmatpush.bf16.msra.mxu0 %v472
    %594 = vmatpush.bf16.msra.mxu0 %v470
    %595 = vmatpush.bf16.msra.mxu0 %v468
    %596 = vmatpush.bf16.msra.mxu0 %v466
    %597 = vmatpush.bf16.msra.mxu0 %v464
    %598 = vmatmul.bf16.gmra.mxu0 %v249
    %v599 = vpop.f32.mrf.mxu0
    %v600 = vadd.f32 %v586, %v599
    %v601 = vpop.f32.mrf.mxu0
    %v602 = vadd.f32 %v588, %v601
    %603 = vdwg.mxu0
    %604 = vmatpush.bf16.msra.mxu0 %v494
    %605 = vmatpush.bf16.msra.mxu0 %v492
    %606 = vmatpush.bf16.msra.mxu0 %v490
    %607 = vmatpush.bf16.msra.mxu0 %v488
    %608 = vmatpush.bf16.msra.mxu0 %v486
    %609 = vmatpush.bf16.msra.mxu0 %v484
    %610 = vmatpush.bf16.msra.mxu0 %v482
    %611 = vmatpush.bf16.msra.mxu0 %v480
    %612 = vmatmul.bf16.gmra.mxu0 %v250
    %v613 = vpop.f32.mrf.mxu0
    %v614 = vadd.f32 %v600, %v613
    %v615 = vpop.f32.mrf.mxu0
    %v616 = vadd.f32 %v602, %v615
    %617 = vdwg.mxu0
    %618 = vmatpush.bf16.msra.mxu0 %v510
    %619 = vmatpush.bf16.msra.mxu0 %v508
    %620 = vmatpush.bf16.msra.mxu0 %v506
    %621 = vmatpush.bf16.msra.mxu0 %v504
    %622 = vmatpush.bf16.msra.mxu0 %v502
    %623 = vmatpush.bf16.msra.mxu0 %v500
    %624 = vmatpush.bf16.msra.mxu0 %v498
    %625 = vmatpush.bf16.msra.mxu0 %v496
    %626 = vmatmul.bf16.gmra.mxu0 %v251
    %v627 = vpop.f32.mrf.mxu0
    %v628 = vadd.f32 %v614, %v627
    %v629 = vpop.f32.mrf.mxu0
    %v630 = vadd.f32 %v616, %v629
    %631 = vdwg.mxu0
    %632 = vmatpush.bf16.msra.mxu0 %v463
    %633 = vmatpush.bf16.msra.mxu0 %v461
    %634 = vmatpush.bf16.msra.mxu0 %v459
    %635 = vmatpush.bf16.msra.mxu0 %v457
    %636 = vmatpush.bf16.msra.mxu0 %v455
    %637 = vmatpush.bf16.msra.mxu0 %v453
    %638 = vmatpush.bf16.msra.mxu0 %v451
    %639 = vmatpush.bf16.msra.mxu0 %v449
    %640 = vmatmul.bf16.gmra.mxu0 %v248
    %v641 = vpop.f32.mrf.mxu0
    %v642 = vadd.f32 %v233, %v641
    %v643 = vpop.f32.mrf.mxu0
    %v644 = vadd.f32 %v235, %v643
    %645 = vdwg.mxu0
    %646 = vmatpush.bf16.msra.mxu0 %v479
    %647 = vmatpush.bf16.msra.mxu0 %v477
    %648 = vmatpush.bf16.msra.mxu0 %v475
    %649 = vmatpush.bf16.msra.mxu0 %v473
    %650 = vmatpush.bf16.msra.mxu0 %v471
    %651 = vmatpush.bf16.msra.mxu0 %v469
    %652 = vmatpush.bf16.msra.mxu0 %v467
    %653 = vmatpush.bf16.msra.mxu0 %v465
    %654 = vmatmul.bf16.gmra.mxu0 %v249
    %v655 = vpop.f32.mrf.mxu0
    %v656 = vadd.f32 %v642, %v655
    %v657 = vpop.f32.mrf.mxu0
    %v658 = vadd.f32 %v644, %v657
    %659 = vdwg.mxu0
    %660 = vmatpush.bf16.msra.mxu0 %v495
    %661 = vmatpush.bf16.msra.mxu0 %v493
    %662 = vmatpush.bf16.msra.mxu0 %v491
    %663 = vmatpush.bf16.msra.mxu0 %v489
    %664 = vmatpush.bf16.msra.mxu0 %v487
    %665 = vmatpush.bf16.msra.mxu0 %v485
    %666 = vmatpush.bf16.msra.mxu0 %v483
    %667 = vmatpush.bf16.msra.mxu0 %v481
    %668 = vmatmul.bf16.gmra.mxu0 %v250
    %v669 = vpop.f32.mrf.mxu0
    %v670 = vadd.f32 %v656, %v669
    %v671 = vpop.f32.mrf.mxu0
    %v672 = vadd.f32 %v658, %v671
    %673 = vdwg.mxu0
    %674 = vmatpush.bf16.msra.mxu0 %v511
    %675 = vmatpush.bf16.msra.mxu0 %v509
    %676 = vmatpush.bf16.msra.mxu0 %v507
    %677 = vmatpush.bf16.msra.mxu0 %v505
    %678 = vmatpush.bf16.msra.mxu0 %v503
    %679 = vmatpush.bf16.msra.mxu0 %v501
    %680 = vmatpush.bf16.msra.mxu0 %v499
    %681 = vmatpush.bf16.msra.mxu0 %v497
    %682 = vmatmul.bf16.gmra.mxu0 %v251
    %v683 = vpop.f32.mrf.mxu0
    %v684 = vadd.f32 %v670, %v683
    %v685 = vpop.f32.mrf.mxu0
    %v686 = vadd.f32 %v672, %v685
    %687 = vdwg.mxu0
    %s688 = scalar_lea.vmem %s3, 1
    %v689 = vld [vmem:[%s688] ss:$2 sm:$0x3]
    %690 = vset.pattern.permute.xlu0 1
    %691 = vperm.xlu0 %690, %v150
    %v692 = vpop.permute.xlu0 %691
    %694 = vset.pattern.permute.xlu0 1
    %695 = vperm.xlu0 %694, %v151
    %v696 = vpop.permute.xlu0 %695
    %v699 = vperm.slane %v689, 0
    %v700 = vperm.slane %v689, 1
    %v703 = vmul.f32 %v692, %v699
    %v704 = vmul.f32 %v692, %v700
    %v705 = vmul.f32 %v696, %v699
    %v706 = vmul.f32 %v696, %v700
    %v707 = vadd.f32 %v628, %v703
    %v708 = vadd.f32 %v684, %v704
    %v709 = vadd.f32 %v630, %v705
    %v710 = vadd.f32 %v686, %v706
    %v711 = vld [vmem:[%s4] sm:$0x3]
    %v713 = vperm.slane %v711, 0
    %v714 = vperm.slane %v711, 1
    %v717 = vadd.f32 %v707, %v713
    %v718 = vadd.f32 %v708, %v714
    %v719 = vadd.f32 %v709, %v713
    %v720 = vadd.f32 %v710, %v714
    %v721 = vmax.f32 %v717, 0.0
    %v722 = vmax.f32 %v718, 0.0
    %v723 = vmax.f32 %v719, 0.0
    %v724 = vmax.f32 %v720, 0.0
    %v725 = vpack.c.bf16 %v723, %v721
    %v726 = vpack.c.bf16 %v724, %v722
    %v727 = vld [vmem:[#allocation9] sm:$0xf]
    %v728 = vld [vmem:[#allocation9 + $0x4] sm:$0xf]
    %v729 = vld [vmem:[#allocation9 + $0x8] sm:$0xf]
    %v730 = vld [vmem:[#allocation9 + $0xc] sm:$0xf]
    %v731 = vld [vmem:[#allocation9 + $0x10] sm:$0xf]
    %v732 = vld [vmem:[#allocation9 + $0x14] sm:$0xf]
    %v733 = vld [vmem:[#allocation9 + $0x18] sm:$0xf]
    %v734 = vld [vmem:[#allocation9 + $0x1c] sm:$0xf]
    %v735 = vld [vmem:[#allocation9 + $0x20] sm:$0xf]
    %v736 = vld [vmem:[#allocation9 + $0x24] sm:$0xf]
    %v737 = vld [vmem:[#allocation9 + $0x28] sm:$0xf]
    %v738 = vld [vmem:[#allocation9 + $0x2c] sm:$0xf]
    %v739 = vld [vmem:[#allocation9 + $0x30] sm:$0xf]
    %v740 = vld [vmem:[#allocation9 + $0x34] sm:$0xf]
    %v741 = vld [vmem:[#allocation9 + $0x38] sm:$0xf]
    %v742 = vld [vmem:[#allocation9 + $0x3c] sm:$0xf]
    %v743 = vld [vmem:[#allocation9 + $0x40] sm:$0xf]
    %v744 = vld [vmem:[#allocation9 + $0x44] sm:$0xf]
    %v745 = vld [vmem:[#allocation9 + $0x48] sm:$0xf]
    %v746 = vld [vmem:[#allocation9 + $0x4c] sm:$0xf]
    %v747 = vld [vmem:[#allocation9 + $0x50] sm:$0xf]
    %v748 = vld [vmem:[#allocation9 + $0x54] sm:$0xf]
    %v749 = vld [vmem:[#allocation9 + $0x58] sm:$0xf]
    %v750 = vld [vmem:[#allocation9 + $0x5c] sm:$0xf]
    %v751 = vld [vmem:[#allocation9 + $0x60] sm:$0xf]
    %v752 = vld [vmem:[#allocation9 + $0x64] sm:$0xf]
    %v753 = vld [vmem:[#allocation9 + $0x68] sm:$0xf]
    %v754 = vld [vmem:[#allocation9 + $0x6c] sm:$0xf]
    %v755 = vld [vmem:[#allocation9 + $0x70] sm:$0xf]
    %v756 = vld [vmem:[#allocation9 + $0x74] sm:$0xf]
    %v757 = vld [vmem:[#allocation9 + $0x78] sm:$0xf]
    %v758 = vld [vmem:[#allocation9 + $0x7c] sm:$0xf]
    %v759 = vld [vmem:[%s6] sm:$0x1]
    %v761 = vperm.slane %v759, 0
    %v795 = vunpack.c.l.b16 %v727
    %v796 = vunpack.c.l.b16 %v728
    %v797 = vunpack.c.l.b16 %v729
    %v798 = vunpack.c.l.b16 %v730
    %v799 = vunpack.c.l.b16 %v731
    %v800 = vunpack.c.l.b16 %v732
    %v801 = vunpack.c.l.b16 %v733
    %v802 = vunpack.c.l.b16 %v734
    %v803 = vunpack.c.l.b16 %v735
    %v804 = vunpack.c.l.b16 %v736
    %v805 = vunpack.c.l.b16 %v737
    %v806 = vunpack.c.l.b16 %v738
    %v807 = vunpack.c.l.b16 %v739
    %v808 = vunpack.c.l.b16 %v740
    %v809 = vunpack.c.l.b16 %v741
    %v810 = vunpack.c.l.b16 %v742
    %v811 = vunpack.c.l.b16 %v743
    %v812 = vunpack.c.l.b16 %v744
    %v813 = vunpack.c.l.b16 %v745
    %v814 = vunpack.c.l.b16 %v746
    %v815 = vunpack.c.l.b16 %v747
    %v816 = vunpack.c.l.b16 %v748
    %v817 = vunpack.c.l.b16 %v749
    %v818 = vunpack.c.l.b16 %v750
    %v819 = vunpack.c.l.b16 %v751
    %v820 = vunpack.c.l.b16 %v752
    %v821 = vunpack.c.l.b16 %v753
    %v822 = vunpack.c.l.b16 %v754
    %v823 = vunpack.c.l.b16 %v755
    %v824 = vunpack.c.l.b16 %v756
    %v825 = vunpack.c.l.b16 %v757
    %v826 = vunpack.c.l.b16 %v758
    %v827 = vpack.c.b16 %v796, %v795
    %v828 = vpack.c.b16 %v798, %v797
    %v829 = vpack.c.b16 %v800, %v799
    %v830 = vpack.c.b16 %v802, %v801
    %v831 = vpack.c.b16 %v804, %v803
    %v832 = vpack.c.b16 %v806, %v805
    %v833 = vpack.c.b16 %v808, %v807
    %v834 = vpack.c.b16 %v810, %v809
    %v835 = vpack.c.b16 %v812, %v811
    %v836 = vpack.c.b16 %v814, %v813
    %v837 = vpack.c.b16 %v816, %v815
    %v838 = vpack.c.b16 %v818, %v817
    %v839 = vpack.c.b16 %v820, %v819
    %v840 = vpack.c.b16 %v822, %v821
    %v841 = vpack.c.b16 %v824, %v823
    %v842 = vpack.c.b16 %v826, %v825
    %859 = vmatpush.bf16.msra.mxu0 %v834
    %860 = vmatpush.bf16.msra.mxu0 %v833
    %861 = vmatpush.bf16.msra.mxu0 %v832
    %862 = vmatpush.bf16.msra.mxu0 %v831
    %863 = vmatpush.bf16.msra.mxu0 %v830
    %864 = vmatpush.bf16.msra.mxu0 %v829
    %865 = vmatpush.bf16.msra.mxu0 %v828
    %866 = vmatpush.bf16.msra.mxu0 %v827
    %867 = vmatmul.bf16.gmra.mxu0 %v725
    %v868 = vpop.f32.mrf.mxu0
    %v869 = vadd.f32 %v761, %v868
    %v870 = vpop.f32.mrf.mxu0
    %v871 = vadd.f32 %v761, %v870
    %872 = vdwg.mxu0
    %873 = vmatpush.bf16.msra.mxu0 %v842
    %874 = vmatpush.bf16.msra.mxu0 %v841
    %875 = vmatpush.bf16.msra.mxu0 %v840
    %876 = vmatpush.bf16.msra.mxu0 %v839
    %877 = vmatpush.bf16.msra.mxu0 %v838
    %878 = vmatpush.bf16.msra.mxu0 %v837
    %879 = vmatpush.bf16.msra.mxu0 %v836
    %880 = vmatpush.bf16.msra.mxu0 %v835
    %881 = vmatmul.bf16.gmra.mxu0 %v726
    %v882 = vpop.f32.mrf.mxu0
    %v883 = vadd.f32 %v869, %v882
    %v884 = vpop.f32.mrf.mxu0
    %v885 = vadd.f32 %v871, %v884
    %886 = vdwg.mxu0
    %v887 = vmax.f32 %v883, 0.0
    %v888 = vmax.f32 %v885, 0.0
    %v889 = vpack.c.bf16 %v888, %v887
    %v890 = vld [vmem:[#allocation10] sm:$0xff]
    %v891 = vld [vmem:[#allocation10 + $0x8] sm:$0xff]
    %v892 = vld [vmem:[#allocation10 + $0x10] sm:$0xff]
    %v893 = vld [vmem:[#allocation10 + $0x18] sm:$0xff]
    %v894 = vld [vmem:[#allocation10 + $0x20] sm:$0xff]
    %v895 = vld [vmem:[#allocation10 + $0x28] sm:$0xff]
    %v896 = vld [vmem:[#allocation10 + $0x30] sm:$0xff]
    %v897 = vld [vmem:[#allocation10 + $0x38] sm:$0xff]
    %v898 = vld [vmem:[#allocation10 + $0x40] sm:$0xff]
    %v899 = vld [vmem:[#allocation10 + $0x48] sm:$0xff]
    %v900 = vld [vmem:[#allocation10 + $0x50] sm:$0xff]
    %v901 = vld [vmem:[#allocation10 + $0x58] sm:$0xff]
    %v902 = vld [vmem:[#allocation10 + $0x60] sm:$0xff]
    %v903 = vld [vmem:[#allocation10 + $0x68] sm:$0xff]
    %v904 = vld [vmem:[#allocation10 + $0x70] sm:$0xff]
    %v905 = vld [vmem:[#allocation10 + $0x78] sm:$0xff]
    %v906 = vld [vmem:[#allocation10 + $0x80] sm:$0xff]
    %v907 = vld [vmem:[#allocation10 + $0x88] sm:$0xff]
    %v908 = vld [vmem:[#allocation10 + $0x90] sm:$0xff]
    %v909 = vld [vmem:[#allocation10 + $0x98] sm:$0xff]
    %v910 = vld [vmem:[#allocation10 + $0xa0] sm:$0xff]
    %v911 = vld [vmem:[#allocation10 + $0xa8] sm:$0xff]
    %v912 = vld [vmem:[#allocation10 + $0xb0] sm:$0xff]
    %v913 = vld [vmem:[#allocation10 + $0xb8] sm:$0xff]
    %v914 = vld [vmem:[#allocation10 + $0xc0] sm:$0xff]
    %v915 = vld [vmem:[#allocation10 + $0xc8] sm:$0xff]
    %v916 = vld [vmem:[#allocation10 + $0xd0] sm:$0xff]
    %v917 = vld [vmem:[#allocation10 + $0xd8] sm:$0xff]
    %v918 = vld [vmem:[#allocation10 + $0xe0] sm:$0xff]
    %v919 = vld [vmem:[#allocation10 + $0xe8] sm:$0xff]
    %v920 = vld [vmem:[#allocation10 + $0xf0] sm:$0xff]
    %v921 = vld [vmem:[#allocation10 + $0xf8] sm:$0xff]
    %v922 = vld [vmem:[%s9] sm:$0xf]
    %v924 = vperm.slane %v922, 0
    %v925 = vperm.slane %v922, 1
    %v926 = vperm.slane %v922, 2
    %v927 = vperm.slane %v922, 3
    %v964 = vunpack.c.l.b16 %v890
    %v965 = vunpack.c.h.b16 %v890
    %v966 = vunpack.c.l.b16 %v891
    %v967 = vunpack.c.h.b16 %v891
    %v968 = vunpack.c.l.b16 %v892
    %v969 = vunpack.c.h.b16 %v892
    %v970 = vunpack.c.l.b16 %v893
    %v971 = vunpack.c.h.b16 %v893
    %v972 = vunpack.c.l.b16 %v894
    %v973 = vunpack.c.h.b16 %v894
    %v974 = vunpack.c.l.b16 %v895
    %v975 = vunpack.c.h.b16 %v895
    %v976 = vunpack.c.l.b16 %v896
    %v977 = vunpack.c.h.b16 %v896
    %v978 = vunpack.c.l.b16 %v897
    %v979 = vunpack.c.h.b16 %v897
    %v980 = vunpack.c.l.b16 %v898
    %v981 = vunpack.c.h.b16 %v898
    %v982 = vunpack.c.l.b16 %v899
    %v983 = vunpack.c.h.b16 %v899
    %v984 = vunpack.c.l.b16 %v900
    %v985 = vunpack.c.h.b16 %v900
    %v986 = vunpack.c.l.b16 %v901
    %v987 = vunpack.c.h.b16 %v901
    %v988 = vunpack.c.l.b16 %v902
    %v989 = vunpack.c.h.b16 %v902
    %v990 = vunpack.c.l.b16 %v903
    %v991 = vunpack.c.h.b16 %v903
    %v992 = vunpack.c.l.b16 %v904
    %v993 = vunpack.c.h.b16 %v904
    %v994 = vunpack.c.l.b16 %v905
    %v995 = vunpack.c.h.b16 %v905
    %v996 = vunpack.c.l.b16 %v906
    %v997 = vunpack.c.h.b16 %v906
    %v998 = vunpack.c.l.b16 %v907
    %v999 = vunpack.c.h.b16 %v907
    %v1000 = vunpack.c.l.b16 %v908
    %v1001 = vunpack.c.h.b16 %v908
    %v1002 = vunpack.c.l.b16 %v909
    %v1003 = vunpack.c.h.b16 %v909
    %v1004 = vunpack.c.l.b16 %v910
    %v1005 = vunpack.c.h.b16 %v910
    %v1006 = vunpack.c.l.b16 %v911
    %v1007 = vunpack.c.h.b16 %v911
    %v1008 = vunpack.c.l.b16 %v912
    %v1009 = vunpack.c.h.b16 %v912
    %v1010 = vunpack.c.l.b16 %v913
    %v1011 = vunpack.c.h.b16 %v913
    %v1012 = vunpack.c.l.b16 %v914
    %v1013 = vunpack.c.h.b16 %v914
    %v1014 = vunpack.c.l.b16 %v915
    %v1015 = vunpack.c.h.b16 %v915
    %v1016 = vunpack.c.l.b16 %v916
    %v1017 = vunpack.c.h.b16 %v916
    %v1018 = vunpack.c.l.b16 %v917
    %v1019 = vunpack.c.h.b16 %v917
    %v1020 = vunpack.c.l.b16 %v918
    %v1021 = vunpack.c.h.b16 %v918
    %v1022 = vunpack.c.l.b16 %v919
    %v1023 = vunpack.c.h.b16 %v919
    %v1024 = vunpack.c.l.b16 %v920
    %v1025 = vunpack.c.h.b16 %v920
    %v1026 = vunpack.c.l.b16 %v921
    %v1027 = vunpack.c.h.b16 %v921
    %v1028 = vpack.c.b16 %v968, %v964
    %v1029 = vpack.c.b16 %v969, %v965
    %v1030 = vpack.c.b16 %v970, %v966
    %v1031 = vpack.c.b16 %v971, %v967
    %v1032 = vpack.c.b16 %v976, %v972
    %v1033 = vpack.c.b16 %v977, %v973
    %v1034 = vpack.c.b16 %v978, %v974
    %v1035 = vpack.c.b16 %v979, %v975
    %v1036 = vpack.c.b16 %v984, %v980
    %v1037 = vpack.c.b16 %v985, %v981
    %v1038 = vpack.c.b16 %v986, %v982
    %v1039 = vpack.c.b16 %v987, %v983
    %v1040 = vpack.c.b16 %v992, %v988
    %v1041 = vpack.c.b16 %v993, %v989
    %v1042 = vpack.c.b16 %v994, %v990
    %v1043 = vpack.c.b16 %v995, %v991
    %v1044 = vpack.c.b16 %v1000, %v996
    %v1045 = vpack.c.b16 %v1001, %v997
    %v1046 = vpack.c.b16 %v1002, %v998
    %v1047 = vpack.c.b16 %v1003, %v999
    %v1048 = vpack.c.b16 %v1008, %v1004
    %v1049 = vpack.c.b16 %v1009, %v1005
    %v1050 = vpack.c.b16 %v1010, %v1006
    %v1051 = vpack.c.b16 %v1011, %v1007
    %v1052 = vpack.c.b16 %v1016, %v1012
    %v1053 = vpack.c.b16 %v1017, %v1013
    %v1054 = vpack.c.b16 %v1018, %v1014
    %v1055 = vpack.c.b16 %v1019, %v1015
    %v1056 = vpack.c.b16 %v1024, %v1020
    %v1057 = vpack.c.b16 %v1025, %v1021
    %v1058 = vpack.c.b16 %v1026, %v1022
    %v1059 = vpack.c.b16 %v1027, %v1023
    %1092 = vmatpush.bf16.msra.mxu0 %v1056
    %1093 = vmatpush.bf16.msra.mxu0 %v1052
    %1094 = vmatpush.bf16.msra.mxu0 %v1048
    %1095 = vmatpush.bf16.msra.mxu0 %v1044
    %1096 = vmatpush.bf16.msra.mxu0 %v1040
    %1097 = vmatpush.bf16.msra.mxu0 %v1036
    %1098 = vmatpush.bf16.msra.mxu0 %v1032
    %1099 = vmatpush.bf16.msra.mxu0 %v1028
    %1100 = vmatmul.bf16.gmra.mxu0 %v889
    %v1101 = vpop.f32.mrf.mxu0
    %v1102 = vadd.f32 %v924, %v1101
    %v1103 = vpop.f32.mrf.mxu0
    %v1104 = vadd.f32 %v924, %v1103
    %1105 = vdwg.mxu0
    %1106 = vmatpush.bf16.msra.mxu0 %v1057
    %1107 = vmatpush.bf16.msra.mxu0 %v1053
    %1108 = vmatpush.bf16.msra.mxu0 %v1049
    %1109 = vmatpush.bf16.msra.mxu0 %v1045
    %1110 = vmatpush.bf16.msra.mxu0 %v1041
    %1111 = vmatpush.bf16.msra.mxu0 %v1037
    %1112 = vmatpush.bf16.msra.mxu0 %v1033
    %1113 = vmatpush.bf16.msra.mxu0 %v1029
    %1114 = vmatmul.bf16.gmra.mxu0 %v889
    %v1115 = vpop.f32.mrf.mxu0
    %v1116 = vadd.f32 %v925, %v1115
    %v1117 = vpop.f32.mrf.mxu0
    %v1118 = vadd.f32 %v925, %v1117
    %1119 = vdwg.mxu0
    %1120 = vmatpush.bf16.msra.mxu0 %v1058
    %1121 = vmatpush.bf16.msra.mxu0 %v1054
    %1122 = vmatpush.bf16.msra.mxu0 %v1050
    %1123 = vmatpush.bf16.msra.mxu0 %v1046
    %1124 = vmatpush.bf16.msra.mxu0 %v1042
    %1125 = vmatpush.bf16.msra.mxu0 %v1038
    %1126 = vmatpush.bf16.msra.mxu0 %v1034
    %1127 = vmatpush.bf16.msra.mxu0 %v1030
    %1128 = vmatmul.bf16.gmra.mxu0 %v889
    %v1129 = vpop.f32.mrf.mxu0
    %v1130 = vadd.f32 %v926, %v1129
    %v1131 = vpop.f32.mrf.mxu0
    %v1132 = vadd.f32 %v926, %v1131
    %1133 = vdwg.mxu0
    %1134 = vmatpush.bf16.msra.mxu0 %v1059
    %1135 = vmatpush.bf16.msra.mxu0 %v1055
    %1136 = vmatpush.bf16.msra.mxu0 %v1051
    %1137 = vmatpush.bf16.msra.mxu0 %v1047
    %1138 = vmatpush.bf16.msra.mxu0 %v1043
    %1139 = vmatpush.bf16.msra.mxu0 %v1039
    %1140 = vmatpush.bf16.msra.mxu0 %v1035
    %1141 = vmatpush.bf16.msra.mxu0 %v1031
    %1142 = vmatmul.bf16.gmra.mxu0 %v889
    %v1143 = vpop.f32.mrf.mxu0
    %v1144 = vadd.f32 %v927, %v1143
    %v1145 = vpop.f32.mrf.mxu0
    %v1146 = vadd.f32 %v927, %v1145
    %1147 = vdwg.mxu0
    %1148 = vst [vmem:[#allocation2] sm:$0xff] %v1102
    %1149 = vst [vmem:[#allocation2 + $0x8] sm:$0xff] %v1116
    %1150 = vst [vmem:[#allocation2 + $0x10] sm:$0xff] %v1130
    %1151 = vst [vmem:[#allocation2 + $0x18] sm:$0xff] %v1144
    %1152 = vst [vmem:[#allocation2 + $0x20] sm:$0xf] %v1104
    %1153 = vst [vmem:[#allocation2 + $0x28] sm:$0xf] %v1118
    %1154 = vst [vmem:[#allocation2 + $0x30] sm:$0xf] %v1132
    %1155 = vst [vmem:[#allocation2 + $0x38] sm:$0xf] %v1146
    %v1156 = vlaneseq
    %v1157 = vand.u32 %v1156, 127
    %v1158 = vadd.s32 %v1157, 128
    %v1159 = vadd.s32 %v1157, 256
    %v1160 = vadd.s32 %v1157, 384
    %vm1161 = vcmp.ge.s32.totalorder %v1157, 256
    %vm1162 = vcmp.ge.s32.totalorder %v1158, 256
    %vm1163 = vcmp.ge.s32.totalorder %v1159, 256
    %vm1164 = vcmp.ge.s32.totalorder %v1160, 256
    %vm1165 = vcmp.lt.s32.totalorder %v1157, 384
    %vm1166 = vcmp.lt.s32.totalorder %v1158, 384
    %vm1167 = vcmp.lt.s32.totalorder %v1159, 384
    %vm1168 = vcmp.lt.s32.totalorder %v1160, 384
    %vm1169 = vmand %vm1161, %vm1165
    %vm1170 = vmand %vm1162, %vm1166
    %vm1171 = vmand %vm1163, %vm1167
    %vm1172 = vmand %vm1164, %vm1168
    %v1173 = vsel %vm1169, 1.0, 0.5
    %v1174 = vsel %vm1170, 1.0, 0.5
    %v1175 = vsel %vm1171, 1.0, 0.5
    %v1176 = vsel %vm1172, 1.0, 0.5
    %v1177 = vsel %vm1169, 0.0, 0.5
    %v1178 = vsel %vm1170, 0.0, 0.5
    %v1179 = vsel %vm1171, 0.0, 0.5
    %v1180 = vsel %vm1172, 0.0, 0.5
    %v1181 = vld [vmem:[%s12] sm:$0x1]
    %v1182 = vld [vmem:[%s13] sm:$0x1]
    %s1183 = smul.u32 0, 4
    %s1184 = smul.addr %s1183, 8
    %s1185 = scalar_lea.vmem [#allocation2], %s1184
    %v1186 = vld [vmem:[%s1185] sm:$0xff]
    %v1187 = vld [vmem:[%s1185 + $0x8] sm:$0xff]
    %v1188 = vld [vmem:[%s1185 + $0x10] sm:$0xff]
    %v1189 = vld [vmem:[%s1185 + $0x18] sm:$0xff]
    %v1190 = vpack.c.bf16 %v1181, %v1181
    %v1191 = vld [vmem:[#allocation12] sm:$0xff]
    %v1192 = vld [vmem:[#allocation12 + $0x8] sm:$0xff]
    %v1193 = vld [vmem:[#allocation12 + $0x10] sm:$0xff]
    %v1194 = vld [vmem:[#allocation12 + $0x18] sm:$0xff]
    %v1195 = vld [vmem:[#allocation12 + $0x20] sm:$0xff]
    %v1196 = vld [vmem:[#allocation12 + $0x28] sm:$0xff]
    %v1197 = vld [vmem:[#allocation12 + $0x30] sm:$0xff]
    %v1198 = vld [vmem:[#allocation12 + $0x38] sm:$0xff]
    %v1199 = vld [vmem:[#allocation12 + $0x40] sm:$0xff]
    %v1200 = vld [vmem:[#allocation12 + $0x48] sm:$0xff]
    %v1201 = vld [vmem:[#allocation12 + $0x50] sm:$0xff]
    %v1202 = vld [vmem:[#allocation12 + $0x58] sm:$0xff]
    %v1203 = vld [vmem:[#allocation12 + $0x60] sm:$0xff]
    %v1204 = vld [vmem:[#allocation12 + $0x68] sm:$0xff]
    %v1205 = vld [vmem:[#allocation12 + $0x70] sm:$0xff]
    %v1206 = vld [vmem:[#allocation12 + $0x78] sm:$0xff]
    %v1207 = vld [vmem:[#allocation12 + $0x80] sm:$0xff]
    %v1208 = vld [vmem:[#allocation12 + $0x88] sm:$0xff]
    %v1209 = vld [vmem:[#allocation12 + $0x90] sm:$0xff]
    %v1210 = vld [vmem:[#allocation12 + $0x98] sm:$0xff]
    %v1211 = vld [vmem:[#allocation12 + $0xa0] sm:$0xff]
    %v1212 = vld [vmem:[#allocation12 + $0xa8] sm:$0xff]
    %v1213 = vld [vmem:[#allocation12 + $0xb0] sm:$0xff]
    %v1214 = vld [vmem:[#allocation12 + $0xb8] sm:$0xff]
    %v1215 = vld [vmem:[#allocation12 + $0xc0] sm:$0xff]
    %v1216 = vld [vmem:[#allocation12 + $0xc8] sm:$0xff]
    %v1217 = vld [vmem:[#allocation12 + $0xd0] sm:$0xff]
    %v1218 = vld [vmem:[#allocation12 + $0xd8] sm:$0xff]
    %v1219 = vld [vmem:[#allocation12 + $0xe0] sm:$0xff]
    %v1220 = vld [vmem:[#allocation12 + $0xe8] sm:$0xff]
    %v1221 = vld [vmem:[#allocation12 + $0xf0] sm:$0xff]
    %v1222 = vld [vmem:[#allocation12 + $0xf8] sm:$0xff]
    %v1255 = vunpack.c.l.b16 %v1191
    %v1256 = vunpack.c.h.b16 %v1191
    %v1257 = vunpack.c.l.b16 %v1192
    %v1258 = vunpack.c.h.b16 %v1192
    %v1259 = vunpack.c.l.b16 %v1193
    %v1260 = vunpack.c.h.b16 %v1193
    %v1261 = vunpack.c.l.b16 %v1194
    %v1262 = vunpack.c.h.b16 %v1194
    %v1263 = vunpack.c.l.b16 %v1195
    %v1264 = vunpack.c.h.b16 %v1195
    %v1265 = vunpack.c.l.b16 %v1196
    %v1266 = vunpack.c.h.b16 %v1196
    %v1267 = vunpack.c.l.b16 %v1197
    %v1268 = vunpack.c.h.b16 %v1197
    %v1269 = vunpack.c.l.b16 %v1198
    %v1270 = vunpack.c.h.b16 %v1198
    %v1271 = vunpack.c.l.b16 %v1199
    %v1272 = vunpack.c.h.b16 %v1199
    %v1273 = vunpack.c.l.b16 %v1200
    %v1274 = vunpack.c.h.b16 %v1200
    %v1275 = vunpack.c.l.b16 %v1201
    %v1276 = vunpack.c.h.b16 %v1201
    %v1277 = vunpack.c.l.b16 %v1202
    %v1278 = vunpack.c.h.b16 %v1202
    %v1279 = vunpack.c.l.b16 %v1203
    %v1280 = vunpack.c.h.b16 %v1203
    %v1281 = vunpack.c.l.b16 %v1204
    %v1282 = vunpack.c.h.b16 %v1204
    %v1283 = vunpack.c.l.b16 %v1205
    %v1284 = vunpack.c.h.b16 %v1205
    %v1285 = vunpack.c.l.b16 %v1206
    %v1286 = vunpack.c.h.b16 %v1206
    %v1287 = vunpack.c.l.b16 %v1207
    %v1288 = vunpack.c.h.b16 %v1207
    %v1289 = vunpack.c.l.b16 %v1208
    %v1290 = vunpack.c.h.b16 %v1208
    %v1291 = vunpack.c.l.b16 %v1209
    %v1292 = vunpack.c.h.b16 %v1209
    %v1293 = vunpack.c.l.b16 %v1210
    %v1294 = vunpack.c.h.b16 %v1210
    %v1295 = vunpack.c.l.b16 %v1211
    %v1296 = vunpack.c.h.b16 %v1211
    %v1297 = vunpack.c.l.b16 %v1212
    %v1298 = vunpack.c.h.b16 %v1212
    %v1299 = vunpack.c.l.b16 %v1213
    %v1300 = vunpack.c.h.b16 %v1213
    %v1301 = vunpack.c.l.b16 %v1214
    %v1302 = vunpack.c.h.b16 %v1214
    %v1303 = vunpack.c.l.b16 %v1215
    %v1304 = vunpack.c.h.b16 %v1215
    %v1305 = vunpack.c.l.b16 %v1216
    %v1306 = vunpack.c.h.b16 %v1216
    %v1307 = vunpack.c.l.b16 %v1217
    %v1308 = vunpack.c.h.b16 %v1217
    %v1309 = vunpack.c.l.b16 %v1218
    %v1310 = vunpack.c.h.b16 %v1218
    %v1311 = vunpack.c.l.b16 %v1219
    %v1312 = vunpack.c.h.b16 %v1219
    %v1313 = vunpack.c.l.b16 %v1220
    %v1314 = vunpack.c.h.b16 %v1220
    %v1315 = vunpack.c.l.b16 %v1221
    %v1316 = vunpack.c.h.b16 %v1221
    %v1317 = vunpack.c.l.b16 %v1222
    %v1318 = vunpack.c.h.b16 %v1222
    %v1319 = vpack.c.b16 %v1259, %v1255
    %v1320 = vpack.c.b16 %v1260, %v1256
    %v1321 = vpack.c.b16 %v1261, %v1257
    %v1322 = vpack.c.b16 %v1262, %v1258
    %v1323 = vpack.c.b16 %v1267, %v1263
    %v1324 = vpack.c.b16 %v1268, %v1264
    %v1325 = vpack.c.b16 %v1269, %v1265
    %v1326 = vpack.c.b16 %v1270, %v1266
    %v1327 = vpack.c.b16 %v1275, %v1271
    %v1328 = vpack.c.b16 %v1276, %v1272
    %v1329 = vpack.c.b16 %v1277, %v1273
    %v1330 = vpack.c.b16 %v1278, %v1274
    %v1331 = vpack.c.b16 %v1283, %v1279
    %v1332 = vpack.c.b16 %v1284, %v1280
    %v1333 = vpack.c.b16 %v1285, %v1281
    %v1334 = vpack.c.b16 %v1286, %v1282
    %v1335 = vpack.c.b16 %v1291, %v1287
    %v1336 = vpack.c.b16 %v1292, %v1288
    %v1337 = vpack.c.b16 %v1293, %v1289
    %v1338 = vpack.c.b16 %v1294, %v1290
    %v1339 = vpack.c.b16 %v1299, %v1295
    %v1340 = vpack.c.b16 %v1300, %v1296
    %v1341 = vpack.c.b16 %v1301, %v1297
    %v1342 = vpack.c.b16 %v1302, %v1298
    %v1343 = vpack.c.b16 %v1307, %v1303
    %v1344 = vpack.c.b16 %v1308, %v1304
    %v1345 = vpack.c.b16 %v1309, %v1305
    %v1346 = vpack.c.b16 %v1310, %v1306
    %v1347 = vpack.c.b16 %v1315, %v1311
    %v1348 = vpack.c.b16 %v1316, %v1312
    %v1349 = vpack.c.b16 %v1317, %v1313
    %v1350 = vpack.c.b16 %v1318, %v1314
    %1383 = vmatpush.bf16.msra.mxu0 %v1347
    %1384 = vmatpush.bf16.msra.mxu0 %v1343
    %1385 = vmatpush.bf16.msra.mxu0 %v1339
    %1386 = vmatpush.bf16.msra.mxu0 %v1335
    %1387 = vmatpush.bf16.msra.mxu0 %v1331
    %1388 = vmatpush.bf16.msra.mxu0 %v1327
    %1389 = vmatpush.bf16.msra.mxu0 %v1323
    %1390 = vmatpush.bf16.msra.mxu0 %v1319
    %1391 = vmatmul.bf16.gmra.mxu0 %v1190
    %v1392 = vpop.f32.mrf.mxu0
    %v1393 = vadd.f32 0.0, %v1392
    %v1394 = vpop.f32.mrf.mxu0
    %1395 = vdwg.mxu0
    %1396 = vmatpush.bf16.msra.mxu0 %v1348
    %1397 = vmatpush.bf16.msra.mxu0 %v1344
    %1398 = vmatpush.bf16.msra.mxu0 %v1340
    %1399 = vmatpush.bf16.msra.mxu0 %v1336
    %1400 = vmatpush.bf16.msra.mxu0 %v1332
    %1401 = vmatpush.bf16.msra.mxu0 %v1328
    %1402 = vmatpush.bf16.msra.mxu0 %v1324
    %1403 = vmatpush.bf16.msra.mxu0 %v1320
    %1404 = vmatmul.bf16.gmra.mxu0 %v1190
    %v1405 = vpop.f32.mrf.mxu0
    %v1406 = vadd.f32 0.0, %v1405
    %v1407 = vpop.f32.mrf.mxu0
    %1408 = vdwg.mxu0
    %1409 = vmatpush.bf16.msra.mxu0 %v1349
    %1410 = vmatpush.bf16.msra.mxu0 %v1345
    %1411 = vmatpush.bf16.msra.mxu0 %v1341
    %1412 = vmatpush.bf16.msra.mxu0 %v1337
    %1413 = vmatpush.bf16.msra.mxu0 %v1333
    %1414 = vmatpush.bf16.msra.mxu0 %v1329
    %1415 = vmatpush.bf16.msra.mxu0 %v1325
    %1416 = vmatpush.bf16.msra.mxu0 %v1321
    %1417 = vmatmul.bf16.gmra.mxu0 %v1190
    %v1418 = vpop.f32.mrf.mxu0
    %v1419 = vadd.f32 0.0, %v1418
    %v1420 = vpop.f32.mrf.mxu0
    %1421 = vdwg.mxu0
    %1422 = vmatpush.bf16.msra.mxu0 %v1350
    %1423 = vmatpush.bf16.msra.mxu0 %v1346
    %1424 = vmatpush.bf16.msra.mxu0 %v1342
    %1425 = vmatpush.bf16.msra.mxu0 %v1338
    %1426 = vmatpush.bf16.msra.mxu0 %v1334
    %1427 = vmatpush.bf16.msra.mxu0 %v1330
    %1428 = vmatpush.bf16.msra.mxu0 %v1326
    %1429 = vmatpush.bf16.msra.mxu0 %v1322
    %1430 = vmatmul.bf16.gmra.mxu0 %v1190
    %v1431 = vpop.f32.mrf.mxu0
    %v1432 = vadd.f32 0.0, %v1431
    %v1433 = vpop.f32.mrf.mxu0
    %1434 = vdwg.mxu0
    %v1435 = vadd.f32 %v1186, %v1393
    %v1436 = vadd.f32 %v1187, %v1406
    %v1437 = vadd.f32 %v1188, %v1419
    %v1438 = vadd.f32 %v1189, %v1432
    %v1439 = vmul.f32 %v1435, %v1173
    %v1440 = vmul.f32 %v1436, %v1174
    %v1441 = vmul.f32 %v1437, %v1175
    %v1442 = vmul.f32 %v1438, %v1176
    %v1443 = vtanh.pop %v1439
    %v1444 = vtanh.pop %v1440
    %v1445 = vtanh.pop %v1441
    %v1446 = vtanh.pop %v1442
    %v1447 = vmul.f32 %v1443, %v1173
    %v1448 = vmul.f32 %v1444, %v1174
    %v1449 = vmul.f32 %v1445, %v1175
    %v1450 = vmul.f32 %v1446, %v1176
    %v1451 = vadd.f32 %v1447, %v1177
    %v1452 = vadd.f32 %v1448, %v1178
    %v1453 = vadd.f32 %v1449, %v1179
    %v1454 = vadd.f32 %v1450, %v1180
    %v1455 = vmul.f32 %v1452, %v1182
    %v1456 = vmul.f32 %v1451, %v1453
    %v1457 = vadd.f32 %v1455, %v1456
    %v1458 = vtanh.pop %v1457
    %v1459 = vmul.f32 %v1454, %v1458
    %v1460 = vpack.c.bf16 %v1459, %v1459
    %1461 = vmatpush.bf16.msra.mxu0 %v1347
    %1462 = vmatpush.bf16.msra.mxu0 %v1343
    %1463 = vmatpush.bf16.msra.mxu0 %v1339
    %1464 = vmatpush.bf16.msra.mxu0 %v1335
    %1465 = vmatpush.bf16.msra.mxu0 %v1331
    %1466 = vmatpush.bf16.msra.mxu0 %v1327
    %1467 = vmatpush.bf16.msra.mxu0 %v1323
    %1468 = vmatpush.bf16.msra.mxu0 %v1319
    %1469 = vmatmul.bf16.gmra.mxu0 %v1460
    %v1470 = vpop.f32.mrf.mxu0
    %v1471 = vadd.f32 0.0, %v1470
    %v1472 = vpop.f32.mrf.mxu0
    %1473 = vdwg.mxu0
    %1474 = vmatpush.bf16.msra.mxu0 %v1348
    %1475 = vmatpush.bf16.msra.mxu0 %v1344
    %1476 = vmatpush.bf16.msra.mxu0 %v1340
    %1477 = vmatpush.bf16.msra.mxu0 %v1336
    %1478 = vmatpush.bf16.msra.mxu0 %v1332
    %1479 = vmatpush.bf16.msra.mxu0 %v1328
    %1480 = vmatpush.bf16.msra.mxu0 %v1324
    %1481 = vmatpush.bf16.msra.mxu0 %v1320
    %1482 = vmatmul.bf16.gmra.mxu0 %v1460
    %v1483 = vpop.f32.mrf.mxu0
    %v1484 = vadd.f32 0.0, %v1483
    %v1485 = vpop.f32.mrf.mxu0
    %1486 = vdwg.mxu0
    %1487 = vmatpush.bf16.msra.mxu0 %v1349
    %1488 = vmatpush.bf16.msra.mxu0 %v1345
    %1489 = vmatpush.bf16.msra.mxu0 %v1341
    %1490 = vmatpush.bf16.msra.mxu0 %v1337
    %1491 = vmatpush.bf16.msra.mxu0 %v1333
    %1492 = vmatpush.bf16.msra.mxu0 %v1329
    %1493 = vmatpush.bf16.msra.mxu0 %v1325
    %1494 = vmatpush.bf16.msra.mxu0 %v1321
    %1495 = vmatmul.bf16.gmra.mxu0 %v1460
    %v1496 = vpop.f32.mrf.mxu0
    %v1497 = vadd.f32 0.0, %v1496
    %v1498 = vpop.f32.mrf.mxu0
    %1499 = vdwg.mxu0
    %1500 = vmatpush.bf16.msra.mxu0 %v1350
    %1501 = vmatpush.bf16.msra.mxu0 %v1346
    %1502 = vmatpush.bf16.msra.mxu0 %v1342
    %1503 = vmatpush.bf16.msra.mxu0 %v1338
    %1504 = vmatpush.bf16.msra.mxu0 %v1334
    %1505 = vmatpush.bf16.msra.mxu0 %v1330
    %1506 = vmatpush.bf16.msra.mxu0 %v1326
    %1507 = vmatpush.bf16.msra.mxu0 %v1322
    %1508 = vmatmul.bf16.gmra.mxu0 %v1460
    %v1509 = vpop.f32.mrf.mxu0
    %v1510 = vadd.f32 0.0, %v1509
    %v1511 = vpop.f32.mrf.mxu0
    %1512 = vdwg.mxu0
    %v1517 = vrot.slane %v1471, 7
    %v1518 = vrot.slane %v1484, 7
    %v1519 = vrot.slane %v1497, 7
    %v1520 = vrot.slane %v1510, 7
    %v1525 = vadd.f32 %v1186, %v1517
    %v1526 = vadd.f32 %v1187, %v1518
    %v1527 = vadd.f32 %v1188, %v1519
    %v1528 = vadd.f32 %v1189, %v1520
    %v1529 = vmul.f32 %v1525, %v1173
    %v1530 = vmul.f32 %v1526, %v1174
    %v1531 = vmul.f32 %v1527, %v1175
    %v1532 = vmul.f32 %v1528, %v1176
    %v1533 = vtanh.pop %v1529
    %v1534 = vtanh.pop %v1530
    %v1535 = vtanh.pop %v1531
    %v1536 = vtanh.pop %v1532
    %v1537 = vmul.f32 %v1533, %v1173
    %v1538 = vmul.f32 %v1534, %v1174
    %v1539 = vmul.f32 %v1535, %v1175
    %v1540 = vmul.f32 %v1536, %v1176
    %v1541 = vadd.f32 %v1537, %v1177
    %v1542 = vadd.f32 %v1538, %v1178
    %v1543 = vadd.f32 %v1539, %v1179
    %v1544 = vadd.f32 %v1540, %v1180
    %v1546 = vrot.slane %v1457, 7
    %v1548 = vmul.f32 %v1542, %v1546
    %v1549 = vmul.f32 %v1541, %v1543
    %v1550 = vadd.f32 %v1548, %v1549
    %v1551 = vtanh.pop %v1550
    %v1552 = vmul.f32 %v1544, %v1551
    %v1553 = vpack.c.bf16 %v1552, %v1552
    %v1555 = vshrl.u32 %v1553, 16
    %1558 = vmatpush.bf16.msra.mxu0 %v1347
    %1559 = vmatpush.bf16.msra.mxu0 %v1343
    %1560 = vmatpush.bf16.msra.mxu0 %v1339
    %1561 = vmatpush.bf16.msra.mxu0 %v1335
    %1562 = vmatpush.bf16.msra.mxu0 %v1331
    %1563 = vmatpush.bf16.msra.mxu0 %v1327
    %1564 = vmatpush.bf16.msra.mxu0 %v1323
    %1565 = vmatpush.bf16.msra.mxu0 %v1319
    %1566 = vmatmul.bf16.gmra.mxu0 %v1555
    %v1567 = vpop.f32.mrf.mxu0
    %v1568 = vadd.f32 0.0, %v1567
    %v1569 = vpop.f32.mrf.mxu0
    %1570 = vdwg.mxu0
    %1571 = vmatpush.bf16.msra.mxu0 %v1348
    %1572 = vmatpush.bf16.msra.mxu0 %v1344
    %1573 = vmatpush.bf16.msra.mxu0 %v1340
    %1574 = vmatpush.bf16.msra.mxu0 %v1336
    %1575 = vmatpush.bf16.msra.mxu0 %v1332
    %1576 = vmatpush.bf16.msra.mxu0 %v1328
    %1577 = vmatpush.bf16.msra.mxu0 %v1324
    %1578 = vmatpush.bf16.msra.mxu0 %v1320
    %1579 = vmatmul.bf16.gmra.mxu0 %v1555
    %v1580 = vpop.f32.mrf.mxu0
    %v1581 = vadd.f32 0.0, %v1580
    %v1582 = vpop.f32.mrf.mxu0
    %1583 = vdwg.mxu0
    %1584 = vmatpush.bf16.msra.mxu0 %v1349
    %1585 = vmatpush.bf16.msra.mxu0 %v1345
    %1586 = vmatpush.bf16.msra.mxu0 %v1341
    %1587 = vmatpush.bf16.msra.mxu0 %v1337
    %1588 = vmatpush.bf16.msra.mxu0 %v1333
    %1589 = vmatpush.bf16.msra.mxu0 %v1329
    %1590 = vmatpush.bf16.msra.mxu0 %v1325
    %1591 = vmatpush.bf16.msra.mxu0 %v1321
    %1592 = vmatmul.bf16.gmra.mxu0 %v1555
    %v1593 = vpop.f32.mrf.mxu0
    %v1594 = vadd.f32 0.0, %v1593
    %v1595 = vpop.f32.mrf.mxu0
    %1596 = vdwg.mxu0
    %1597 = vmatpush.bf16.msra.mxu0 %v1350
    %1598 = vmatpush.bf16.msra.mxu0 %v1346
    %1599 = vmatpush.bf16.msra.mxu0 %v1342
    %1600 = vmatpush.bf16.msra.mxu0 %v1338
    %1601 = vmatpush.bf16.msra.mxu0 %v1334
    %1602 = vmatpush.bf16.msra.mxu0 %v1330
    %1603 = vmatpush.bf16.msra.mxu0 %v1326
    %1604 = vmatpush.bf16.msra.mxu0 %v1322
    %1605 = vmatmul.bf16.gmra.mxu0 %v1555
    %v1606 = vpop.f32.mrf.mxu0
    %v1607 = vadd.f32 0.0, %v1606
    %v1608 = vpop.f32.mrf.mxu0
    %1609 = vdwg.mxu0
    %v1614 = vrot.slane %v1568, 6
    %v1615 = vrot.slane %v1581, 6
    %v1616 = vrot.slane %v1594, 6
    %v1617 = vrot.slane %v1607, 6
    %v1622 = vadd.f32 %v1186, %v1614
    %v1623 = vadd.f32 %v1187, %v1615
    %v1624 = vadd.f32 %v1188, %v1616
    %v1625 = vadd.f32 %v1189, %v1617
    %v1626 = vmul.f32 %v1622, %v1173
    %v1627 = vmul.f32 %v1623, %v1174
    %v1628 = vmul.f32 %v1624, %v1175
    %v1629 = vmul.f32 %v1625, %v1176
    %v1630 = vtanh.pop %v1626
    %v1631 = vtanh.pop %v1627
    %v1632 = vtanh.pop %v1628
    %v1633 = vtanh.pop %v1629
    %v1634 = vmul.f32 %v1630, %v1173
    %v1635 = vmul.f32 %v1631, %v1174
    %v1636 = vmul.f32 %v1632, %v1175
    %v1637 = vmul.f32 %v1633, %v1176
    %v1638 = vadd.f32 %v1634, %v1177
    %v1639 = vadd.f32 %v1635, %v1178
    %v1640 = vadd.f32 %v1636, %v1179
    %v1641 = vadd.f32 %v1637, %v1180
    %v1643 = vrot.slane %v1550, 7
    %v1645 = vmul.f32 %v1639, %v1643
    %v1646 = vmul.f32 %v1638, %v1640
    %v1647 = vadd.f32 %v1645, %v1646
    %v1648 = vtanh.pop %v1647
    %v1649 = vmul.f32 %v1641, %v1648
    %v1650 = vpack.c.bf16 %v1649, %v1649
    %v1652 = vrot.slane %v1650, 1
    %1654 = vmatpush.bf16.msra.mxu0 %v1347
    %1655 = vmatpush.bf16.msra.mxu0 %v1343
    %1656 = vmatpush.bf16.msra.mxu0 %v1339
    %1657 = vmatpush.bf16.msra.mxu0 %v1335
    %1658 = vmatpush.bf16.msra.mxu0 %v1331
    %1659 = vmatpush.bf16.msra.mxu0 %v1327
    %1660 = vmatpush.bf16.msra.mxu0 %v1323
    %1661 = vmatpush.bf16.msra.mxu0 %v1319
    %1662 = vmatmul.bf16.gmra.mxu0 %v1652
    %v1663 = vpop.f32.mrf.mxu0
    %v1664 = vadd.f32 0.0, %v1663
    %v1665 = vpop.f32.mrf.mxu0
    %1666 = vdwg.mxu0
    %1667 = vmatpush.bf16.msra.mxu0 %v1348
    %1668 = vmatpush.bf16.msra.mxu0 %v1344
    %1669 = vmatpush.bf16.msra.mxu0 %v1340
    %1670 = vmatpush.bf16.msra.mxu0 %v1336
    %1671 = vmatpush.bf16.msra.mxu0 %v1332
    %1672 = vmatpush.bf16.msra.mxu0 %v1328
    %1673 = vmatpush.bf16.msra.mxu0 %v1324
    %1674 = vmatpush.bf16.msra.mxu0 %v1320
    %1675 = vmatmul.bf16.gmra.mxu0 %v1652
    %v1676 = vpop.f32.mrf.mxu0
    %v1677 = vadd.f32 0.0, %v1676
    %v1678 = vpop.f32.mrf.mxu0
    %1679 = vdwg.mxu0
    %1680 = vmatpush.bf16.msra.mxu0 %v1349
    %1681 = vmatpush.bf16.msra.mxu0 %v1345
    %1682 = vmatpush.bf16.msra.mxu0 %v1341
    %1683 = vmatpush.bf16.msra.mxu0 %v1337
    %1684 = vmatpush.bf16.msra.mxu0 %v1333
    %1685 = vmatpush.bf16.msra.mxu0 %v1329
    %1686 = vmatpush.bf16.msra.mxu0 %v1325
    %1687 = vmatpush.bf16.msra.mxu0 %v1321
    %1688 = vmatmul.bf16.gmra.mxu0 %v1652
    %v1689 = vpop.f32.mrf.mxu0
    %v1690 = vadd.f32 0.0, %v1689
    %v1691 = vpop.f32.mrf.mxu0
    %1692 = vdwg.mxu0
    %1693 = vmatpush.bf16.msra.mxu0 %v1350
    %1694 = vmatpush.bf16.msra.mxu0 %v1346
    %1695 = vmatpush.bf16.msra.mxu0 %v1342
    %1696 = vmatpush.bf16.msra.mxu0 %v1338
    %1697 = vmatpush.bf16.msra.mxu0 %v1334
    %1698 = vmatpush.bf16.msra.mxu0 %v1330
    %1699 = vmatpush.bf16.msra.mxu0 %v1326
    %1700 = vmatpush.bf16.msra.mxu0 %v1322
    %1701 = vmatmul.bf16.gmra.mxu0 %v1652
    %v1702 = vpop.f32.mrf.mxu0
    %v1703 = vadd.f32 0.0, %v1702
    %v1704 = vpop.f32.mrf.mxu0
    %1705 = vdwg.mxu0
    %v1710 = vrot.slane %v1664, 5
    %v1711 = vrot.slane %v1677, 5
    %v1712 = vrot.slane %v1690, 5
    %v1713 = vrot.slane %v1703, 5
    %v1718 = vadd.f32 %v1186, %v1710
    %v1719 = vadd.f32 %v1187, %v1711
    %v1720 = vadd.f32 %v1188, %v1712
    %v1721 = vadd.f32 %v1189, %v1713
    %v1722 = vmul.f32 %v1718, %v1173
    %v1723 = vmul.f32 %v1719, %v1174
    %v1724 = vmul.f32 %v1720, %v1175
    %v1725 = vmul.f32 %v1721, %v1176
    %v1726 = vtanh.pop %v1722
    %v1727 = vtanh.pop %v1723
    %v1728 = vtanh.pop %v1724
    %v1729 = vtanh.pop %v1725
    %v1730 = vmul.f32 %v1726, %v1173
    %v1731 = vmul.f32 %v1727, %v1174
    %v1732 = vmul.f32 %v1728, %v1175
    %v1733 = vmul.f32 %v1729, %v1176
    %v1734 = vadd.f32 %v1730, %v1177
    %v1735 = vadd.f32 %v1731, %v1178
    %v1736 = vadd.f32 %v1732, %v1179
    %v1737 = vadd.f32 %v1733, %v1180
    %v1739 = vrot.slane %v1647, 7
    %v1741 = vmul.f32 %v1735, %v1739
    %v1742 = vmul.f32 %v1734, %v1736
    %v1743 = vadd.f32 %v1741, %v1742
    %v1744 = vtanh.pop %v1743
    %v1745 = vmul.f32 %v1737, %v1744
    %v1746 = vpack.c.bf16 %v1745, %v1745
    %v1748 = vshrl.u32 %v1746, 16
    %v1750 = vrot.slane %v1748, 1
    %1752 = vmatpush.bf16.msra.mxu0 %v1347
    %1753 = vmatpush.bf16.msra.mxu0 %v1343
    %1754 = vmatpush.bf16.msra.mxu0 %v1339
    %1755 = vmatpush.bf16.msra.mxu0 %v1335
    %1756 = vmatpush.bf16.msra.mxu0 %v1331
    %1757 = vmatpush.bf16.msra.mxu0 %v1327
    %1758 = vmatpush.bf16.msra.mxu0 %v1323
    %1759 = vmatpush.bf16.msra.mxu0 %v1319
    %1760 = vmatmul.bf16.gmra.mxu0 %v1750
    %v1761 = vpop.f32.mrf.mxu0
    %v1762 = vadd.f32 0.0, %v1761
    %v1763 = vpop.f32.mrf.mxu0
    %1764 = vdwg.mxu0
    %1765 = vmatpush.bf16.msra.mxu0 %v1348
    %1766 = vmatpush.bf16.msra.mxu0 %v1344
    %1767 = vmatpush.bf16.msra.mxu0 %v1340
    %1768 = vmatpush.bf16.msra.mxu0 %v1336
    %1769 = vmatpush.bf16.msra.mxu0 %v1332
    %1770 = vmatpush.bf16.msra.mxu0 %v1328
    %1771 = vmatpush.bf16.msra.mxu0 %v1324
    %1772 = vmatpush.bf16.msra.mxu0 %v1320
    %1773 = vmatmul.bf16.gmra.mxu0 %v1750
    %v1774 = vpop.f32.mrf.mxu0
    %v1775 = vadd.f32 0.0, %v1774
    %v1776 = vpop.f32.mrf.mxu0
    %1777 = vdwg.mxu0
    %1778 = vmatpush.bf16.msra.mxu0 %v1349
    %1779 = vmatpush.bf16.msra.mxu0 %v1345
    %1780 = vmatpush.bf16.msra.mxu0 %v1341
    %1781 = vmatpush.bf16.msra.mxu0 %v1337
    %1782 = vmatpush.bf16.msra.mxu0 %v1333
    %1783 = vmatpush.bf16.msra.mxu0 %v1329
    %1784 = vmatpush.bf16.msra.mxu0 %v1325
    %1785 = vmatpush.bf16.msra.mxu0 %v1321
    %1786 = vmatmul.bf16.gmra.mxu0 %v1750
    %v1787 = vpop.f32.mrf.mxu0
    %v1788 = vadd.f32 0.0, %v1787
    %v1789 = vpop.f32.mrf.mxu0
    %1790 = vdwg.mxu0
    %1791 = vmatpush.bf16.msra.mxu0 %v1350
    %1792 = vmatpush.bf16.msra.mxu0 %v1346
    %1793 = vmatpush.bf16.msra.mxu0 %v1342
    %1794 = vmatpush.bf16.msra.mxu0 %v1338
    %1795 = vmatpush.bf16.msra.mxu0 %v1334
    %1796 = vmatpush.bf16.msra.mxu0 %v1330
    %1797 = vmatpush.bf16.msra.mxu0 %v1326
    %1798 = vmatpush.bf16.msra.mxu0 %v1322
    %1799 = vmatmul.bf16.gmra.mxu0 %v1750
    %v1800 = vpop.f32.mrf.mxu0
    %v1801 = vadd.f32 0.0, %v1800
    %v1802 = vpop.f32.mrf.mxu0
    %1803 = vdwg.mxu0
    %v1808 = vrot.slane %v1762, 4
    %v1809 = vrot.slane %v1775, 4
    %v1810 = vrot.slane %v1788, 4
    %v1811 = vrot.slane %v1801, 4
    %v1816 = vadd.f32 %v1186, %v1808
    %v1817 = vadd.f32 %v1187, %v1809
    %v1818 = vadd.f32 %v1188, %v1810
    %v1819 = vadd.f32 %v1189, %v1811
    %v1820 = vmul.f32 %v1816, %v1173
    %v1821 = vmul.f32 %v1817, %v1174
    %v1822 = vmul.f32 %v1818, %v1175
    %v1823 = vmul.f32 %v1819, %v1176
    %v1824 = vtanh.pop %v1820
    %v1825 = vtanh.pop %v1821
    %v1826 = vtanh.pop %v1822
    %v1827 = vtanh.pop %v1823
    %v1828 = vmul.f32 %v1824, %v1173
    %v1829 = vmul.f32 %v1825, %v1174
    %v1830 = vmul.f32 %v1826, %v1175
    %v1831 = vmul.f32 %v1827, %v1176
    %v1832 = vadd.f32 %v1828, %v1177
    %v1833 = vadd.f32 %v1829, %v1178
    %v1834 = vadd.f32 %v1830, %v1179
    %v1835 = vadd.f32 %v1831, %v1180
    %v1837 = vrot.slane %v1743, 7
    %v1839 = vmul.f32 %v1833, %v1837
    %v1840 = vmul.f32 %v1832, %v1834
    %v1841 = vadd.f32 %v1839, %v1840
    %v1842 = vtanh.pop %v1841
    %v1843 = vmul.f32 %v1835, %v1842
    %v1844 = vpack.c.bf16 %v1843, %v1843
    %v1846 = vrot.slane %v1844, 2
    %1848 = vmatpush.bf16.msra.mxu0 %v1347
    %1849 = vmatpush.bf16.msra.mxu0 %v1343
    %1850 = vmatpush.bf16.msra.mxu0 %v1339
    %1851 = vmatpush.bf16.msra.mxu0 %v1335
    %1852 = vmatpush.bf16.msra.mxu0 %v1331
    %1853 = vmatpush.bf16.msra.mxu0 %v1327
    %1854 = vmatpush.bf16.msra.mxu0 %v1323
    %1855 = vmatpush.bf16.msra.mxu0 %v1319
    %1856 = vmatmul.bf16.gmra.mxu0 %v1846
    %v1857 = vpop.f32.mrf.mxu0
    %v1858 = vadd.f32 0.0, %v1857
    %v1859 = vpop.f32.mrf.mxu0
    %1860 = vdwg.mxu0
    %1861 = vmatpush.bf16.msra.mxu0 %v1348
    %1862 = vmatpush.bf16.msra.mxu0 %v1344
    %1863 = vmatpush.bf16.msra.mxu0 %v1340
    %1864 = vmatpush.bf16.msra.mxu0 %v1336
    %1865 = vmatpush.bf16.msra.mxu0 %v1332
    %1866 = vmatpush.bf16.msra.mxu0 %v1328
    %1867 = vmatpush.bf16.msra.mxu0 %v1324
    %1868 = vmatpush.bf16.msra.mxu0 %v1320
    %1869 = vmatmul.bf16.gmra.mxu0 %v1846
    %v1870 = vpop.f32.mrf.mxu0
    %v1871 = vadd.f32 0.0, %v1870
    %v1872 = vpop.f32.mrf.mxu0
    %1873 = vdwg.mxu0
    %1874 = vmatpush.bf16.msra.mxu0 %v1349
    %1875 = vmatpush.bf16.msra.mxu0 %v1345
    %1876 = vmatpush.bf16.msra.mxu0 %v1341
    %1877 = vmatpush.bf16.msra.mxu0 %v1337
    %1878 = vmatpush.bf16.msra.mxu0 %v1333
    %1879 = vmatpush.bf16.msra.mxu0 %v1329
    %1880 = vmatpush.bf16.msra.mxu0 %v1325
    %1881 = vmatpush.bf16.msra.mxu0 %v1321
    %1882 = vmatmul.bf16.gmra.mxu0 %v1846
    %v1883 = vpop.f32.mrf.mxu0
    %v1884 = vadd.f32 0.0, %v1883
    %v1885 = vpop.f32.mrf.mxu0
    %1886 = vdwg.mxu0
    %1887 = vmatpush.bf16.msra.mxu0 %v1350
    %1888 = vmatpush.bf16.msra.mxu0 %v1346
    %1889 = vmatpush.bf16.msra.mxu0 %v1342
    %1890 = vmatpush.bf16.msra.mxu0 %v1338
    %1891 = vmatpush.bf16.msra.mxu0 %v1334
    %1892 = vmatpush.bf16.msra.mxu0 %v1330
    %1893 = vmatpush.bf16.msra.mxu0 %v1326
    %1894 = vmatpush.bf16.msra.mxu0 %v1322
    %1895 = vmatmul.bf16.gmra.mxu0 %v1846
    %v1896 = vpop.f32.mrf.mxu0
    %v1897 = vadd.f32 0.0, %v1896
    %v1898 = vpop.f32.mrf.mxu0
    %1899 = vdwg.mxu0
    %v1904 = vrot.slane %v1858, 3
    %v1905 = vrot.slane %v1871, 3
    %v1906 = vrot.slane %v1884, 3
    %v1907 = vrot.slane %v1897, 3
    %v1912 = vadd.f32 %v1186, %v1904
    %v1913 = vadd.f32 %v1187, %v1905
    %v1914 = vadd.f32 %v1188, %v1906
    %v1915 = vadd.f32 %v1189, %v1907
    %v1916 = vmul.f32 %v1912, %v1173
    %v1917 = vmul.f32 %v1913, %v1174
    %v1918 = vmul.f32 %v1914, %v1175
    %v1919 = vmul.f32 %v1915, %v1176
    %v1920 = vtanh.pop %v1916
    %v1921 = vtanh.pop %v1917
    %v1922 = vtanh.pop %v1918
    %v1923 = vtanh.pop %v1919
    %v1924 = vmul.f32 %v1920, %v1173
    %v1925 = vmul.f32 %v1921, %v1174
    %v1926 = vmul.f32 %v1922, %v1175
    %v1927 = vmul.f32 %v1923, %v1176
    %v1928 = vadd.f32 %v1924, %v1177
    %v1929 = vadd.f32 %v1925, %v1178
    %v1930 = vadd.f32 %v1926, %v1179
    %v1931 = vadd.f32 %v1927, %v1180
    %v1933 = vrot.slane %v1841, 7
    %v1935 = vmul.f32 %v1929, %v1933
    %v1936 = vmul.f32 %v1928, %v1930
    %v1937 = vadd.f32 %v1935, %v1936
    %v1938 = vtanh.pop %v1937
    %v1939 = vmul.f32 %v1931, %v1938
    %v1940 = vpack.c.bf16 %v1939, %v1939
    %v1942 = vshrl.u32 %v1940, 16
    %v1944 = vrot.slane %v1942, 2
    %1946 = vmatpush.bf16.msra.mxu0 %v1347
    %1947 = vmatpush.bf16.msra.mxu0 %v1343
    %1948 = vmatpush.bf16.msra.mxu0 %v1339
    %1949 = vmatpush.bf16.msra.mxu0 %v1335
    %1950 = vmatpush.bf16.msra.mxu0 %v1331
    %1951 = vmatpush.bf16.msra.mxu0 %v1327
    %1952 = vmatpush.bf16.msra.mxu0 %v1323
    %1953 = vmatpush.bf16.msra.mxu0 %v1319
    %1954 = vmatmul.bf16.gmra.mxu0 %v1944
    %v1955 = vpop.f32.mrf.mxu0
    %v1956 = vadd.f32 0.0, %v1955
    %v1957 = vpop.f32.mrf.mxu0
    %1958 = vdwg.mxu0
    %1959 = vmatpush.bf16.msra.mxu0 %v1348
    %1960 = vmatpush.bf16.msra.mxu0 %v1344
    %1961 = vmatpush.bf16.msra.mxu0 %v1340
    %1962 = vmatpush.bf16.msra.mxu0 %v1336
    %1963 = vmatpush.bf16.msra.mxu0 %v1332
    %1964 = vmatpush.bf16.msra.mxu0 %v1328
    %1965 = vmatpush.bf16.msra.mxu0 %v1324
    %1966 = vmatpush.bf16.msra.mxu0 %v1320
    %1967 = vmatmul.bf16.gmra.mxu0 %v1944
    %v1968 = vpop.f32.mrf.mxu0
    %v1969 = vadd.f32 0.0, %v1968
    %v1970 = vpop.f32.mrf.mxu0
    %1971 = vdwg.mxu0
    %1972 = vmatpush.bf16.msra.mxu0 %v1349
    %1973 = vmatpush.bf16.msra.mxu0 %v1345
    %1974 = vmatpush.bf16.msra.mxu0 %v1341
    %1975 = vmatpush.bf16.msra.mxu0 %v1337
    %1976 = vmatpush.bf16.msra.mxu0 %v1333
    %1977 = vmatpush.bf16.msra.mxu0 %v1329
    %1978 = vmatpush.bf16.msra.mxu0 %v1325
    %1979 = vmatpush.bf16.msra.mxu0 %v1321
    %1980 = vmatmul.bf16.gmra.mxu0 %v1944
    %v1981 = vpop.f32.mrf.mxu0
    %v1982 = vadd.f32 0.0, %v1981
    %v1983 = vpop.f32.mrf.mxu0
    %1984 = vdwg.mxu0
    %1985 = vmatpush.bf16.msra.mxu0 %v1350
    %1986 = vmatpush.bf16.msra.mxu0 %v1346
    %1987 = vmatpush.bf16.msra.mxu0 %v1342
    %1988 = vmatpush.bf16.msra.mxu0 %v1338
    %1989 = vmatpush.bf16.msra.mxu0 %v1334
    %1990 = vmatpush.bf16.msra.mxu0 %v1330
    %1991 = vmatpush.bf16.msra.mxu0 %v1326
    %1992 = vmatpush.bf16.msra.mxu0 %v1322
    %1993 = vmatmul.bf16.gmra.mxu0 %v1944
    %v1994 = vpop.f32.mrf.mxu0
    %v1995 = vadd.f32 0.0, %v1994
    %v1996 = vpop.f32.mrf.mxu0
    %1997 = vdwg.mxu0
    %v2002 = vrot.slane %v1956, 2
    %v2003 = vrot.slane %v1969, 2
    %v2004 = vrot.slane %v1982, 2
    %v2005 = vrot.slane %v1995, 2
    %v2010 = vadd.f32 %v1186, %v2002
    %v2011 = vadd.f32 %v1187, %v2003
    %v2012 = vadd.f32 %v1188, %v2004
    %v2013 = vadd.f32 %v1189, %v2005
    %v2014 = vmul.f32 %v2010, %v1173
    %v2015 = vmul.f32 %v2011, %v1174
    %v2016 = vmul.f32 %v2012, %v1175
    %v2017 = vmul.f32 %v2013, %v1176
    %v2018 = vtanh.pop %v2014
    %v2019 = vtanh.pop %v2015
    %v2020 = vtanh.pop %v2016
    %v2021 = vtanh.pop %v2017
    %v2022 = vmul.f32 %v2018, %v1173
    %v2023 = vmul.f32 %v2019, %v1174
    %v2024 = vmul.f32 %v2020, %v1175
    %v2025 = vmul.f32 %v2021, %v1176
    %v2026 = vadd.f32 %v2022, %v1177
    %v2027 = vadd.f32 %v2023, %v1178
    %v2028 = vadd.f32 %v2024, %v1179
    %v2029 = vadd.f32 %v2025, %v1180
    %v2031 = vrot.slane %v1937, 7
    %v2033 = vmul.f32 %v2027, %v2031
    %v2034 = vmul.f32 %v2026, %v2028
    %v2035 = vadd.f32 %v2033, %v2034
    %v2036 = vtanh.pop %v2035
    %v2037 = vmul.f32 %v2029, %v2036
    %v2038 = vpack.c.bf16 %v2037, %v2037
    %v2040 = vrot.slane %v2038, 3
    %2042 = vmatpush.bf16.msra.mxu0 %v1347
    %2043 = vmatpush.bf16.msra.mxu0 %v1343
    %2044 = vmatpush.bf16.msra.mxu0 %v1339
    %2045 = vmatpush.bf16.msra.mxu0 %v1335
    %2046 = vmatpush.bf16.msra.mxu0 %v1331
    %2047 = vmatpush.bf16.msra.mxu0 %v1327
    %2048 = vmatpush.bf16.msra.mxu0 %v1323
    %2049 = vmatpush.bf16.msra.mxu0 %v1319
    %2050 = vmatmul.bf16.gmra.mxu0 %v2040
    %v2051 = vpop.f32.mrf.mxu0
    %v2052 = vadd.f32 0.0, %v2051
    %v2053 = vpop.f32.mrf.mxu0
    %2054 = vdwg.mxu0
    %2055 = vmatpush.bf16.msra.mxu0 %v1348
    %2056 = vmatpush.bf16.msra.mxu0 %v1344
    %2057 = vmatpush.bf16.msra.mxu0 %v1340
    %2058 = vmatpush.bf16.msra.mxu0 %v1336
    %2059 = vmatpush.bf16.msra.mxu0 %v1332
    %2060 = vmatpush.bf16.msra.mxu0 %v1328
    %2061 = vmatpush.bf16.msra.mxu0 %v1324
    %2062 = vmatpush.bf16.msra.mxu0 %v1320
    %2063 = vmatmul.bf16.gmra.mxu0 %v2040
    %v2064 = vpop.f32.mrf.mxu0
    %v2065 = vadd.f32 0.0, %v2064
    %v2066 = vpop.f32.mrf.mxu0
    %2067 = vdwg.mxu0
    %2068 = vmatpush.bf16.msra.mxu0 %v1349
    %2069 = vmatpush.bf16.msra.mxu0 %v1345
    %2070 = vmatpush.bf16.msra.mxu0 %v1341
    %2071 = vmatpush.bf16.msra.mxu0 %v1337
    %2072 = vmatpush.bf16.msra.mxu0 %v1333
    %2073 = vmatpush.bf16.msra.mxu0 %v1329
    %2074 = vmatpush.bf16.msra.mxu0 %v1325
    %2075 = vmatpush.bf16.msra.mxu0 %v1321
    %2076 = vmatmul.bf16.gmra.mxu0 %v2040
    %v2077 = vpop.f32.mrf.mxu0
    %v2078 = vadd.f32 0.0, %v2077
    %v2079 = vpop.f32.mrf.mxu0
    %2080 = vdwg.mxu0
    %2081 = vmatpush.bf16.msra.mxu0 %v1350
    %2082 = vmatpush.bf16.msra.mxu0 %v1346
    %2083 = vmatpush.bf16.msra.mxu0 %v1342
    %2084 = vmatpush.bf16.msra.mxu0 %v1338
    %2085 = vmatpush.bf16.msra.mxu0 %v1334
    %2086 = vmatpush.bf16.msra.mxu0 %v1330
    %2087 = vmatpush.bf16.msra.mxu0 %v1326
    %2088 = vmatpush.bf16.msra.mxu0 %v1322
    %2089 = vmatmul.bf16.gmra.mxu0 %v2040
    %v2090 = vpop.f32.mrf.mxu0
    %v2091 = vadd.f32 0.0, %v2090
    %v2092 = vpop.f32.mrf.mxu0
    %2093 = vdwg.mxu0
    %v2098 = vrot.slane %v2052, 1
    %v2099 = vrot.slane %v2065, 1
    %v2100 = vrot.slane %v2078, 1
    %v2101 = vrot.slane %v2091, 1
    %v2106 = vadd.f32 %v1186, %v2098
    %v2107 = vadd.f32 %v1187, %v2099
    %v2108 = vadd.f32 %v1188, %v2100
    %v2109 = vadd.f32 %v1189, %v2101
    %v2110 = vmul.f32 %v2106, %v1173
    %v2111 = vmul.f32 %v2107, %v1174
    %v2112 = vmul.f32 %v2108, %v1175
    %v2113 = vmul.f32 %v2109, %v1176
    %v2114 = vtanh.pop %v2110
    %v2115 = vtanh.pop %v2111
    %v2116 = vtanh.pop %v2112
    %v2117 = vtanh.pop %v2113
    %v2118 = vmul.f32 %v2114, %v1173
    %v2119 = vmul.f32 %v2115, %v1174
    %v2120 = vmul.f32 %v2116, %v1175
    %v2121 = vmul.f32 %v2117, %v1176
    %v2122 = vadd.f32 %v2118, %v1177
    %v2123 = vadd.f32 %v2119, %v1178
    %v2124 = vadd.f32 %v2120, %v1179
    %v2125 = vadd.f32 %v2121, %v1180
    %v2127 = vrot.slane %v2035, 7
    %v2129 = vmul.f32 %v2123, %v2127
    %v2130 = vmul.f32 %v2122, %v2124
    %v2131 = vadd.f32 %v2129, %v2130
    %v2132 = vtanh.pop %v2131
    %v2133 = vmul.f32 %v2125, %v2132
    %vm2134 = vcmask 1040384
    %v2135 = vsel %vm2134, %v1459, %v1552
    %vm2136 = vcmask 1041408
    %v2137 = vsel %vm2136, %v2135, %v1649
    %vm2138 = vcmask 1042432
    %v2139 = vsel %vm2138, %v2137, %v1745
    %vm2140 = vcmask 1043456
    %v2141 = vsel %vm2140, %v2139, %v1843
    %vm2142 = vcmask 1044480
    %v2143 = vsel %vm2142, %v2141, %v1939
    %vm2144 = vcmask 1045504
    %v2145 = vsel %vm2144, %v2143, %v2037
    %vm2146 = vcmask 1046528
    %v2147 = vsel %vm2146, %v2145, %v2133
    %2148 = vst [vmem:[#allocation3] sm:$0xff] %v2147
    %v2149 = vld [vmem:[#allocation2 + $0x20] sm:$0xf]
    %v2150 = vld [vmem:[#allocation2 + $0x28] sm:$0xf]
    %v2151 = vld [vmem:[#allocation2 + $0x30] sm:$0xf]
    %v2152 = vld [vmem:[#allocation2 + $0x38] sm:$0xf]
    %v2153 = vpack.c.bf16 %v2133, %v2133
    %v2154 = vld [vmem:[#allocation12] sm:$0xff]
    %v2155 = vld [vmem:[#allocation12 + $0x8] sm:$0xff]
    %v2156 = vld [vmem:[#allocation12 + $0x10] sm:$0xff]
    %v2157 = vld [vmem:[#allocation12 + $0x18] sm:$0xff]
    %v2158 = vld [vmem:[#allocation12 + $0x20] sm:$0xff]
    %v2159 = vld [vmem:[#allocation12 + $0x28] sm:$0xff]
    %v2160 = vld [vmem:[#allocation12 + $0x30] sm:$0xff]
    %v2161 = vld [vmem:[#allocation12 + $0x38] sm:$0xff]
    %v2162 = vld [vmem:[#allocation12 + $0x40] sm:$0xff]
    %v2163 = vld [vmem:[#allocation12 + $0x48] sm:$0xff]
    %v2164 = vld [vmem:[#allocation12 + $0x50] sm:$0xff]
    %v2165 = vld [vmem:[#allocation12 + $0x58] sm:$0xff]
    %v2166 = vld [vmem:[#allocation12 + $0x60] sm:$0xff]
    %v2167 = vld [vmem:[#allocation12 + $0x68] sm:$0xff]
    %v2168 = vld [vmem:[#allocation12 + $0x70] sm:$0xff]
    %v2169 = vld [vmem:[#allocation12 + $0x78] sm:$0xff]
    %v2170 = vld [vmem:[#allocation12 + $0x80] sm:$0xff]
    %v2171 = vld [vmem:[#allocation12 + $0x88] sm:$0xff]
    %v2172 = vld [vmem:[#allocation12 + $0x90] sm:$0xff]
    %v2173 = vld [vmem:[#allocation12 + $0x98] sm:$0xff]
    %v2174 = vld [vmem:[#allocation12 + $0xa0] sm:$0xff]
    %v2175 = vld [vmem:[#allocation12 + $0xa8] sm:$0xff]
    %v2176 = vld [vmem:[#allocation12 + $0xb0] sm:$0xff]
    %v2177 = vld [vmem:[#allocation12 + $0xb8] sm:$0xff]
    %v2178 = vld [vmem:[#allocation12 + $0xc0] sm:$0xff]
    %v2179 = vld [vmem:[#allocation12 + $0xc8] sm:$0xff]
    %v2180 = vld [vmem:[#allocation12 + $0xd0] sm:$0xff]
    %v2181 = vld [vmem:[#allocation12 + $0xd8] sm:$0xff]
    %v2182 = vld [vmem:[#allocation12 + $0xe0] sm:$0xff]
    %v2183 = vld [vmem:[#allocation12 + $0xe8] sm:$0xff]
    %v2184 = vld [vmem:[#allocation12 + $0xf0] sm:$0xff]
    %v2185 = vld [vmem:[#allocation12 + $0xf8] sm:$0xff]
    %v2187 = vshrl.u32 %v2153, 16
    %v2189 = vrot.slane %v2187, 3
    %v2223 = vunpack.c.l.b16 %v2154
    %v2224 = vunpack.c.h.b16 %v2154
    %v2225 = vunpack.c.l.b16 %v2155
    %v2226 = vunpack.c.h.b16 %v2155
    %v2227 = vunpack.c.l.b16 %v2156
    %v2228 = vunpack.c.h.b16 %v2156
    %v2229 = vunpack.c.l.b16 %v2157
    %v2230 = vunpack.c.h.b16 %v2157
    %v2231 = vunpack.c.l.b16 %v2158
    %v2232 = vunpack.c.h.b16 %v2158
    %v2233 = vunpack.c.l.b16 %v2159
    %v2234 = vunpack.c.h.b16 %v2159
    %v2235 = vunpack.c.l.b16 %v2160
    %v2236 = vunpack.c.h.b16 %v2160
    %v2237 = vunpack.c.l.b16 %v2161
    %v2238 = vunpack.c.h.b16 %v2161
    %v2239 = vunpack.c.l.b16 %v2162
    %v2240 = vunpack.c.h.b16 %v2162
    %v2241 = vunpack.c.l.b16 %v2163
    %v2242 = vunpack.c.h.b16 %v2163
    %v2243 = vunpack.c.l.b16 %v2164
    %v2244 = vunpack.c.h.b16 %v2164
    %v2245 = vunpack.c.l.b16 %v2165
    %v2246 = vunpack.c.h.b16 %v2165
    %v2247 = vunpack.c.l.b16 %v2166
    %v2248 = vunpack.c.h.b16 %v2166
    %v2249 = vunpack.c.l.b16 %v2167
    %v2250 = vunpack.c.h.b16 %v2167
    %v2251 = vunpack.c.l.b16 %v2168
    %v2252 = vunpack.c.h.b16 %v2168
    %v2253 = vunpack.c.l.b16 %v2169
    %v2254 = vunpack.c.h.b16 %v2169
    %v2255 = vunpack.c.l.b16 %v2170
    %v2256 = vunpack.c.h.b16 %v2170
    %v2257 = vunpack.c.l.b16 %v2171
    %v2258 = vunpack.c.h.b16 %v2171
    %v2259 = vunpack.c.l.b16 %v2172
    %v2260 = vunpack.c.h.b16 %v2172
    %v2261 = vunpack.c.l.b16 %v2173
    %v2262 = vunpack.c.h.b16 %v2173
    %v2263 = vunpack.c.l.b16 %v2174
    %v2264 = vunpack.c.h.b16 %v2174
    %v2265 = vunpack.c.l.b16 %v2175
    %v2266 = vunpack.c.h.b16 %v2175
    %v2267 = vunpack.c.l.b16 %v2176
    %v2268 = vunpack.c.h.b16 %v2176
    %v2269 = vunpack.c.l.b16 %v2177
    %v2270 = vunpack.c.h.b16 %v2177
    %v2271 = vunpack.c.l.b16 %v2178
    %v2272 = vunpack.c.h.b16 %v2178
    %v2273 = vunpack.c.l.b16 %v2179
    %v2274 = vunpack.c.h.b16 %v2179
    %v2275 = vunpack.c.l.b16 %v2180
    %v2276 = vunpack.c.h.b16 %v2180
    %v2277 = vunpack.c.l.b16 %v2181
    %v2278 = vunpack.c.h.b16 %v2181
    %v2279 = vunpack.c.l.b16 %v2182
    %v2280 = vunpack.c.h.b16 %v2182
    %v2281 = vunpack.c.l.b16 %v2183
    %v2282 = vunpack.c.h.b16 %v2183
    %v2283 = vunpack.c.l.b16 %v2184
    %v2284 = vunpack.c.h.b16 %v2184
    %v2285 = vunpack.c.l.b16 %v2185
    %v2286 = vunpack.c.h.b16 %v2185
    %v2287 = vpack.c.b16 %v2227, %v2223
    %v2288 = vpack.c.b16 %v2228, %v2224
    %v2289 = vpack.c.b16 %v2229, %v2225
    %v2290 = vpack.c.b16 %v2230, %v2226
    %v2291 = vpack.c.b16 %v2235, %v2231
    %v2292 = vpack.c.b16 %v2236, %v2232
    %v2293 = vpack.c.b16 %v2237, %v2233
    %v2294 = vpack.c.b16 %v2238, %v2234
    %v2295 = vpack.c.b16 %v2243, %v2239
    %v2296 = vpack.c.b16 %v2244, %v2240
    %v2297 = vpack.c.b16 %v2245, %v2241
    %v2298 = vpack.c.b16 %v2246, %v2242
    %v2299 = vpack.c.b16 %v2251, %v2247
    %v2300 = vpack.c.b16 %v2252, %v2248
    %v2301 = vpack.c.b16 %v2253, %v2249
    %v2302 = vpack.c.b16 %v2254, %v2250
    %v2303 = vpack.c.b16 %v2259, %v2255
    %v2304 = vpack.c.b16 %v2260, %v2256
    %v2305 = vpack.c.b16 %v2261, %v2257
    %v2306 = vpack.c.b16 %v2262, %v2258
    %v2307 = vpack.c.b16 %v2267, %v2263
    %v2308 = vpack.c.b16 %v2268, %v2264
    %v2309 = vpack.c.b16 %v2269, %v2265
    %v2310 = vpack.c.b16 %v2270, %v2266
    %v2311 = vpack.c.b16 %v2275, %v2271
    %v2312 = vpack.c.b16 %v2276, %v2272
    %v2313 = vpack.c.b16 %v2277, %v2273
    %v2314 = vpack.c.b16 %v2278, %v2274
    %v2315 = vpack.c.b16 %v2283, %v2279
    %v2316 = vpack.c.b16 %v2284, %v2280
    %v2317 = vpack.c.b16 %v2285, %v2281
    %v2318 = vpack.c.b16 %v2286, %v2282
    %2351 = vmatpush.bf16.msra.mxu0 %v2315
    %2352 = vmatpush.bf16.msra.mxu0 %v2311
    %2353 = vmatpush.bf16.msra.mxu0 %v2307
    %2354 = vmatpush.bf16.msra.mxu0 %v2303
    %2355 = vmatpush.bf16.msra.mxu0 %v2299
    %2356 = vmatpush.bf16.msra.mxu0 %v2295
    %2357 = vmatpush.bf16.msra.mxu0 %v2291
    %2358 = vmatpush.bf16.msra.mxu0 %v2287
    %2359 = vmatmul.bf16.gmra.mxu0 %v2189
    %v2360 = vpop.f32.mrf.mxu0
    %v2361 = vadd.f32 0.0, %v2360
    %v2362 = vpop.f32.mrf.mxu0
    %2363 = vdwg.mxu0
    %2364 = vmatpush.bf16.msra.mxu0 %v2316
    %2365 = vmatpush.bf16.msra.mxu0 %v2312
    %2366 = vmatpush.bf16.msra.mxu0 %v2308
    %2367 = vmatpush.bf16.msra.mxu0 %v2304
    %2368 = vmatpush.bf16.msra.mxu0 %v2300
    %2369 = vmatpush.bf16.msra.mxu0 %v2296
    %2370 = vmatpush.bf16.msra.mxu0 %v2292
    %2371 = vmatpush.bf16.msra.mxu0 %v2288
    %2372 = vmatmul.bf16.gmra.mxu0 %v2189
    %v2373 = vpop.f32.mrf.mxu0
    %v2374 = vadd.f32 0.0, %v2373
    %v2375 = vpop.f32.mrf.mxu0
    %2376 = vdwg.mxu0
    %2377 = vmatpush.bf16.msra.mxu0 %v2317
    %2378 = vmatpush.bf16.msra.mxu0 %v2313
    %2379 = vmatpush.bf16.msra.mxu0 %v2309
    %2380 = vmatpush.bf16.msra.mxu0 %v2305
    %2381 = vmatpush.bf16.msra.mxu0 %v2301
    %2382 = vmatpush.bf16.msra.mxu0 %v2297
    %2383 = vmatpush.bf16.msra.mxu0 %v2293
    %2384 = vmatpush.bf16.msra.mxu0 %v2289
    %2385 = vmatmul.bf16.gmra.mxu0 %v2189
    %v2386 = vpop.f32.mrf.mxu0
    %v2387 = vadd.f32 0.0, %v2386
    %v2388 = vpop.f32.mrf.mxu0
    %2389 = vdwg.mxu0
    %2390 = vmatpush.bf16.msra.mxu0 %v2318
    %2391 = vmatpush.bf16.msra.mxu0 %v2314
    %2392 = vmatpush.bf16.msra.mxu0 %v2310
    %2393 = vmatpush.bf16.msra.mxu0 %v2306
    %2394 = vmatpush.bf16.msra.mxu0 %v2302
    %2395 = vmatpush.bf16.msra.mxu0 %v2298
    %2396 = vmatpush.bf16.msra.mxu0 %v2294
    %2397 = vmatpush.bf16.msra.mxu0 %v2290
    %2398 = vmatmul.bf16.gmra.mxu0 %v2189
    %v2399 = vpop.f32.mrf.mxu0
    %v2400 = vadd.f32 0.0, %v2399
    %v2401 = vpop.f32.mrf.mxu0
    %2402 = vdwg.mxu0
    %v2403 = vadd.f32 %v2149, %v2361
    %v2404 = vadd.f32 %v2150, %v2374
    %v2405 = vadd.f32 %v2151, %v2387
    %v2406 = vadd.f32 %v2152, %v2400
    %v2407 = vmul.f32 %v2403, %v1173
    %v2408 = vmul.f32 %v2404, %v1174
    %v2409 = vmul.f32 %v2405, %v1175
    %v2410 = vmul.f32 %v2406, %v1176
    %v2411 = vtanh.pop %v2407
    %v2412 = vtanh.pop %v2408
    %v2413 = vtanh.pop %v2409
    %v2414 = vtanh.pop %v2410
    %v2415 = vmul.f32 %v2411, %v1173
    %v2416 = vmul.f32 %v2412, %v1174
    %v2417 = vmul.f32 %v2413, %v1175
    %v2418 = vmul.f32 %v2414, %v1176
    %v2419 = vadd.f32 %v2415, %v1177
    %v2420 = vadd.f32 %v2416, %v1178
    %v2421 = vadd.f32 %v2417, %v1179
    %v2422 = vadd.f32 %v2418, %v1180
    %v2424 = vrot.slane %v2131, 7
    %v2426 = vmul.f32 %v2420, %v2424
    %v2427 = vmul.f32 %v2419, %v2421
    %v2428 = vadd.f32 %v2426, %v2427
    %v2429 = vtanh.pop %v2428
    %v2430 = vmul.f32 %v2422, %v2429
    %v2431 = vpack.c.bf16 %v2430, %v2430
    %2432 = vmatpush.bf16.msra.mxu0 %v2315
    %2433 = vmatpush.bf16.msra.mxu0 %v2311
    %2434 = vmatpush.bf16.msra.mxu0 %v2307
    %2435 = vmatpush.bf16.msra.mxu0 %v2303
    %2436 = vmatpush.bf16.msra.mxu0 %v2299
    %2437 = vmatpush.bf16.msra.mxu0 %v2295
    %2438 = vmatpush.bf16.msra.mxu0 %v2291
    %2439 = vmatpush.bf16.msra.mxu0 %v2287
    %2440 = vmatmul.bf16.gmra.mxu0 %v2431
    %v2441 = vpop.f32.mrf.mxu0
    %v2442 = vadd.f32 0.0, %v2441
    %v2443 = vpop.f32.mrf.mxu0
    %2444 = vdwg.mxu0
    %2445 = vmatpush.bf16.msra.mxu0 %v2316
    %2446 = vmatpush.bf16.msra.mxu0 %v2312
    %2447 = vmatpush.bf16.msra.mxu0 %v2308
    %2448 = vmatpush.bf16.msra.mxu0 %v2304
    %2449 = vmatpush.bf16.msra.mxu0 %v2300
    %2450 = vmatpush.bf16.msra.mxu0 %v2296
    %2451 = vmatpush.bf16.msra.mxu0 %v2292
    %2452 = vmatpush.bf16.msra.mxu0 %v2288
    %2453 = vmatmul.bf16.gmra.mxu0 %v2431
    %v2454 = vpop.f32.mrf.mxu0
    %v2455 = vadd.f32 0.0, %v2454
    %v2456 = vpop.f32.mrf.mxu0
    %2457 = vdwg.mxu0
    %2458 = vmatpush.bf16.msra.mxu0 %v2317
    %2459 = vmatpush.bf16.msra.mxu0 %v2313
    %2460 = vmatpush.bf16.msra.mxu0 %v2309
    %2461 = vmatpush.bf16.msra.mxu0 %v2305
    %2462 = vmatpush.bf16.msra.mxu0 %v2301
    %2463 = vmatpush.bf16.msra.mxu0 %v2297
    %2464 = vmatpush.bf16.msra.mxu0 %v2293
    %2465 = vmatpush.bf16.msra.mxu0 %v2289
    %2466 = vmatmul.bf16.gmra.mxu0 %v2431
    %v2467 = vpop.f32.mrf.mxu0
    %v2468 = vadd.f32 0.0, %v2467
    %v2469 = vpop.f32.mrf.mxu0
    %2470 = vdwg.mxu0
    %2471 = vmatpush.bf16.msra.mxu0 %v2318
    %2472 = vmatpush.bf16.msra.mxu0 %v2314
    %2473 = vmatpush.bf16.msra.mxu0 %v2310
    %2474 = vmatpush.bf16.msra.mxu0 %v2306
    %2475 = vmatpush.bf16.msra.mxu0 %v2302
    %2476 = vmatpush.bf16.msra.mxu0 %v2298
    %2477 = vmatpush.bf16.msra.mxu0 %v2294
    %2478 = vmatpush.bf16.msra.mxu0 %v2290
    %2479 = vmatmul.bf16.gmra.mxu0 %v2431
    %v2480 = vpop.f32.mrf.mxu0
    %v2481 = vadd.f32 0.0, %v2480
    %v2482 = vpop.f32.mrf.mxu0
    %2483 = vdwg.mxu0
    %v2488 = vrot.slane %v2442, 7
    %v2489 = vrot.slane %v2455, 7
    %v2490 = vrot.slane %v2468, 7
    %v2491 = vrot.slane %v2481, 7
    %v2496 = vadd.f32 %v2149, %v2488
    %v2497 = vadd.f32 %v2150, %v2489
    %v2498 = vadd.f32 %v2151, %v2490
    %v2499 = vadd.f32 %v2152, %v2491
    %v2500 = vmul.f32 %v2496, %v1173
    %v2501 = vmul.f32 %v2497, %v1174
    %v2502 = vmul.f32 %v2498, %v1175
    %v2503 = vmul.f32 %v2499, %v1176
    %v2504 = vtanh.pop %v2500
    %v2505 = vtanh.pop %v2501
    %v2506 = vtanh.pop %v2502
    %v2507 = vtanh.pop %v2503
    %v2508 = vmul.f32 %v2504, %v1173
    %v2509 = vmul.f32 %v2505, %v1174
    %v2510 = vmul.f32 %v2506, %v1175
    %v2511 = vmul.f32 %v2507, %v1176
    %v2512 = vadd.f32 %v2508, %v1177
    %v2513 = vadd.f32 %v2509, %v1178
    %v2514 = vadd.f32 %v2510, %v1179
    %v2515 = vadd.f32 %v2511, %v1180
    %v2517 = vrot.slane %v2428, 7
    %v2519 = vmul.f32 %v2513, %v2517
    %v2520 = vmul.f32 %v2512, %v2514
    %v2521 = vadd.f32 %v2519, %v2520
    %v2522 = vtanh.pop %v2521
    %v2523 = vmul.f32 %v2515, %v2522
    %v2524 = vpack.c.bf16 %v2523, %v2523
    %v2526 = vshrl.u32 %v2524, 16
    %2529 = vmatpush.bf16.msra.mxu0 %v2315
    %2530 = vmatpush.bf16.msra.mxu0 %v2311
    %2531 = vmatpush.bf16.msra.mxu0 %v2307
    %2532 = vmatpush.bf16.msra.mxu0 %v2303
    %2533 = vmatpush.bf16.msra.mxu0 %v2299
    %2534 = vmatpush.bf16.msra.mxu0 %v2295
    %2535 = vmatpush.bf16.msra.mxu0 %v2291
    %2536 = vmatpush.bf16.msra.mxu0 %v2287
    %2537 = vmatmul.bf16.gmra.mxu0 %v2526
    %v2538 = vpop.f32.mrf.mxu0
    %v2539 = vadd.f32 0.0, %v2538
    %v2540 = vpop.f32.mrf.mxu0
    %2541 = vdwg.mxu0
    %2542 = vmatpush.bf16.msra.mxu0 %v2316
    %2543 = vmatpush.bf16.msra.mxu0 %v2312
    %2544 = vmatpush.bf16.msra.mxu0 %v2308
    %2545 = vmatpush.bf16.msra.mxu0 %v2304
    %2546 = vmatpush.bf16.msra.mxu0 %v2300
    %2547 = vmatpush.bf16.msra.mxu0 %v2296
    %2548 = vmatpush.bf16.msra.mxu0 %v2292
    %2549 = vmatpush.bf16.msra.mxu0 %v2288
    %2550 = vmatmul.bf16.gmra.mxu0 %v2526
    %v2551 = vpop.f32.mrf.mxu0
    %v2552 = vadd.f32 0.0, %v2551
    %v2553 = vpop.f32.mrf.mxu0
    %2554 = vdwg.mxu0
    %2555 = vmatpush.bf16.msra.mxu0 %v2317
    %2556 = vmatpush.bf16.msra.mxu0 %v2313
    %2557 = vmatpush.bf16.msra.mxu0 %v2309
    %2558 = vmatpush.bf16.msra.mxu0 %v2305
    %2559 = vmatpush.bf16.msra.mxu0 %v2301
    %2560 = vmatpush.bf16.msra.mxu0 %v2297
    %2561 = vmatpush.bf16.msra.mxu0 %v2293
    %2562 = vmatpush.bf16.msra.mxu0 %v2289
    %2563 = vmatmul.bf16.gmra.mxu0 %v2526
    %v2564 = vpop.f32.mrf.mxu0
    %v2565 = vadd.f32 0.0, %v2564
    %v2566 = vpop.f32.mrf.mxu0
    %2567 = vdwg.mxu0
    %2568 = vmatpush.bf16.msra.mxu0 %v2318
    %2569 = vmatpush.bf16.msra.mxu0 %v2314
    %2570 = vmatpush.bf16.msra.mxu0 %v2310
    %2571 = vmatpush.bf16.msra.mxu0 %v2306
    %2572 = vmatpush.bf16.msra.mxu0 %v2302
    %2573 = vmatpush.bf16.msra.mxu0 %v2298
    %2574 = vmatpush.bf16.msra.mxu0 %v2294
    %2575 = vmatpush.bf16.msra.mxu0 %v2290
    %2576 = vmatmul.bf16.gmra.mxu0 %v2526
    %v2577 = vpop.f32.mrf.mxu0
    %v2578 = vadd.f32 0.0, %v2577
    %v2579 = vpop.f32.mrf.mxu0
    %2580 = vdwg.mxu0
    %v2585 = vrot.slane %v2539, 6
    %v2586 = vrot.slane %v2552, 6
    %v2587 = vrot.slane %v2565, 6
    %v2588 = vrot.slane %v2578, 6
    %v2593 = vadd.f32 %v2149, %v2585
    %v2594 = vadd.f32 %v2150, %v2586
    %v2595 = vadd.f32 %v2151, %v2587
    %v2596 = vadd.f32 %v2152, %v2588
    %v2597 = vmul.f32 %v2593, %v1173
    %v2598 = vmul.f32 %v2594, %v1174
    %v2599 = vmul.f32 %v2595, %v1175
    %v2600 = vmul.f32 %v2596, %v1176
    %v2601 = vtanh.pop %v2597
    %v2602 = vtanh.pop %v2598
    %v2603 = vtanh.pop %v2599
    %v2604 = vtanh.pop %v2600
    %v2605 = vmul.f32 %v2601, %v1173
    %v2606 = vmul.f32 %v2602, %v1174
    %v2607 = vmul.f32 %v2603, %v1175
    %v2608 = vmul.f32 %v2604, %v1176
    %v2609 = vadd.f32 %v2605, %v1177
    %v2610 = vadd.f32 %v2606, %v1178
    %v2611 = vadd.f32 %v2607, %v1179
    %v2612 = vadd.f32 %v2608, %v1180
    %v2614 = vrot.slane %v2521, 7
    %v2616 = vmul.f32 %v2610, %v2614
    %v2617 = vmul.f32 %v2609, %v2611
    %v2618 = vadd.f32 %v2616, %v2617
    %v2619 = vtanh.pop %v2618
    %v2620 = vmul.f32 %v2612, %v2619
    %v2621 = vpack.c.bf16 %v2620, %v2620
    %v2623 = vrot.slane %v2621, 1
    %2625 = vmatpush.bf16.msra.mxu0 %v2315
    %2626 = vmatpush.bf16.msra.mxu0 %v2311
    %2627 = vmatpush.bf16.msra.mxu0 %v2307
    %2628 = vmatpush.bf16.msra.mxu0 %v2303
    %2629 = vmatpush.bf16.msra.mxu0 %v2299
    %2630 = vmatpush.bf16.msra.mxu0 %v2295
    %2631 = vmatpush.bf16.msra.mxu0 %v2291
    %2632 = vmatpush.bf16.msra.mxu0 %v2287
    %2633 = vmatmul.bf16.gmra.mxu0 %v2623
    %v2634 = vpop.f32.mrf.mxu0
    %v2635 = vadd.f32 0.0, %v2634
    %v2636 = vpop.f32.mrf.mxu0
    %2637 = vdwg.mxu0
    %2638 = vmatpush.bf16.msra.mxu0 %v2316
    %2639 = vmatpush.bf16.msra.mxu0 %v2312
    %2640 = vmatpush.bf16.msra.mxu0 %v2308
    %2641 = vmatpush.bf16.msra.mxu0 %v2304
    %2642 = vmatpush.bf16.msra.mxu0 %v2300
    %2643 = vmatpush.bf16.msra.mxu0 %v2296
    %2644 = vmatpush.bf16.msra.mxu0 %v2292
    %2645 = vmatpush.bf16.msra.mxu0 %v2288
    %2646 = vmatmul.bf16.gmra.mxu0 %v2623
    %v2647 = vpop.f32.mrf.mxu0
    %v2648 = vadd.f32 0.0, %v2647
    %v2649 = vpop.f32.mrf.mxu0
    %2650 = vdwg.mxu0
    %2651 = vmatpush.bf16.msra.mxu0 %v2317
    %2652 = vmatpush.bf16.msra.mxu0 %v2313
    %2653 = vmatpush.bf16.msra.mxu0 %v2309
    %2654 = vmatpush.bf16.msra.mxu0 %v2305
    %2655 = vmatpush.bf16.msra.mxu0 %v2301
    %2656 = vmatpush.bf16.msra.mxu0 %v2297
    %2657 = vmatpush.bf16.msra.mxu0 %v2293
    %2658 = vmatpush.bf16.msra.mxu0 %v2289
    %2659 = vmatmul.bf16.gmra.mxu0 %v2623
    %v2660 = vpop.f32.mrf.mxu0
    %v2661 = vadd.f32 0.0, %v2660
    %v2662 = vpop.f32.mrf.mxu0
    %2663 = vdwg.mxu0
    %2664 = vmatpush.bf16.msra.mxu0 %v2318
    %2665 = vmatpush.bf16.msra.mxu0 %v2314
    %2666 = vmatpush.bf16.msra.mxu0 %v2310
    %2667 = vmatpush.bf16.msra.mxu0 %v2306
    %2668 = vmatpush.bf16.msra.mxu0 %v2302
    %2669 = vmatpush.bf16.msra.mxu0 %v2298
    %2670 = vmatpush.bf16.msra.mxu0 %v2294
    %2671 = vmatpush.bf16.msra.mxu0 %v2290
    %2672 = vmatmul.bf16.gmra.mxu0 %v2623
    %v2673 = vpop.f32.mrf.mxu0
    %v2674 = vadd.f32 0.0, %v2673
    %v2675 = vpop.f32.mrf.mxu0
    %2676 = vdwg.mxu0
    %v2681 = vrot.slane %v2635, 5
    %v2682 = vrot.slane %v2648, 5
    %v2683 = vrot.slane %v2661, 5
    %v2684 = vrot.slane %v2674, 5
    %v2689 = vadd.f32 %v2149, %v2681
    %v2690 = vadd.f32 %v2150, %v2682
    %v2691 = vadd.f32 %v2151, %v2683
    %v2692 = vadd.f32 %v2152, %v2684
    %v2693 = vmul.f32 %v2689, %v1173
    %v2694 = vmul.f32 %v2690, %v1174
    %v2695 = vmul.f32 %v2691, %v1175
    %v2696 = vmul.f32 %v2692, %v1176
    %v2697 = vtanh.pop %v2693
    %v2698 = vtanh.pop %v2694
    %v2699 = vtanh.pop %v2695
    %v2700 = vtanh.pop %v2696
    %v2701 = vmul.f32 %v2697, %v1173
    %v2702 = vmul.f32 %v2698, %v1174
    %v2703 = vmul.f32 %v2699, %v1175
    %v2704 = vmul.f32 %v2700, %v1176
    %v2705 = vadd.f32 %v2701, %v1177
    %v2706 = vadd.f32 %v2702, %v1178
    %v2707 = vadd.f32 %v2703, %v1179
    %v2708 = vadd.f32 %v2704, %v1180
    %v2710 = vrot.slane %v2618, 7
    %v2712 = vmul.f32 %v2706, %v2710
    %v2713 = vmul.f32 %v2705, %v2707
    %v2714 = vadd.f32 %v2712, %v2713
    %v2715 = vtanh.pop %v2714
    %v2716 = vmul.f32 %v2708, %v2715
    %v2717 = vsel %vm2134, %v2430, %v2523
    %v2718 = vsel %vm2136, %v2717, %v2620
    %v2719 = vsel %vm2138, %v2718, %v2716
    %2720 = vst [vmem:[#allocation3 + $0x8] sm:$0xf] %v2719
    %2721 = vst [vmem:[#allocation16 - $0x3] sm:$0x8] %v2716
    %2722 = vst [vmem:[#allocation18 - $0x3] sm:$0x8] %v2714
    %v2723 = vld [vmem:[#allocation3] sm:$0xff]
    %v2724 = vld [vmem:[#allocation3 + $0x8] sm:$0xf]
    %v2725 = vld [vmem:[#allocation13] sm:$0xff]
    %v2726 = vld [vmem:[#allocation13 + $0x8] sm:$0xff]
    %v2727 = vld [vmem:[#allocation13 + $0x10] sm:$0xff]
    %v2728 = vld [vmem:[#allocation13 + $0x18] sm:$0xff]
    %v2729 = vld [vmem:[#allocation13 + $0x20] sm:$0xff]
    %v2730 = vld [vmem:[#allocation13 + $0x28] sm:$0xff]
    %v2731 = vld [vmem:[#allocation13 + $0x30] sm:$0xff]
    %v2732 = vld [vmem:[#allocation13 + $0x38] sm:$0xff]
    %v2733 = vld [vmem:[#allocation13 + $0x40] sm:$0xff]
    %v2734 = vld [vmem:[#allocation13 + $0x48] sm:$0xff]
    %v2735 = vld [vmem:[#allocation13 + $0x50] sm:$0xff]
    %v2736 = vld [vmem:[#allocation13 + $0x58] sm:$0xff]
    %v2737 = vld [vmem:[#allocation13 + $0x60] sm:$0xff]
    %v2738 = vld [vmem:[#allocation13 + $0x68] sm:$0xff]
    %v2739 = vld [vmem:[#allocation13 + $0x70] sm:$0xff]
    %v2740 = vld [vmem:[#allocation13 + $0x78] sm:$0xff]
    %v2741 = vld [vmem:[%s11] sm:$0x1]
    %v2743 = vperm.slane %v2741, 0
    %2745 = vmatpush.msra.mxu0 %v2740
    %2746 = vmatpush.msra.mxu0 %v2739
    %2747 = vmatpush.msra.mxu0 %v2738
    %2748 = vmatpush.msra.mxu0 %v2737
    %2749 = vmatpush.msra.mxu0 %v2736
    %2750 = vmatpush.msra.mxu0 %v2735
    %2751 = vmatpush.msra.mxu0 %v2734
    %2752 = vmatpush.msra.mxu0 %v2733
    %2753 = vmatpush.msra.mxu0 %v2732
    %2754 = vmatpush.msra.mxu0 %v2731
    %2755 = vmatpush.msra.mxu0 %v2730
    %2756 = vmatpush.msra.mxu0 %v2729
    %2757 = vmatpush.msra.mxu0 %v2728
    %2758 = vmatpush.msra.mxu0 %v2727
    %2759 = vmatpush.msra.mxu0 %v2726
    %2760 = vmatpush.msra.mxu0 %v2725
    %2761 = vmatmul.f32.gmra.mxu0 %v2723
    %v2762 = vpop.f32.mrf.mxu0
    %v2763 = vadd.f32 %v2743, %v2762
    %2764 = vmatmul.f32.gmra.mxu0 %v2724
    %v2765 = vpop.f32.mrf.mxu0
    %v2766 = vadd.f32 %v2743, %v2765
    %2767 = vdwg.mxu0
    %vm2768 = vcmp.eq.s32.totalorder %v1157, 0
    %v2769 = vmul.f32 %v2763, 0.5
    %v2770 = vmul.f32 %v2766, 0.5
    %v2771 = vtanh.pop %v2769
    %v2772 = vtanh.pop %v2770
    %v2773 = vmul.f32 %v2771, 0.5
    %v2774 = vmul.f32 %v2772, 0.5
    %v2775 = vadd.f32 %v2773, 0.5
    %v2776 = vadd.f32 %v2774, 0.5
    %v2777 = vtanh.pop %v2763
    %v2778 = vtanh.pop %v2766
    %v2779 = vsel %vm2768, %v2775, %v2777
    %v2780 = vsel %vm2768, %v2776, %v2778
    %2781 = vst [vmem:[#allocation15] sm:$0xff] %v2779
    %2782 = vst [vmem:[#allocation15 + $0x8] sm:$0xf] %v2780
    // Predicated region
    $region82: #{tpu_custom_call.1} parent=1 // pred_check
      _
    $region83: #{tpu_custom_call.1} parent=1 // pred_check_branch
      %2784 = sbr.rel (0) target = $region85
    $region84: #{tpu_custom_call.1} parent=1 // pred_region
      %2786 = vsyncadd [#allocation6], 0
      %s2787 = sshll.u32 [#allocation15], 4
      %s2788 = int_to_ptr.vmem [resolvable:$true] %s2787
      %s2789 = sshll.u32 %s14, 4
      %s2790 = int_to_ptr.hbm [resolvable:$true] %s2789
      %2795 = dma.vmem_to_hbm [thread:$0]  %s2788, 256, %s2790, [#allocation6], 128, 128, 8
    $region85: #{tpu_custom_call.1} parent=1 // pred_fallthru
      _
    // Predicated region
    $region86: #{tpu_custom_call.1} parent=1 // pred_check
      _
    $region87: #{tpu_custom_call.1} parent=1 // pred_check_branch
      %2797 = sbr.rel (0) target = $region89
    $region88: #{tpu_custom_call.1} parent=1 // pred_region
      %2799 = vsyncadd [#allocation17], 0
      %s2801 = sshll.u32 [#allocation16], 4
      %s2802 = int_to_ptr.vmem [resolvable:$true] %s2801
      %s2803 = sshll.u32 %s15, 4
      %s2804 = int_to_ptr.hbm [resolvable:$true] %s2803
      %2806 = dma.vmem_to_hbm [thread:$0]  %s2802, 16, %s2804, [#allocation17]
    $region89: #{tpu_custom_call.1} parent=1 // pred_fallthru
      _
    // Predicated region
    $region90: #{tpu_custom_call.1} parent=1 // pred_check
      _
    $region91: #{tpu_custom_call.1} parent=1 // pred_check_branch
      %2808 = sbr.rel (0) target = $region93
    $region92: #{tpu_custom_call.1} parent=1 // pred_region
      %2810 = vsyncadd [#allocation17], 0
      %s2812 = sshll.u32 [#allocation18], 4
      %s2813 = int_to_ptr.vmem [resolvable:$true] %s2812
      %s2814 = sshll.u32 %s16, 4
      %s2815 = int_to_ptr.hbm [resolvable:$true] %s2814
      %2817 = dma.vmem_to_hbm [thread:$0]  %s2813, 16, %s2815, [#allocation17]
    $region93: #{tpu_custom_call.1} parent=1 // pred_fallthru
      _
    // Predicated region
    $region94: #{tpu_custom_call.1} parent=1 // pred_check
      _
    $region95: #{tpu_custom_call.1} parent=1 // pred_check_branch
      %2819 = sbr.rel (0) target = $region97
    $region96: #{tpu_custom_call.1} parent=1 // pred_region
      %2821 = dma.done [#allocation6], 256
    $region97: #{tpu_custom_call.1} parent=1 // pred_fallthru
      _
    // Predicated region
    $region98: #{tpu_custom_call.1} parent=1 // pred_check
      _
    $region99: #{tpu_custom_call.1} parent=1 // pred_check_branch
      %2823 = sbr.rel (0) target = $region101
    $region100: #{tpu_custom_call.1} parent=1 // pred_region
      %2825 = dma.done [#allocation17], 16
    $region101: #{tpu_custom_call.1} parent=1 // pred_fallthru
      _
    // Predicated region
    $region102: #{tpu_custom_call.1} parent=1 // pred_check
      _
    $region103: #{tpu_custom_call.1} parent=1 // pred_check_branch
      %2827 = sbr.rel (0) target = $region105
    $region104: #{tpu_custom_call.1} parent=1 // pred_region
      %2829 = dma.done [#allocation17], 16
    $region105: #{tpu_custom_call.1} parent=1 // pred_fallthru
      _
    %2830 = vsyncpa [#allocation5], 1
    %2831 = vsyncpa [#allocation8], 1
    %2832 = vsyncpa [#allocation11], 1
    %2833 = vsyncpa [#allocation14], 1
    %2834 = vsyncpa [#allocation6], 1
    %2835 = vsyncpa [#allocation17], 1

</llo_original>
